<compile_context>
chip_gen: v7x
topology: tpu7x:2x2x1
jax: 0.10.0
libtpu: 0.0.40
codegen_flags: <defaults>
</compile_context>

<pallas_src>
import functools
import math

import jax
import jax.numpy as jnp
from jax import lax
from jax.experimental import pallas as pl
from jax.experimental.pallas import tpu as pltpu

EPS = 1e-5


def _round_up(x, m):
    return ((x + m - 1) // m) * m


def _fold_upsample_into_phase_weights(w):
    """Fold nearest-2x upsample + 3x3 conv(pad=1) into 4 phase-specific 2x2 convs.

    w: (Cout, Cin, 3, 3) -> (16, Cout, Cin), index = ((pi*2+pj)*2+a)*2+b.
    For output pixel (2i+pi, 2j+pj) the (a, b) tap reads the zero-padded ORIGINAL
    resolution input at padded (row = i + pi + a, col = j + pj + b).
    """
    groups = {(0, 0): (0,), (0, 1): (1, 2), (1, 0): (0, 1), (1, 1): (2,)}
    mats = []
    for pi in range(2):
        for pj in range(2):
            for a in range(2):
                for b in range(2):
                    acc = 0.0
                    for kh in groups[(pi, a)]:
                        for kw in groups[(pj, b)]:
                            acc = acc + w[:, :, kh, kw]        # (Cout, Cin)
                    mats.append(acc)
    return jnp.stack(mats, axis=0)                              # (16, Cout, Cin)


def _conv_phase_tile(x_ref, w_ref, i0, pi, pj, *, TR, W8, Cin, Cout):
    """One phase's folded 2x2 conv for TR output rows x W8 cols -> (Cout, TR*W8) f32."""
    acc = jnp.zeros((Cout, TR * W8), dtype=jnp.float32)
    for a in range(2):                    # unrolled accumulating matmul chain
        for b in range(2):
            idx = ((pi * 2 + pj) * 2 + a) * 2 + b
            slab = x_ref[pl.ds(i0 + pi + a, TR), pj + b:pj + b + W8, :]  # (TR, W8, Cin)
            slab = slab.reshape(TR * W8, Cin)                            # lane dim kept
            # (Cout, Cin) x (TR*W8, Cin)^T -> (Cout, TR*W8), f32 accumulate on the MXU.
            acc = acc + lax.dot_general(
                w_ref[idx], slab,
                dimension_numbers=(((1,), (1,)), ((), ())),
                preferred_element_type=jnp.float32)
    return acc


def _stats_kernel(x_ref, w_ref, sum_ref, ssq_ref, *,
                  TR, W8, Cin, Cout, H, W, need_mask):
    n = pl.program_id(0)
    t = pl.program_id(1)

    @pl.when((n == 0) & (t == 0))
    def _init():
        sum_ref[...] = jnp.zeros_like(sum_ref)
        ssq_ref[...] = jnp.zeros_like(ssq_ref)

    i0 = t * TR
    R = TR * W8
    if need_mask:  # exclude alignment-padding rows/cols from the batch statistics
        lane = lax.broadcasted_iota(jnp.int32, (1, R), 1)
        valid = ((i0 + lane // W8) < H) & ((lane % W8) < W)

    s_acc = jnp.zeros((Cout, 1), dtype=jnp.float32)
    q_acc = jnp.zeros((Cout, 1), dtype=jnp.float32)
    for pi in range(2):
        for pj in range(2):
            z = _conv_phase_tile(x_ref, w_ref, i0, pi, pj,
                                 TR=TR, W8=W8, Cin=Cin, Cout=Cout)
            if need_mask:
                z = jnp.where(valid, z, 0.0)
            s_acc = s_acc + jnp.sum(z, axis=1, keepdims=True)
            q_acc = q_acc + jnp.sum(z * z, axis=1, keepdims=True)
    sum_ref[...] += s_acc
    ssq_ref[...] += q_acc


def _apply_kernel(x_ref, w_ref, scale_ref, shift_ref,
                  o00_ref, o01_ref, o10_ref, o11_ref, *, TR, W8, Cin, Cout):
    t = pl.program_id(1)
    i0 = t * TR
    out_refs = ((o00_ref, o01_ref), (o10_ref, o11_ref))
    for pi in range(2):
        for pj in range(2):
            z = _conv_phase_tile(x_ref, w_ref, i0, pi, pj,
                                 TR=TR, W8=W8, Cin=Cin, Cout=Cout)
            # folded bias + BatchNorm + ReLU: one FMA and one max per element
            out_refs[pi][pj][...] = jnp.maximum(
                z * scale_ref[...] + shift_ref[...], 0.0)


@jax.jit
def up_conv_forward(x, w, b, gamma, beta):
    """x: (N, Cin, H, W) f32; w: (Cout, Cin, 3, 3); b/gamma/beta: (Cout,)."""
    N, Cin, H, W = x.shape
    Cout = w.shape[0]

    # ---- tiling (lane-dense output tiles, legal (8,128) blocks) ----
    W8 = _round_up(W, 8)                       # sublane-aligned row length
    g = 128 // math.gcd(W8, 128)               # TR granule so TR*W8 % 128 == 0
    TR = g * max(1, 512 // (g * W8))           # aim for >=512 lanes per output tile
    if TR >= H:
        TR = H                                 # whole image fits in one row tile
    Hp = _round_up(H, TR)
    nT = Hp // TR
    R = TR * W8
    need_mask = (Hp != H) or (W8 != W)

    # ---- glue at ORIGINAL resolution only (no upsample / no im2col in HBM) ----
    x_nhwc = jnp.transpose(x, (0, 2, 3, 1)).astype(jnp.float32)        # (N, H, W, Cin)
    x_pad = jnp.pad(x_nhwc, ((0, 0), (1, Hp - H + 1), (1, W8 - W + 1), (0, 0)))
    wph = _fold_upsample_into_phase_weights(w.astype(jnp.float32))     # (16, Cout, Cin)

    x_spec = pl.BlockSpec((None, Hp + 2, W8 + 2, Cin), lambda n, t: (n, 0, 0, 0))
    w_spec = pl.BlockSpec((16, Cout, Cin), lambda n, t: (0, 0, 0))
    vec_spec = pl.BlockSpec((Cout, 1), lambda n, t: (0, 0))

    # Raise scoped VMEM only when the per-batch resident block gets big.
    in_block_bytes = (Hp + 2) * (W8 + 2) * Cin * 4
    vmem_est = 2 * in_block_bytes + 12 * Cout * R * 4 + 16 * Cout * Cin * 4
    vmem_limit = None if vmem_est <= 24 * 2**20 else min(2 * vmem_est, 112 * 2**20)

    # ---- phase 1: global per-channel sum / sum-of-squares of the conv output ----
    ssum, ssq = pl.pallas_call(
        functools.partial(_stats_kernel, TR=TR, W8=W8, Cin=Cin, Cout=Cout,
                          H=H, W=W, need_mask=need_mask),
        grid=(N, nT),
        in_specs=[x_spec, w_spec],
        out_specs=(vec_spec, vec_spec),
        out_shape=(jax.ShapeDtypeStruct((Cout, 1), jnp.float32),
                   jax.ShapeDtypeStruct((Cout, 1), jnp.float32)),
        compiler_params=pltpu.CompilerParams(
            dimension_semantics=("arbitrary", "arbitrary"),  # revisited accumulators
            vmem_limit_bytes=vmem_limit),
    )(x_pad, wph)

    # ---- fold conv bias + training-mode BatchNorm into one per-channel affine ----
    # The conv bias shifts the batch mean by exactly b, so it cancels inside BN.
    count = jnp.float32(N * 4 * H * W)             # output pixels per channel
    mean = ssum[:, 0] / count
    var = jnp.maximum(ssq[:, 0] / count - mean * mean, 0.0)
    scale = gamma.astype(jnp.float32) * lax.rsqrt(var + EPS)
    shift = beta.astype(jnp.float32) - mean * scale
    scale2 = scale.reshape(Cout, 1)
    shift2 = shift.reshape(Cout, 1)

    # ---- phase 2: recompute conv per tile, normalize + ReLU, lane-dense stores ----
    out_struct = jax.ShapeDtypeStruct((N, Cout, Hp * W8), jnp.float32)
    o_spec = pl.BlockSpec((None, Cout, R), lambda n, t: (n, 0, t))
    o00, o01, o10, o11 = pl.pallas_call(
        functools.partial(_apply_kernel, TR=TR, W8=W8, Cin=Cin, Cout=Cout),
        grid=(N, nT),
        in_specs=[x_spec, w_spec, vec_spec, vec_spec],
        out_specs=(o_spec, o_spec, o_spec, o_spec),
        out_shape=(out_struct,) * 4,
        compiler_params=pltpu.CompilerParams(
            dimension_semantics=("parallel", "parallel"),    # megacore-shardable
            vmem_limit_bytes=vmem_limit),
    )(x_pad, wph, scale2, shift2)

    # ---- interleave the 4 parity phases back into NCHW (single XLA shuffle) ----
    def crop(o):
        return o.reshape(N, Cout, Hp, W8)[:, :, :H, :W]

    phases = jnp.stack([crop(o00), crop(o01), crop(o10), crop(o11)], axis=0)
    phases = phases.reshape(2, 2, N, Cout, H, W)
    return phases.transpose(2, 3, 4, 0, 5, 1).reshape(N, Cout, 2 * H, 2 * W)


def _reference(x, w, b, gamma, beta):
    """Pure-JAX reference of the PyTorch forward (training-mode BN)."""
    xu = jnp.repeat(jnp.repeat(x, 2, axis=2), 2, axis=3)
    conv = lax.conv_general_dilated(
        xu, w, window_strides=(1, 1), padding=((1, 1), (1, 1)),
        dimension_numbers=("NCHW", "OIHW", "NCHW"))
    conv = conv + b[None, :, None, None]
    mean = jnp.mean(conv, axis=(0, 2, 3), keepdims=True)
    var = jnp.mean((conv - mean) ** 2, axis=(0, 2, 3), keepdims=True)
    y = (conv - mean) * lax.rsqrt(var + EPS)
    y = y * gamma[None, :, None, None] + beta[None, :, None, None]
    return jnp.maximum(y, 0.0)


if __name__ == "__main__":
    key = jax.random.PRNGKey(0)
    k_x, k_w, k_b, k_g, k_be = jax.random.split(key, 5)

    N, Cin, H, W = 2, 4, 16, 16
    Cout = 8

    x = jax.random.normal(k_x, (N, Cin, H, W), dtype=jnp.float32)
    fan_in = Cin * 3 * 3
    w = jax.random.normal(k_w, (Cout, Cin, 3, 3), dtype=jnp.float32) / jnp.sqrt(fan_in)
    b = 0.01 * jax.random.normal(k_b, (Cout,), dtype=jnp.float32)
    gamma = 1.0 + 0.1 * jax.random.normal(k_g, (Cout,), dtype=jnp.float32)
    beta = 0.1 * jax.random.normal(k_be, (Cout,), dtype=jnp.float32)

    out = jax.block_until_ready(up_conv_forward(x, w, b, gamma, beta))
    ref = jax.block_until_ready(_reference(x, w, b, gamma, beta))

    assert out.shape == (N, Cout, 2 * H, 2 * W), out.shape
    err = float(jnp.max(jnp.abs(out - ref)))
    assert jnp.allclose(out, ref, rtol=1e-3, atol=1e-3), err

    print("KERNEL_OK")
</pallas_src>

<mosaic_0001>
module attributes {stable_mosaic.version = 11 : i64} {
  func.func @_stats_kernel(%arg0: i32, %arg1: i32, %arg2: memref<1x18x18x4xf32, #tpu.memory_space<vmem>>, %arg3: memref<16x8x4xf32, #tpu.memory_space<vmem>>, %arg4: memref<8x1xf32, #tpu.memory_space<vmem>>, %arg5: memref<8x1xf32, #tpu.memory_space<vmem>>) attributes {dimension_semantics = [#tpu.dimension_semantics<arbitrary>, #tpu.dimension_semantics<arbitrary>], iteration_bounds = array<i64: 2, 1>, scalar_prefetch = 0 : i64, scratch_operands = 0 : i64, tpu.core_type = #tpu.core_type<tc>, window_params = [{transform_indices = @transform_0, window_bounds = array<i64: 1, 18, 18, 4>}, {pipeline_mode = #tpu.pipeline_mode<synchronous>, transform_indices = @transform_1, window_bounds = array<i64: 16, 8, 4>}, {pipeline_mode = #tpu.pipeline_mode<synchronous>, transform_indices = @transform_2, window_bounds = array<i64: 8, 1>}, {pipeline_mode = #tpu.pipeline_mode<synchronous>, transform_indices = @transform_3, window_bounds = array<i64: 8, 1>}]} {
    %c0_i32 = arith.constant 0 : i32
    %0 = arith.cmpi eq, %arg0, %c0_i32 : i32
    %c0_i32_0 = arith.constant 0 : i32
    %1 = arith.cmpi eq, %arg1, %c0_i32_0 : i32
    %2 = arith.andi %0, %1 : i1
    %3 = arith.extui %2 : i1 to i32
    %c0_i32_1 = arith.constant 0 : i32
    %4 = arith.cmpi ne, %3, %c0_i32_1 : i32
    scf.if %4 {
      %cst_150 = arith.constant 0.000000e+00 : f32
      %206 = vector.broadcast %cst_150 : f32 to vector<8x1xf32>
      %c0_151 = arith.constant 0 : index
      %c0_152 = arith.constant 0 : index
      %207 = vector.load %arg4[%c0_151, %c0_152] : memref<8x1xf32, #tpu.memory_space<vmem>>, vector<8x1xf32>
      tpu.vector_store %arg4[%c0_151, %c0_152], %206 {strides = array<i32>} : memref<8x1xf32, #tpu.memory_space<vmem>>, vector<8x1xf32>,
      %cst_153 = arith.constant 0.000000e+00 : f32
      %208 = vector.broadcast %cst_153 : f32 to vector<8x1xf32>
      %c0_154 = arith.constant 0 : index
      %c0_155 = arith.constant 0 : index
      %209 = vector.load %arg5[%c0_154, %c0_155] : memref<8x1xf32, #tpu.memory_space<vmem>>, vector<8x1xf32>
      tpu.vector_store %arg5[%c0_154, %c0_155], %208 {strides = array<i32>} : memref<8x1xf32, #tpu.memory_space<vmem>>, vector<8x1xf32>,
    } else {
    }
    %c16_i32 = arith.constant 16 : i32
    %5 = arith.muli %arg1, %c16_i32 : i32
    %cst = arith.constant 0.000000e+00 : f32
    %6 = vector.broadcast %cst : f32 to vector<8x1xf32>
    %cst_2 = arith.constant 0.000000e+00 : f32
    %7 = vector.broadcast %cst_2 : f32 to vector<8x1xf32>
    %cst_3 = arith.constant 0.000000e+00 : f32
    %8 = vector.broadcast %cst_3 : f32 to vector<8x256xf32>
    %c0_i32_4 = arith.constant 0 : i32
    %9 = arith.addi %5, %c0_i32_4 : i32
    %c0_i32_5 = arith.constant 0 : i32
    %10 = arith.addi %9, %c0_i32_5 : i32
    %c0 = arith.constant 0 : index
    %11 = arith.index_cast %10 : i32 to index
    %c0_6 = arith.constant 0 : index
    %c0_7 = arith.constant 0 : index
    %12 = vector.load %arg2[%c0, %11, %c0_6, %c0_7] : memref<1x18x18x4xf32, #tpu.memory_space<vmem>>, vector<1x16x16x4xf32>
    %13 = vector.shape_cast %12 : vector<1x16x16x4xf32> to vector<16x16x4xf32>
    %14 = vector.shape_cast %13 : vector<16x16x4xf32> to vector<256x4xf32>
    %c0_8 = arith.constant 0 : index
    %c0_9 = arith.constant 0 : index
    %c0_10 = arith.constant 0 : index
    %15 = vector.load %arg3[%c0_8, %c0_9, %c0_10] : memref<16x8x4xf32, #tpu.memory_space<vmem>>, vector<1x8x4xf32>
    %16 = vector.shape_cast %15 : vector<1x8x4xf32> to vector<8x4xf32>
    %cst_11 = arith.constant dense<0.000000e+00> : vector<8x256xf32>
    %17 = tpu.matmul %16, %14, %cst_11 {dimension_numbers = #tpu.dot_dimension_numbers<[1], [1], [0], [0], [0, 0, 1, 0], [], []>} : vector<8x4xf32>, vector<256x4xf32>, vector<8x256xf32> -> vector<8x256xf32>
    %18 = arith.addf %8, %17 : vector<8x256xf32>
    %c0_i32_12 = arith.constant 0 : i32
    %19 = arith.addi %5, %c0_i32_12 : i32
    %c0_i32_13 = arith.constant 0 : i32
    %20 = arith.addi %19, %c0_i32_13 : i32
    %c0_14 = arith.constant 0 : index
    %21 = arith.index_cast %20 : i32 to index
    %c1 = arith.constant 1 : index
    %c0_15 = arith.constant 0 : index
    %22 = vector.load %arg2[%c0_14, %21, %c1, %c0_15] : memref<1x18x18x4xf32, #tpu.memory_space<vmem>>, vector<1x16x16x4xf32>
    %23 = vector.shape_cast %22 : vector<1x16x16x4xf32> to vector<16x16x4xf32>
    %24 = vector.shape_cast %23 : vector<16x16x4xf32> to vector<256x4xf32>
    %c1_16 = arith.constant 1 : index
    %c0_17 = arith.constant 0 : index
    %c0_18 = arith.constant 0 : index
    %25 = vector.load %arg3[%c1_16, %c0_17, %c0_18] : memref<16x8x4xf32, #tpu.memory_space<vmem>>, vector<1x8x4xf32>
    %26 = vector.shape_cast %25 : vector<1x8x4xf32> to vector<8x4xf32>
    %cst_19 = arith.constant dense<0.000000e+00> : vector<8x256xf32>
    %27 = tpu.matmul %26, %24, %cst_19 {dimension_numbers = #tpu.dot_dimension_numbers<[1], [1], [0], [0], [0, 0, 1, 0], [], []>} : vector<8x4xf32>, vector<256x4xf32>, vector<8x256xf32> -> vector<8x256xf32>
    %28 = arith.addf %18, %27 : vector<8x256xf32>
    %c0_i32_20 = arith.constant 0 : i32
    %29 = arith.addi %5, %c0_i32_20 : i32
    %c1_i32 = arith.constant 1 : i32
    %30 = arith.addi %29, %c1_i32 : i32
    %c0_21 = arith.constant 0 : index
    %31 = arith.index_cast %30 : i32 to index
    %c0_22 = arith.constant 0 : index
    %c0_23 = arith.constant 0 : index
    %32 = vector.load %arg2[%c0_21, %31, %c0_22, %c0_23] : memref<1x18x18x4xf32, #tpu.memory_space<vmem>>, vector<1x16x16x4xf32>
    %33 = vector.shape_cast %32 : vector<1x16x16x4xf32> to vector<16x16x4xf32>
    %34 = vector.shape_cast %33 : vector<16x16x4xf32> to vector<256x4xf32>
    %c2 = arith.constant 2 : index
    %c0_24 = arith.constant 0 : index
    %c0_25 = arith.constant 0 : index
    %35 = vector.load %arg3[%c2, %c0_24, %c0_25] : memref<16x8x4xf32, #tpu.memory_space<vmem>>, vector<1x8x4xf32>
    %36 = vector.shape_cast %35 : vector<1x8x4xf32> to vector<8x4xf32>
    %cst_26 = arith.constant dense<0.000000e+00> : vector<8x256xf32>
    %37 = tpu.matmul %36, %34, %cst_26 {dimension_numbers = #tpu.dot_dimension_numbers<[1], [1], [0], [0], [0, 0, 1, 0], [], []>} : vector<8x4xf32>, vector<256x4xf32>, vector<8x256xf32> -> vector<8x256xf32>
    %38 = arith.addf %28, %37 : vector<8x256xf32>
    %c0_i32_27 = arith.constant 0 : i32
    %39 = arith.addi %5, %c0_i32_27 : i32
    %c1_i32_28 = arith.constant 1 : i32
    %40 = arith.addi %39, %c1_i32_28 : i32
    %c0_29 = arith.constant 0 : index
    %41 = arith.index_cast %40 : i32 to index
    %c1_30 = arith.constant 1 : index
    %c0_31 = arith.constant 0 : index
    %42 = vector.load %arg2[%c0_29, %41, %c1_30, %c0_31] : memref<1x18x18x4xf32, #tpu.memory_space<vmem>>, vector<1x16x16x4xf32>
    %43 = vector.shape_cast %42 : vector<1x16x16x4xf32> to vector<16x16x4xf32>
    %44 = vector.shape_cast %43 : vector<16x16x4xf32> to vector<256x4xf32>
    %c3 = arith.constant 3 : index
    %c0_32 = arith.constant 0 : index
    %c0_33 = arith.constant 0 : index
    %45 = vector.load %arg3[%c3, %c0_32, %c0_33] : memref<16x8x4xf32, #tpu.memory_space<vmem>>, vector<1x8x4xf32>
    %46 = vector.shape_cast %45 : vector<1x8x4xf32> to vector<8x4xf32>
    %cst_34 = arith.constant dense<0.000000e+00> : vector<8x256xf32>
    %47 = tpu.matmul %46, %44, %cst_34 {dimension_numbers = #tpu.dot_dimension_numbers<[1], [1], [0], [0], [0, 0, 1, 0], [], []>} : vector<8x4xf32>, vector<256x4xf32>, vector<8x256xf32> -> vector<8x256xf32>
    %48 = arith.addf %38, %47 : vector<8x256xf32>
    %cst_35 = arith.constant dense<0.000000e+00> : vector<8xf32>
    %49 = vector.multi_reduction <add>, %48, %cst_35 [1] : vector<8x256xf32> to vector<8xf32>
    %50 = vector.shape_cast %49 : vector<8xf32> to vector<8x1xf32>
    %51 = arith.addf %6, %50 : vector<8x1xf32>
    %52 = arith.mulf %48, %48 : vector<8x256xf32>
    %cst_36 = arith.constant dense<0.000000e+00> : vector<8xf32>
    %53 = vector.multi_reduction <add>, %52, %cst_36 [1] : vector<8x256xf32> to vector<8xf32>
    %54 = vector.shape_cast %53 : vector<8xf32> to vector<8x1xf32>
    %55 = arith.addf %7, %54 : vector<8x1xf32>
    %cst_37 = arith.constant 0.000000e+00 : f32
    %56 = vector.broadcast %cst_37 : f32 to vector<8x256xf32>
    %c0_i32_38 = arith.constant 0 : i32
    %57 = arith.addi %5, %c0_i32_38 : i32
    %c0_i32_39 = arith.constant 0 : i32
    %58 = arith.addi %57, %c0_i32_39 : i32
    %c0_40 = arith.constant 0 : index
    %59 = arith.index_cast %58 : i32 to index
    %c1_41 = arith.constant 1 : index
    %c0_42 = arith.constant 0 : index
    %60 = vector.load %arg2[%c0_40, %59, %c1_41, %c0_42] : memref<1x18x18x4xf32, #tpu.memory_space<vmem>>, vector<1x16x16x4xf32>
    %61 = vector.shape_cast %60 : vector<1x16x16x4xf32> to vector<16x16x4xf32>
    %62 = vector.shape_cast %61 : vector<16x16x4xf32> to vector<256x4xf32>
    %c4 = arith.constant 4 : index
    %c0_43 = arith.constant 0 : index
    %c0_44 = arith.constant 0 : index
    %63 = vector.load %arg3[%c4, %c0_43, %c0_44] : memref<16x8x4xf32, #tpu.memory_space<vmem>>, vector<1x8x4xf32>
    %64 = vector.shape_cast %63 : vector<1x8x4xf32> to vector<8x4xf32>
    %cst_45 = arith.constant dense<0.000000e+00> : vector<8x256xf32>
    %65 = tpu.matmul %64, %62, %cst_45 {dimension_numbers = #tpu.dot_dimension_numbers<[1], [1], [0], [0], [0, 0, 1, 0], [], []>} : vector<8x4xf32>, vector<256x4xf32>, vector<8x256xf32> -> vector<8x256xf32>
    %66 = arith.addf %56, %65 : vector<8x256xf32>
    %c0_i32_46 = arith.constant 0 : i32
    %67 = arith.addi %5, %c0_i32_46 : i32
    %c0_i32_47 = arith.constant 0 : i32
    %68 = arith.addi %67, %c0_i32_47 : i32
    %c0_48 = arith.constant 0 : index
    %69 = arith.index_cast %68 : i32 to index
    %c2_49 = arith.constant 2 : index
    %c0_50 = arith.constant 0 : index
    %70 = vector.load %arg2[%c0_48, %69, %c2_49, %c0_50] : memref<1x18x18x4xf32, #tpu.memory_space<vmem>>, vector<1x16x16x4xf32>
    %71 = vector.shape_cast %70 : vector<1x16x16x4xf32> to vector<16x16x4xf32>
    %72 = vector.shape_cast %71 : vector<16x16x4xf32> to vector<256x4xf32>
    %c5 = arith.constant 5 : index
    %c0_51 = arith.constant 0 : index
    %c0_52 = arith.constant 0 : index
    %73 = vector.load %arg3[%c5, %c0_51, %c0_52] : memref<16x8x4xf32, #tpu.memory_space<vmem>>, vector<1x8x4xf32>
    %74 = vector.shape_cast %73 : vector<1x8x4xf32> to vector<8x4xf32>
    %cst_53 = arith.constant dense<0.000000e+00> : vector<8x256xf32>
    %75 = tpu.matmul %74, %72, %cst_53 {dimension_numbers = #tpu.dot_dimension_numbers<[1], [1], [0], [0], [0, 0, 1, 0], [], []>} : vector<8x4xf32>, vector<256x4xf32>, vector<8x256xf32> -> vector<8x256xf32>
    %76 = arith.addf %66, %75 : vector<8x256xf32>
    %c0_i32_54 = arith.constant 0 : i32
    %77 = arith.addi %5, %c0_i32_54 : i32
    %c1_i32_55 = arith.constant 1 : i32
    %78 = arith.addi %77, %c1_i32_55 : i32
    %c0_56 = arith.constant 0 : index
    %79 = arith.index_cast %78 : i32 to index
    %c1_57 = arith.constant 1 : index
    %c0_58 = arith.constant 0 : index
    %80 = vector.load %arg2[%c0_56, %79, %c1_57, %c0_58] : memref<1x18x18x4xf32, #tpu.memory_space<vmem>>, vector<1x16x16x4xf32>
    %81 = vector.shape_cast %80 : vector<1x16x16x4xf32> to vector<16x16x4xf32>
    %82 = vector.shape_cast %81 : vector<16x16x4xf32> to vector<256x4xf32>
    %c6 = arith.constant 6 : index
    %c0_59 = arith.constant 0 : index
    %c0_60 = arith.constant 0 : index
    %83 = vector.load %arg3[%c6, %c0_59, %c0_60] : memref<16x8x4xf32, #tpu.memory_space<vmem>>, vector<1x8x4xf32>
    %84 = vector.shape_cast %83 : vector<1x8x4xf32> to vector<8x4xf32>
    %cst_61 = arith.constant dense<0.000000e+00> : vector<8x256xf32>
    %85 = tpu.matmul %84, %82, %cst_61 {dimension_numbers = #tpu.dot_dimension_numbers<[1], [1], [0], [0], [0, 0, 1, 0], [], []>} : vector<8x4xf32>, vector<256x4xf32>, vector<8x256xf32> -> vector<8x256xf32>
    %86 = arith.addf %76, %85 : vector<8x256xf32>
    %c0_i32_62 = arith.constant 0 : i32
    %87 = arith.addi %5, %c0_i32_62 : i32
    %c1_i32_63 = arith.constant 1 : i32
    %88 = arith.addi %87, %c1_i32_63 : i32
    %c0_64 = arith.constant 0 : index
    %89 = arith.index_cast %88 : i32 to index
    %c2_65 = arith.constant 2 : index
    %c0_66 = arith.constant 0 : index
    %90 = vector.load %arg2[%c0_64, %89, %c2_65, %c0_66] : memref<1x18x18x4xf32, #tpu.memory_space<vmem>>, vector<1x16x16x4xf32>
    %91 = vector.shape_cast %90 : vector<1x16x16x4xf32> to vector<16x16x4xf32>
    %92 = vector.shape_cast %91 : vector<16x16x4xf32> to vector<256x4xf32>
    %c7 = arith.constant 7 : index
    %c0_67 = arith.constant 0 : index
    %c0_68 = arith.constant 0 : index
    %93 = vector.load %arg3[%c7, %c0_67, %c0_68] : memref<16x8x4xf32, #tpu.memory_space<vmem>>, vector<1x8x4xf32>
    %94 = vector.shape_cast %93 : vector<1x8x4xf32> to vector<8x4xf32>
    %cst_69 = arith.constant dense<0.000000e+00> : vector<8x256xf32>
    %95 = tpu.matmul %94, %92, %cst_69 {dimension_numbers = #tpu.dot_dimension_numbers<[1], [1], [0], [0], [0, 0, 1, 0], [], []>} : vector<8x4xf32>, vector<256x4xf32>, vector<8x256xf32> -> vector<8x256xf32>
    %96 = arith.addf %86, %95 : vector<8x256xf32>
    %cst_70 = arith.constant dense<0.000000e+00> : vector<8xf32>
    %97 = vector.multi_reduction <add>, %96, %cst_70 [1] : vector<8x256xf32> to vector<8xf32>
    %98 = vector.shape_cast %97 : vector<8xf32> to vector<8x1xf32>
    %99 = arith.addf %51, %98 : vector<8x1xf32>
    %100 = arith.mulf %96, %96 : vector<8x256xf32>
    %cst_71 = arith.constant dense<0.000000e+00> : vector<8xf32>
    %101 = vector.multi_reduction <add>, %100, %cst_71 [1] : vector<8x256xf32> to vector<8xf32>
    %102 = vector.shape_cast %101 : vector<8xf32> to vector<8x1xf32>
    %103 = arith.addf %55, %102 : vector<8x1xf32>
    %cst_72 = arith.constant 0.000000e+00 : f32
    %104 = vector.broadcast %cst_72 : f32 to vector<8x256xf32>
    %c1_i32_73 = arith.constant 1 : i32
    %105 = arith.addi %5, %c1_i32_73 : i32
    %c0_i32_74 = arith.constant 0 : i32
    %106 = arith.addi %105, %c0_i32_74 : i32
    %c0_75 = arith.constant 0 : index
    %107 = arith.index_cast %106 : i32 to index
    %c0_76 = arith.constant 0 : index
    %c0_77 = arith.constant 0 : index
    %108 = vector.load %arg2[%c0_75, %107, %c0_76, %c0_77] : memref<1x18x18x4xf32, #tpu.memory_space<vmem>>, vector<1x16x16x4xf32>
    %109 = vector.shape_cast %108 : vector<1x16x16x4xf32> to vector<16x16x4xf32>
    %110 = vector.shape_cast %109 : vector<16x16x4xf32> to vector<256x4xf32>
    %c8 = arith.constant 8 : index
    %c0_78 = arith.constant 0 : index
    %c0_79 = arith.constant 0 : index
    %111 = vector.load %arg3[%c8, %c0_78, %c0_79] : memref<16x8x4xf32, #tpu.memory_space<vmem>>, vector<1x8x4xf32>
    %112 = vector.shape_cast %111 : vector<1x8x4xf32> to vector<8x4xf32>
    %cst_80 = arith.constant dense<0.000000e+00> : vector<8x256xf32>
    %113 = tpu.matmul %112, %110, %cst_80 {dimension_numbers = #tpu.dot_dimension_numbers<[1], [1], [0], [0], [0, 0, 1, 0], [], []>} : vector<8x4xf32>, vector<256x4xf32>, vector<8x256xf32> -> vector<8x256xf32>
    %114 = arith.addf %104, %113 : vector<8x256xf32>
    %c1_i32_81 = arith.constant 1 : i32
    %115 = arith.addi %5, %c1_i32_81 : i32
    %c0_i32_82 = arith.constant 0 : i32
    %116 = arith.addi %115, %c0_i32_82 : i32
    %c0_83 = arith.constant 0 : index
    %117 = arith.index_cast %116 : i32 to index
    %c1_84 = arith.constant 1 : index
    %c0_85 = arith.constant 0 : index
    %118 = vector.load %arg2[%c0_83, %117, %c1_84, %c0_85] : memref<1x18x18x4xf32, #tpu.memory_space<vmem>>, vector<1x16x16x4xf32>
    %119 = vector.shape_cast %118 : vector<1x16x16x4xf32> to vector<16x16x4xf32>
    %120 = vector.shape_cast %119 : vector<16x16x4xf32> to vector<256x4xf32>
    %c9 = arith.constant 9 : index
    %c0_86 = arith.constant 0 : index
    %c0_87 = arith.constant 0 : index
    %121 = vector.load %arg3[%c9, %c0_86, %c0_87] : memref<16x8x4xf32, #tpu.memory_space<vmem>>, vector<1x8x4xf32>
    %122 = vector.shape_cast %121 : vector<1x8x4xf32> to vector<8x4xf32>
    %cst_88 = arith.constant dense<0.000000e+00> : vector<8x256xf32>
    %123 = tpu.matmul %122, %120, %cst_88 {dimension_numbers = #tpu.dot_dimension_numbers<[1], [1], [0], [0], [0, 0, 1, 0], [], []>} : vector<8x4xf32>, vector<256x4xf32>, vector<8x256xf32> -> vector<8x256xf32>
    %124 = arith.addf %114, %123 : vector<8x256xf32>
    %c1_i32_89 = arith.constant 1 : i32
    %125 = arith.addi %5, %c1_i32_89 : i32
    %c1_i32_90 = arith.constant 1 : i32
    %126 = arith.addi %125, %c1_i32_90 : i32
    %c0_91 = arith.constant 0 : index
    %127 = arith.index_cast %126 : i32 to index
    %c0_92 = arith.constant 0 : index
    %c0_93 = arith.constant 0 : index
    %128 = vector.load %arg2[%c0_91, %127, %c0_92, %c0_93] : memref<1x18x18x4xf32, #tpu.memory_space<vmem>>, vector<1x16x16x4xf32>
    %129 = vector.shape_cast %128 : vector<1x16x16x4xf32> to vector<16x16x4xf32>
    %130 = vector.shape_cast %129 : vector<16x16x4xf32> to vector<256x4xf32>
    %c10 = arith.constant 10 : index
    %c0_94 = arith.constant 0 : index
    %c0_95 = arith.constant 0 : index
    %131 = vector.load %arg3[%c10, %c0_94, %c0_95] : memref<16x8x4xf32, #tpu.memory_space<vmem>>, vector<1x8x4xf32>
    %132 = vector.shape_cast %131 : vector<1x8x4xf32> to vector<8x4xf32>
    %cst_96 = arith.constant dense<0.000000e+00> : vector<8x256xf32>
    %133 = tpu.matmul %132, %130, %cst_96 {dimension_numbers = #tpu.dot_dimension_numbers<[1], [1], [0], [0], [0, 0, 1, 0], [], []>} : vector<8x4xf32>, vector<256x4xf32>, vector<8x256xf32> -> vector<8x256xf32>
    %134 = arith.addf %124, %133 : vector<8x256xf32>
    %c1_i32_97 = arith.constant 1 : i32
    %135 = arith.addi %5, %c1_i32_97 : i32
    %c1_i32_98 = arith.constant 1 : i32
    %136 = arith.addi %135, %c1_i32_98 : i32
    %c0_99 = arith.constant 0 : index
    %137 = arith.index_cast %136 : i32 to index
    %c1_100 = arith.constant 1 : index
    %c0_101 = arith.constant 0 : index
    %138 = vector.load %arg2[%c0_99, %137, %c1_100, %c0_101] : memref<1x18x18x4xf32, #tpu.memory_space<vmem>>, vector<1x16x16x4xf32>
    %139 = vector.shape_cast %138 : vector<1x16x16x4xf32> to vector<16x16x4xf32>
    %140 = vector.shape_cast %139 : vector<16x16x4xf32> to vector<256x4xf32>
    %c11 = arith.constant 11 : index
    %c0_102 = arith.constant 0 : index
    %c0_103 = arith.constant 0 : index
    %141 = vector.load %arg3[%c11, %c0_102, %c0_103] : memref<16x8x4xf32, #tpu.memory_space<vmem>>, vector<1x8x4xf32>
    %142 = vector.shape_cast %141 : vector<1x8x4xf32> to vector<8x4xf32>
    %cst_104 = arith.constant dense<0.000000e+00> : vector<8x256xf32>
    %143 = tpu.matmul %142, %140, %cst_104 {dimension_numbers = #tpu.dot_dimension_numbers<[1], [1], [0], [0], [0, 0, 1, 0], [], []>} : vector<8x4xf32>, vector<256x4xf32>, vector<8x256xf32> -> vector<8x256xf32>
    %144 = arith.addf %134, %143 : vector<8x256xf32>
    %cst_105 = arith.constant dense<0.000000e+00> : vector<8xf32>
    %145 = vector.multi_reduction <add>, %144, %cst_105 [1] : vector<8x256xf32> to vector<8xf32>
    %146 = vector.shape_cast %145 : vector<8xf32> to vector<8x1xf32>
    %147 = arith.addf %99, %146 : vector<8x1xf32>
    %148 = arith.mulf %144, %144 : vector<8x256xf32>
    %cst_106 = arith.constant dense<0.000000e+00> : vector<8xf32>
    %149 = vector.multi_reduction <add>, %148, %cst_106 [1] : vector<8x256xf32> to vector<8xf32>
    %150 = vector.shape_cast %149 : vector<8xf32> to vector<8x1xf32>
    %151 = arith.addf %103, %150 : vector<8x1xf32>
    %cst_107 = arith.constant 0.000000e+00 : f32
    %152 = vector.broadcast %cst_107 : f32 to vector<8x256xf32>
    %c1_i32_108 = arith.constant 1 : i32
    %153 = arith.addi %5, %c1_i32_108 : i32
    %c0_i32_109 = arith.constant 0 : i32
    %154 = arith.addi %153, %c0_i32_109 : i32
    %c0_110 = arith.constant 0 : index
    %155 = arith.index_cast %154 : i32 to index
    %c1_111 = arith.constant 1 : index
    %c0_112 = arith.constant 0 : index
    %156 = vector.load %arg2[%c0_110, %155, %c1_111, %c0_112] : memref<1x18x18x4xf32, #tpu.memory_space<vmem>>, vector<1x16x16x4xf32>
    %157 = vector.shape_cast %156 : vector<1x16x16x4xf32> to vector<16x16x4xf32>
    %158 = vector.shape_cast %157 : vector<16x16x4xf32> to vector<256x4xf32>
    %c12 = arith.constant 12 : index
    %c0_113 = arith.constant 0 : index
    %c0_114 = arith.constant 0 : index
    %159 = vector.load %arg3[%c12, %c0_113, %c0_114] : memref<16x8x4xf32, #tpu.memory_space<vmem>>, vector<1x8x4xf32>
    %160 = vector.shape_cast %159 : vector<1x8x4xf32> to vector<8x4xf32>
    %cst_115 = arith.constant dense<0.000000e+00> : vector<8x256xf32>
    %161 = tpu.matmul %160, %158, %cst_115 {dimension_numbers = #tpu.dot_dimension_numbers<[1], [1], [0], [0], [0, 0, 1, 0], [], []>} : vector<8x4xf32>, vector<256x4xf32>, vector<8x256xf32> -> vector<8x256xf32>
    %162 = arith.addf %152, %161 : vector<8x256xf32>
    %c1_i32_116 = arith.constant 1 : i32
    %163 = arith.addi %5, %c1_i32_116 : i32
    %c0_i32_117 = arith.constant 0 : i32
    %164 = arith.addi %163, %c0_i32_117 : i32
    %c0_118 = arith.constant 0 : index
    %165 = arith.index_cast %164 : i32 to index
    %c2_119 = arith.constant 2 : index
    %c0_120 = arith.constant 0 : index
    %166 = vector.load %arg2[%c0_118, %165, %c2_119, %c0_120] : memref<1x18x18x4xf32, #tpu.memory_space<vmem>>, vector<1x16x16x4xf32>
    %167 = vector.shape_cast %166 : vector<1x16x16x4xf32> to vector<16x16x4xf32>
    %168 = vector.shape_cast %167 : vector<16x16x4xf32> to vector<256x4xf32>
    %c13 = arith.constant 13 : index
    %c0_121 = arith.constant 0 : index
    %c0_122 = arith.constant 0 : index
    %169 = vector.load %arg3[%c13, %c0_121, %c0_122] : memref<16x8x4xf32, #tpu.memory_space<vmem>>, vector<1x8x4xf32>
    %170 = vector.shape_cast %169 : vector<1x8x4xf32> to vector<8x4xf32>
    %cst_123 = arith.constant dense<0.000000e+00> : vector<8x256xf32>
    %171 = tpu.matmul %170, %168, %cst_123 {dimension_numbers = #tpu.dot_dimension_numbers<[1], [1], [0], [0], [0, 0, 1, 0], [], []>} : vector<8x4xf32>, vector<256x4xf32>, vector<8x256xf32> -> vector<8x256xf32>
    %172 = arith.addf %162, %171 : vector<8x256xf32>
    %c1_i32_124 = arith.constant 1 : i32
    %173 = arith.addi %5, %c1_i32_124 : i32
    %c1_i32_125 = arith.constant 1 : i32
    %174 = arith.addi %173, %c1_i32_125 : i32
    %c0_126 = arith.constant 0 : index
    %175 = arith.index_cast %174 : i32 to index
    %c1_127 = arith.constant 1 : index
    %c0_128 = arith.constant 0 : index
    %176 = vector.load %arg2[%c0_126, %175, %c1_127, %c0_128] : memref<1x18x18x4xf32, #tpu.memory_space<vmem>>, vector<1x16x16x4xf32>
    %177 = vector.shape_cast %176 : vector<1x16x16x4xf32> to vector<16x16x4xf32>
    %178 = vector.shape_cast %177 : vector<16x16x4xf32> to vector<256x4xf32>
    %c14 = arith.constant 14 : index
    %c0_129 = arith.constant 0 : index
    %c0_130 = arith.constant 0 : index
    %179 = vector.load %arg3[%c14, %c0_129, %c0_130] : memref<16x8x4xf32, #tpu.memory_space<vmem>>, vector<1x8x4xf32>
    %180 = vector.shape_cast %179 : vector<1x8x4xf32> to vector<8x4xf32>
    %cst_131 = arith.constant dense<0.000000e+00> : vector<8x256xf32>
    %181 = tpu.matmul %180, %178, %cst_131 {dimension_numbers = #tpu.dot_dimension_numbers<[1], [1], [0], [0], [0, 0, 1, 0], [], []>} : vector<8x4xf32>, vector<256x4xf32>, vector<8x256xf32> -> vector<8x256xf32>
    %182 = arith.addf %172, %181 : vector<8x256xf32>
    %c1_i32_132 = arith.constant 1 : i32
    %183 = arith.addi %5, %c1_i32_132 : i32
    %c1_i32_133 = arith.constant 1 : i32
    %184 = arith.addi %183, %c1_i32_133 : i32
    %c0_134 = arith.constant 0 : index
    %185 = arith.index_cast %184 : i32 to index
    %c2_135 = arith.constant 2 : index
    %c0_136 = arith.constant 0 : index
    %186 = vector.load %arg2[%c0_134, %185, %c2_135, %c0_136] : memref<1x18x18x4xf32, #tpu.memory_space<vmem>>, vector<1x16x16x4xf32>
    %187 = vector.shape_cast %186 : vector<1x16x16x4xf32> to vector<16x16x4xf32>
    %188 = vector.shape_cast %187 : vector<16x16x4xf32> to vector<256x4xf32>
    %c15 = arith.constant 15 : index
    %c0_137 = arith.constant 0 : index
    %c0_138 = arith.constant 0 : index
    %189 = vector.load %arg3[%c15, %c0_137, %c0_138] : memref<16x8x4xf32, #tpu.memory_space<vmem>>, vector<1x8x4xf32>
    %190 = vector.shape_cast %189 : vector<1x8x4xf32> to vector<8x4xf32>
    %cst_139 = arith.constant dense<0.000000e+00> : vector<8x256xf32>
    %191 = tpu.matmul %190, %188, %cst_139 {dimension_numbers = #tpu.dot_dimension_numbers<[1], [1], [0], [0], [0, 0, 1, 0], [], []>} : vector<8x4xf32>, vector<256x4xf32>, vector<8x256xf32> -> vector<8x256xf32>
    %192 = arith.addf %182, %191 : vector<8x256xf32>
    %cst_140 = arith.constant dense<0.000000e+00> : vector<8xf32>
    %193 = vector.multi_reduction <add>, %192, %cst_140 [1] : vector<8x256xf32> to vector<8xf32>
    %194 = vector.shape_cast %193 : vector<8xf32> to vector<8x1xf32>
    %195 = arith.addf %147, %194 : vector<8x1xf32>
    %196 = arith.mulf %192, %192 : vector<8x256xf32>
    %cst_141 = arith.constant dense<0.000000e+00> : vector<8xf32>
    %197 = vector.multi_reduction <add>, %196, %cst_141 [1] : vector<8x256xf32> to vector<8xf32>
    %198 = vector.shape_cast %197 : vector<8xf32> to vector<8x1xf32>
    %199 = arith.addf %151, %198 : vector<8x1xf32>
    %c0_142 = arith.constant 0 : index
    %c0_143 = arith.constant 0 : index
    %200 = vector.load %arg4[%c0_142, %c0_143] : memref<8x1xf32, #tpu.memory_space<vmem>>, vector<8x1xf32>
    %201 = arith.addf %200, %195 : vector<8x1xf32>
    %c0_144 = arith.constant 0 : index
    %c0_145 = arith.constant 0 : index
    %202 = vector.load %arg4[%c0_144, %c0_145] : memref<8x1xf32, #tpu.memory_space<vmem>>, vector<8x1xf32>
    tpu.vector_store %arg4[%c0_144, %c0_145], %201 {strides = array<i32>} : memref<8x1xf32, #tpu.memory_space<vmem>>, vector<8x1xf32>,
    %c0_146 = arith.constant 0 : index
    %c0_147 = arith.constant 0 : index
    %203 = vector.load %arg5[%c0_146, %c0_147] : memref<8x1xf32, #tpu.memory_space<vmem>>, vector<8x1xf32>
    %204 = arith.addf %203, %199 : vector<8x1xf32>
    %c0_148 = arith.constant 0 : index
    %c0_149 = arith.constant 0 : index
    %205 = vector.load %arg5[%c0_148, %c0_149] : memref<8x1xf32, #tpu.memory_space<vmem>>, vector<8x1xf32>
    tpu.vector_store %arg5[%c0_148, %c0_149], %204 {strides = array<i32>} : memref<8x1xf32, #tpu.memory_space<vmem>>, vector<8x1xf32>,
    return
  }
  func.func @transform_0(%arg0: i32, %arg1: i32) -> (i32, i32, i32, i32) {
    %c0_i32 = arith.constant 0 : i32
    %c0_i32_0 = arith.constant 0 : i32
    %c0_i32_1 = arith.constant 0 : i32
    %c0_i32_2 = arith.constant 0 : i32
    return %arg0, %c0_i32, %c0_i32_0, %c0_i32_1 : i32, i32, i32, i32
  }
  func.func @transform_1(%arg0: i32, %arg1: i32) -> (i32, i32, i32) {
    %c0_i32 = arith.constant 0 : i32
    %c0_i32_0 = arith.constant 0 : i32
    %c0_i32_1 = arith.constant 0 : i32
    %c0_i32_2 = arith.constant 0 : i32
    return %c0_i32, %c0_i32_0, %c0_i32_1 : i32, i32, i32
  }
  func.func @transform_2(%arg0: i32, %arg1: i32) -> (i32, i32) {
    %c0_i32 = arith.constant 0 : i32
    %c0_i32_0 = arith.constant 0 : i32
    %c0_i32_1 = arith.constant 0 : i32
    return %c0_i32, %c0_i32_0 : i32, i32
  }
  func.func @transform_3(%arg0: i32, %arg1: i32) -> (i32, i32) {
    %c0_i32 = arith.constant 0 : i32
    %c0_i32_0 = arith.constant 0 : i32
    %c0_i32_1 = arith.constant 0 : i32
    return %c0_i32, %c0_i32_0 : i32, i32
  }
}

module attributes {stable_mosaic.version = 11 : i64} {
  func.func @_apply_kernel(%arg0: i32, %arg1: i32, %arg2: memref<1x18x18x4xf32, #tpu.memory_space<vmem>>, %arg3: memref<16x8x4xf32, #tpu.memory_space<vmem>>, %arg4: memref<8x1xf32, #tpu.memory_space<vmem>>, %arg5: memref<8x1xf32, #tpu.memory_space<vmem>>, %arg6: memref<1x8x256xf32, #tpu.memory_space<vmem>>, %arg7: memref<1x8x256xf32, #tpu.memory_space<vmem>>, %arg8: memref<1x8x256xf32, #tpu.memory_space<vmem>>, %arg9: memref<1x8x256xf32, #tpu.memory_space<vmem>>) attributes {dimension_semantics = [#tpu.dimension_semantics<parallel>, #tpu.dimension_semantics<parallel>], iteration_bounds = array<i64: 2, 1>, scalar_prefetch = 0 : i64, scratch_operands = 0 : i64, tpu.core_type = #tpu.core_type<tc>, window_params = [{transform_indices = @transform_0, window_bounds = array<i64: 1, 18, 18, 4>}, {pipeline_mode = #tpu.pipeline_mode<synchronous>, transform_indices = @transform_1, window_bounds = array<i64: 16, 8, 4>}, {pipeline_mode = #tpu.pipeline_mode<synchronous>, transform_indices = @transform_2, window_bounds = array<i64: 8, 1>}, {pipeline_mode = #tpu.pipeline_mode<synchronous>, transform_indices = @transform_3, window_bounds = array<i64: 8, 1>}, {transform_indices = @transform_4, window_bounds = array<i64: 1, 8, 256>}, {transform_indices = @transform_5, window_bounds = array<i64: 1, 8, 256>}, {transform_indices = @transform_6, window_bounds = array<i64: 1, 8, 256>}, {transform_indices = @transform_7, window_bounds = array<i64: 1, 8, 256>}]} {
    %c16_i32 = arith.constant 16 : i32
    %0 = arith.muli %arg1, %c16_i32 : i32
    %cst = arith.constant 0.000000e+00 : f32
    %1 = vector.broadcast %cst : f32 to vector<8x256xf32>
    %c0_i32 = arith.constant 0 : i32
    %2 = arith.addi %0, %c0_i32 : i32
    %c0_i32_0 = arith.constant 0 : i32
    %3 = arith.addi %2, %c0_i32_0 : i32
    %c0 = arith.constant 0 : index
    %4 = arith.index_cast %3 : i32 to index
    %c0_1 = arith.constant 0 : index
    %c0_2 = arith.constant 0 : index
    %5 = vector.load %arg2[%c0, %4, %c0_1, %c0_2] : memref<1x18x18x4xf32, #tpu.memory_space<vmem>>, vector<1x16x16x4xf32>
    %6 = vector.shape_cast %5 : vector<1x16x16x4xf32> to vector<16x16x4xf32>
    %7 = vector.shape_cast %6 : vector<16x16x4xf32> to vector<256x4xf32>
    %c0_3 = arith.constant 0 : index
    %c0_4 = arith.constant 0 : index
    %c0_5 = arith.constant 0 : index
    %8 = vector.load %arg3[%c0_3, %c0_4, %c0_5] : memref<16x8x4xf32, #tpu.memory_space<vmem>>, vector<1x8x4xf32>
    %9 = vector.shape_cast %8 : vector<1x8x4xf32> to vector<8x4xf32>
    %cst_6 = arith.constant dense<0.000000e+00> : vector<8x256xf32>
    %10 = tpu.matmul %9, %7, %cst_6 {dimension_numbers = #tpu.dot_dimension_numbers<[1], [1], [0], [0], [0, 0, 1, 0], [], []>} : vector<8x4xf32>, vector<256x4xf32>, vector<8x256xf32> -> vector<8x256xf32>
    %11 = arith.addf %1, %10 : vector<8x256xf32>
    %c0_i32_7 = arith.constant 0 : i32
    %12 = arith.addi %0, %c0_i32_7 : i32
    %c0_i32_8 = arith.constant 0 : i32
    %13 = arith.addi %12, %c0_i32_8 : i32
    %c0_9 = arith.constant 0 : index
    %14 = arith.index_cast %13 : i32 to index
    %c1 = arith.constant 1 : index
    %c0_10 = arith.constant 0 : index
    %15 = vector.load %arg2[%c0_9, %14, %c1, %c0_10] : memref<1x18x18x4xf32, #tpu.memory_space<vmem>>, vector<1x16x16x4xf32>
    %16 = vector.shape_cast %15 : vector<1x16x16x4xf32> to vector<16x16x4xf32>
    %17 = vector.shape_cast %16 : vector<16x16x4xf32> to vector<256x4xf32>
    %c1_11 = arith.constant 1 : index
    %c0_12 = arith.constant 0 : index
    %c0_13 = arith.constant 0 : index
    %18 = vector.load %arg3[%c1_11, %c0_12, %c0_13] : memref<16x8x4xf32, #tpu.memory_space<vmem>>, vector<1x8x4xf32>
    %19 = vector.shape_cast %18 : vector<1x8x4xf32> to vector<8x4xf32>
    %cst_14 = arith.constant dense<0.000000e+00> : vector<8x256xf32>
    %20 = tpu.matmul %19, %17, %cst_14 {dimension_numbers = #tpu.dot_dimension_numbers<[1], [1], [0], [0], [0, 0, 1, 0], [], []>} : vector<8x4xf32>, vector<256x4xf32>, vector<8x256xf32> -> vector<8x256xf32>
    %21 = arith.addf %11, %20 : vector<8x256xf32>
    %c0_i32_15 = arith.constant 0 : i32
    %22 = arith.addi %0, %c0_i32_15 : i32
    %c1_i32 = arith.constant 1 : i32
    %23 = arith.addi %22, %c1_i32 : i32
    %c0_16 = arith.constant 0 : index
    %24 = arith.index_cast %23 : i32 to index
    %c0_17 = arith.constant 0 : index
    %c0_18 = arith.constant 0 : index
    %25 = vector.load %arg2[%c0_16, %24, %c0_17, %c0_18] : memref<1x18x18x4xf32, #tpu.memory_space<vmem>>, vector<1x16x16x4xf32>
    %26 = vector.shape_cast %25 : vector<1x16x16x4xf32> to vector<16x16x4xf32>
    %27 = vector.shape_cast %26 : vector<16x16x4xf32> to vector<256x4xf32>
    %c2 = arith.constant 2 : index
    %c0_19 = arith.constant 0 : index
    %c0_20 = arith.constant 0 : index
    %28 = vector.load %arg3[%c2, %c0_19, %c0_20] : memref<16x8x4xf32, #tpu.memory_space<vmem>>, vector<1x8x4xf32>
    %29 = vector.shape_cast %28 : vector<1x8x4xf32> to vector<8x4xf32>
    %cst_21 = arith.constant dense<0.000000e+00> : vector<8x256xf32>
    %30 = tpu.matmul %29, %27, %cst_21 {dimension_numbers = #tpu.dot_dimension_numbers<[1], [1], [0], [0], [0, 0, 1, 0], [], []>} : vector<8x4xf32>, vector<256x4xf32>, vector<8x256xf32> -> vector<8x256xf32>
    %31 = arith.addf %21, %30 : vector<8x256xf32>
    %c0_i32_22 = arith.constant 0 : i32
    %32 = arith.addi %0, %c0_i32_22 : i32
    %c1_i32_23 = arith.constant 1 : i32
    %33 = arith.addi %32, %c1_i32_23 : i32
    %c0_24 = arith.constant 0 : index
    %34 = arith.index_cast %33 : i32 to index
    %c1_25 = arith.constant 1 : index
    %c0_26 = arith.constant 0 : index
    %35 = vector.load %arg2[%c0_24, %34, %c1_25, %c0_26] : memref<1x18x18x4xf32, #tpu.memory_space<vmem>>, vector<1x16x16x4xf32>
    %36 = vector.shape_cast %35 : vector<1x16x16x4xf32> to vector<16x16x4xf32>
    %37 = vector.shape_cast %36 : vector<16x16x4xf32> to vector<256x4xf32>
    %c3 = arith.constant 3 : index
    %c0_27 = arith.constant 0 : index
    %c0_28 = arith.constant 0 : index
    %38 = vector.load %arg3[%c3, %c0_27, %c0_28] : memref<16x8x4xf32, #tpu.memory_space<vmem>>, vector<1x8x4xf32>
    %39 = vector.shape_cast %38 : vector<1x8x4xf32> to vector<8x4xf32>
    %cst_29 = arith.constant dense<0.000000e+00> : vector<8x256xf32>
    %40 = tpu.matmul %39, %37, %cst_29 {dimension_numbers = #tpu.dot_dimension_numbers<[1], [1], [0], [0], [0, 0, 1, 0], [], []>} : vector<8x4xf32>, vector<256x4xf32>, vector<8x256xf32> -> vector<8x256xf32>
    %41 = arith.addf %31, %40 : vector<8x256xf32>
    %c0_30 = arith.constant 0 : index
    %c0_31 = arith.constant 0 : index
    %42 = vector.load %arg4[%c0_30, %c0_31] : memref<8x1xf32, #tpu.memory_space<vmem>>, vector<8x1xf32>
    %43 = vector.broadcast %42 : vector<8x1xf32> to vector<8x256xf32>
    %44 = arith.mulf %41, %43 : vector<8x256xf32>
    %c0_32 = arith.constant 0 : index
    %c0_33 = arith.constant 0 : index
    %45 = vector.load %arg5[%c0_32, %c0_33] : memref<8x1xf32, #tpu.memory_space<vmem>>, vector<8x1xf32>
    %46 = vector.broadcast %45 : vector<8x1xf32> to vector<8x256xf32>
    %47 = arith.addf %44, %46 : vector<8x256xf32>
    %cst_34 = arith.constant 0.000000e+00 : f32
    %48 = vector.broadcast %cst_34 : f32 to vector<8x256xf32>
    %49 = arith.maximumf %47, %48 : vector<8x256xf32>
    %c0_35 = arith.constant 0 : index
    %c0_36 = arith.constant 0 : index
    %c0_37 = arith.constant 0 : index
    %50 = vector.load %arg6[%c0_35, %c0_36, %c0_37] : memref<1x8x256xf32, #tpu.memory_space<vmem>>, vector<1x8x256xf32>
    %51 = vector.shape_cast %50 : vector<1x8x256xf32> to vector<8x256xf32>
    %52 = vector.shape_cast %49 : vector<8x256xf32> to vector<1x8x256xf32>
    tpu.vector_store %arg6[%c0_35, %c0_36, %c0_37], %52 {strides = array<i32>} : memref<1x8x256xf32, #tpu.memory_space<vmem>>, vector<1x8x256xf32>,
    %cst_38 = arith.constant 0.000000e+00 : f32
    %53 = vector.broadcast %cst_38 : f32 to vector<8x256xf32>
    %c0_i32_39 = arith.constant 0 : i32
    %54 = arith.addi %0, %c0_i32_39 : i32
    %c0_i32_40 = arith.constant 0 : i32
    %55 = arith.addi %54, %c0_i32_40 : i32
    %c0_41 = arith.constant 0 : index
    %56 = arith.index_cast %55 : i32 to index
    %c1_42 = arith.constant 1 : index
    %c0_43 = arith.constant 0 : index
    %57 = vector.load %arg2[%c0_41, %56, %c1_42, %c0_43] : memref<1x18x18x4xf32, #tpu.memory_space<vmem>>, vector<1x16x16x4xf32>
    %58 = vector.shape_cast %57 : vector<1x16x16x4xf32> to vector<16x16x4xf32>
    %59 = vector.shape_cast %58 : vector<16x16x4xf32> to vector<256x4xf32>
    %c4 = arith.constant 4 : index
    %c0_44 = arith.constant 0 : index
    %c0_45 = arith.constant 0 : index
    %60 = vector.load %arg3[%c4, %c0_44, %c0_45] : memref<16x8x4xf32, #tpu.memory_space<vmem>>, vector<1x8x4xf32>
    %61 = vector.shape_cast %60 : vector<1x8x4xf32> to vector<8x4xf32>
    %cst_46 = arith.constant dense<0.000000e+00> : vector<8x256xf32>
    %62 = tpu.matmul %61, %59, %cst_46 {dimension_numbers = #tpu.dot_dimension_numbers<[1], [1], [0], [0], [0, 0, 1, 0], [], []>} : vector<8x4xf32>, vector<256x4xf32>, vector<8x256xf32> -> vector<8x256xf32>
    %63 = arith.addf %53, %62 : vector<8x256xf32>
    %c0_i32_47 = arith.constant 0 : i32
    %64 = arith.addi %0, %c0_i32_47 : i32
    %c0_i32_48 = arith.constant 0 : i32
    %65 = arith.addi %64, %c0_i32_48 : i32
    %c0_49 = arith.constant 0 : index
    %66 = arith.index_cast %65 : i32 to index
    %c2_50 = arith.constant 2 : index
    %c0_51 = arith.constant 0 : index
    %67 = vector.load %arg2[%c0_49, %66, %c2_50, %c0_51] : memref<1x18x18x4xf32, #tpu.memory_space<vmem>>, vector<1x16x16x4xf32>
    %68 = vector.shape_cast %67 : vector<1x16x16x4xf32> to vector<16x16x4xf32>
    %69 = vector.shape_cast %68 : vector<16x16x4xf32> to vector<256x4xf32>
    %c5 = arith.constant 5 : index
    %c0_52 = arith.constant 0 : index
    %c0_53 = arith.constant 0 : index
    %70 = vector.load %arg3[%c5, %c0_52, %c0_53] : memref<16x8x4xf32, #tpu.memory_space<vmem>>, vector<1x8x4xf32>
    %71 = vector.shape_cast %70 : vector<1x8x4xf32> to vector<8x4xf32>
    %cst_54 = arith.constant dense<0.000000e+00> : vector<8x256xf32>
    %72 = tpu.matmul %71, %69, %cst_54 {dimension_numbers = #tpu.dot_dimension_numbers<[1], [1], [0], [0], [0, 0, 1, 0], [], []>} : vector<8x4xf32>, vector<256x4xf32>, vector<8x256xf32> -> vector<8x256xf32>
    %73 = arith.addf %63, %72 : vector<8x256xf32>
    %c0_i32_55 = arith.constant 0 : i32
    %74 = arith.addi %0, %c0_i32_55 : i32
    %c1_i32_56 = arith.constant 1 : i32
    %75 = arith.addi %74, %c1_i32_56 : i32
    %c0_57 = arith.constant 0 : index
    %76 = arith.index_cast %75 : i32 to index
    %c1_58 = arith.constant 1 : index
    %c0_59 = arith.constant 0 : index
    %77 = vector.load %arg2[%c0_57, %76, %c1_58, %c0_59] : memref<1x18x18x4xf32, #tpu.memory_space<vmem>>, vector<1x16x16x4xf32>
    %78 = vector.shape_cast %77 : vector<1x16x16x4xf32> to vector<16x16x4xf32>
    %79 = vector.shape_cast %78 : vector<16x16x4xf32> to vector<256x4xf32>
    %c6 = arith.constant 6 : index
    %c0_60 = arith.constant 0 : index
    %c0_61 = arith.constant 0 : index
    %80 = vector.load %arg3[%c6, %c0_60, %c0_61] : memref<16x8x4xf32, #tpu.memory_space<vmem>>, vector<1x8x4xf32>
    %81 = vector.shape_cast %80 : vector<1x8x4xf32> to vector<8x4xf32>
    %cst_62 = arith.constant dense<0.000000e+00> : vector<8x256xf32>
    %82 = tpu.matmul %81, %79, %cst_62 {dimension_numbers = #tpu.dot_dimension_numbers<[1], [1], [0], [0], [0, 0, 1, 0], [], []>} : vector<8x4xf32>, vector<256x4xf32>, vector<8x256xf32> -> vector<8x256xf32>
    %83 = arith.addf %73, %82 : vector<8x256xf32>
    %c0_i32_63 = arith.constant 0 : i32
    %84 = arith.addi %0, %c0_i32_63 : i32
    %c1_i32_64 = arith.constant 1 : i32
    %85 = arith.addi %84, %c1_i32_64 : i32
    %c0_65 = arith.constant 0 : index
    %86 = arith.index_cast %85 : i32 to index
    %c2_66 = arith.constant 2 : index
    %c0_67 = arith.constant 0 : index
    %87 = vector.load %arg2[%c0_65, %86, %c2_66, %c0_67] : memref<1x18x18x4xf32, #tpu.memory_space<vmem>>, vector<1x16x16x4xf32>
    %88 = vector.shape_cast %87 : vector<1x16x16x4xf32> to vector<16x16x4xf32>
    %89 = vector.shape_cast %88 : vector<16x16x4xf32> to vector<256x4xf32>
    %c7 = arith.constant 7 : index
    %c0_68 = arith.constant 0 : index
    %c0_69 = arith.constant 0 : index
    %90 = vector.load %arg3[%c7, %c0_68, %c0_69] : memref<16x8x4xf32, #tpu.memory_space<vmem>>, vector<1x8x4xf32>
    %91 = vector.shape_cast %90 : vector<1x8x4xf32> to vector<8x4xf32>
    %cst_70 = arith.constant dense<0.000000e+00> : vector<8x256xf32>
    %92 = tpu.matmul %91, %89, %cst_70 {dimension_numbers = #tpu.dot_dimension_numbers<[1], [1], [0], [0], [0, 0, 1, 0], [], []>} : vector<8x4xf32>, vector<256x4xf32>, vector<8x256xf32> -> vector<8x256xf32>
    %93 = arith.addf %83, %92 : vector<8x256xf32>
    %c0_71 = arith.constant 0 : index
    %c0_72 = arith.constant 0 : index
    %94 = vector.load %arg4[%c0_71, %c0_72] : memref<8x1xf32, #tpu.memory_space<vmem>>, vector<8x1xf32>
    %95 = vector.broadcast %94 : vector<8x1xf32> to vector<8x256xf32>
    %96 = arith.mulf %93, %95 : vector<8x256xf32>
    %c0_73 = arith.constant 0 : index
    %c0_74 = arith.constant 0 : index
    %97 = vector.load %arg5[%c0_73, %c0_74] : memref<8x1xf32, #tpu.memory_space<vmem>>, vector<8x1xf32>
    %98 = vector.broadcast %97 : vector<8x1xf32> to vector<8x256xf32>
    %99 = arith.addf %96, %98 : vector<8x256xf32>
    %cst_75 = arith.constant 0.000000e+00 : f32
    %100 = vector.broadcast %cst_75 : f32 to vector<8x256xf32>
    %101 = arith.maximumf %99, %100 : vector<8x256xf32>
    %c0_76 = arith.constant 0 : index
    %c0_77 = arith.constant 0 : index
    %c0_78 = arith.constant 0 : index
    %102 = vector.load %arg7[%c0_76, %c0_77, %c0_78] : memref<1x8x256xf32, #tpu.memory_space<vmem>>, vector<1x8x256xf32>
    %103 = vector.shape_cast %102 : vector<1x8x256xf32> to vector<8x256xf32>
    %104 = vector.shape_cast %101 : vector<8x256xf32> to vector<1x8x256xf32>
    tpu.vector_store %arg7[%c0_76, %c0_77, %c0_78], %104 {strides = array<i32>} : memref<1x8x256xf32, #tpu.memory_space<vmem>>, vector<1x8x256xf32>,
    %cst_79 = arith.constant 0.000000e+00 : f32
    %105 = vector.broadcast %cst_79 : f32 to vector<8x256xf32>
    %c1_i32_80 = arith.constant 1 : i32
    %106 = arith.addi %0, %c1_i32_80 : i32
    %c0_i32_81 = arith.constant 0 : i32
    %107 = arith.addi %106, %c0_i32_81 : i32
    %c0_82 = arith.constant 0 : index
    %108 = arith.index_cast %107 : i32 to index
    %c0_83 = arith.constant 0 : index
    %c0_84 = arith.constant 0 : index
    %109 = vector.load %arg2[%c0_82, %108, %c0_83, %c0_84] : memref<1x18x18x4xf32, #tpu.memory_space<vmem>>, vector<1x16x16x4xf32>
    %110 = vector.shape_cast %109 : vector<1x16x16x4xf32> to vector<16x16x4xf32>
    %111 = vector.shape_cast %110 : vector<16x16x4xf32> to vector<256x4xf32>
    %c8 = arith.constant 8 : index
    %c0_85 = arith.constant 0 : index
    %c0_86 = arith.constant 0 : index
    %112 = vector.load %arg3[%c8, %c0_85, %c0_86] : memref<16x8x4xf32, #tpu.memory_space<vmem>>, vector<1x8x4xf32>
    %113 = vector.shape_cast %112 : vector<1x8x4xf32> to vector<8x4xf32>
    %cst_87 = arith.constant dense<0.000000e+00> : vector<8x256xf32>
    %114 = tpu.matmul %113, %111, %cst_87 {dimension_numbers = #tpu.dot_dimension_numbers<[1], [1], [0], [0], [0, 0, 1, 0], [], []>} : vector<8x4xf32>, vector<256x4xf32>, vector<8x256xf32> -> vector<8x256xf32>
    %115 = arith.addf %105, %114 : vector<8x256xf32>
    %c1_i32_88 = arith.constant 1 : i32
    %116 = arith.addi %0, %c1_i32_88 : i32
    %c0_i32_89 = arith.constant 0 : i32
    %117 = arith.addi %116, %c0_i32_89 : i32
    %c0_90 = arith.constant 0 : index
    %118 = arith.index_cast %117 : i32 to index
    %c1_91 = arith.constant 1 : index
    %c0_92 = arith.constant 0 : index
    %119 = vector.load %arg2[%c0_90, %118, %c1_91, %c0_92] : memref<1x18x18x4xf32, #tpu.memory_space<vmem>>, vector<1x16x16x4xf32>
    %120 = vector.shape_cast %119 : vector<1x16x16x4xf32> to vector<16x16x4xf32>
    %121 = vector.shape_cast %120 : vector<16x16x4xf32> to vector<256x4xf32>
    %c9 = arith.constant 9 : index
    %c0_93 = arith.constant 0 : index
    %c0_94 = arith.constant 0 : index
    %122 = vector.load %arg3[%c9, %c0_93, %c0_94] : memref<16x8x4xf32, #tpu.memory_space<vmem>>, vector<1x8x4xf32>
    %123 = vector.shape_cast %122 : vector<1x8x4xf32> to vector<8x4xf32>
    %cst_95 = arith.constant dense<0.000000e+00> : vector<8x256xf32>
    %124 = tpu.matmul %123, %121, %cst_95 {dimension_numbers = #tpu.dot_dimension_numbers<[1], [1], [0], [0], [0, 0, 1, 0], [], []>} : vector<8x4xf32>, vector<256x4xf32>, vector<8x256xf32> -> vector<8x256xf32>
    %125 = arith.addf %115, %124 : vector<8x256xf32>
    %c1_i32_96 = arith.constant 1 : i32
    %126 = arith.addi %0, %c1_i32_96 : i32
    %c1_i32_97 = arith.constant 1 : i32
    %127 = arith.addi %126, %c1_i32_97 : i32
    %c0_98 = arith.constant 0 : index
    %128 = arith.index_cast %127 : i32 to index
    %c0_99 = arith.constant 0 : index
    %c0_100 = arith.constant 0 : index
    %129 = vector.load %arg2[%c0_98, %128, %c0_99, %c0_100] : memref<1x18x18x4xf32, #tpu.memory_space<vmem>>, vector<1x16x16x4xf32>
    %130 = vector.shape_cast %129 : vector<1x16x16x4xf32> to vector<16x16x4xf32>
    %131 = vector.shape_cast %130 : vector<16x16x4xf32> to vector<256x4xf32>
    %c10 = arith.constant 10 : index
    %c0_101 = arith.constant 0 : index
    %c0_102 = arith.constant 0 : index
    %132 = vector.load %arg3[%c10, %c0_101, %c0_102] : memref<16x8x4xf32, #tpu.memory_space<vmem>>, vector<1x8x4xf32>
    %133 = vector.shape_cast %132 : vector<1x8x4xf32> to vector<8x4xf32>
    %cst_103 = arith.constant dense<0.000000e+00> : vector<8x256xf32>
    %134 = tpu.matmul %133, %131, %cst_103 {dimension_numbers = #tpu.dot_dimension_numbers<[1], [1], [0], [0], [0, 0, 1, 0], [], []>} : vector<8x4xf32>, vector<256x4xf32>, vector<8x256xf32> -> vector<8x256xf32>
    %135 = arith.addf %125, %134 : vector<8x256xf32>
    %c1_i32_104 = arith.constant 1 : i32
    %136 = arith.addi %0, %c1_i32_104 : i32
    %c1_i32_105 = arith.constant 1 : i32
    %137 = arith.addi %136, %c1_i32_105 : i32
    %c0_106 = arith.constant 0 : index
    %138 = arith.index_cast %137 : i32 to index
    %c1_107 = arith.constant 1 : index
    %c0_108 = arith.constant 0 : index
    %139 = vector.load %arg2[%c0_106, %138, %c1_107, %c0_108] : memref<1x18x18x4xf32, #tpu.memory_space<vmem>>, vector<1x16x16x4xf32>
    %140 = vector.shape_cast %139 : vector<1x16x16x4xf32> to vector<16x16x4xf32>
    %141 = vector.shape_cast %140 : vector<16x16x4xf32> to vector<256x4xf32>
    %c11 = arith.constant 11 : index
    %c0_109 = arith.constant 0 : index
    %c0_110 = arith.constant 0 : index
    %142 = vector.load %arg3[%c11, %c0_109, %c0_110] : memref<16x8x4xf32, #tpu.memory_space<vmem>>, vector<1x8x4xf32>
    %143 = vector.shape_cast %142 : vector<1x8x4xf32> to vector<8x4xf32>
    %cst_111 = arith.constant dense<0.000000e+00> : vector<8x256xf32>
    %144 = tpu.matmul %143, %141, %cst_111 {dimension_numbers = #tpu.dot_dimension_numbers<[1], [1], [0], [0], [0, 0, 1, 0], [], []>} : vector<8x4xf32>, vector<256x4xf32>, vector<8x256xf32> -> vector<8x256xf32>
    %145 = arith.addf %135, %144 : vector<8x256xf32>
    %c0_112 = arith.constant 0 : index
    %c0_113 = arith.constant 0 : index
    %146 = vector.load %arg4[%c0_112, %c0_113] : memref<8x1xf32, #tpu.memory_space<vmem>>, vector<8x1xf32>
    %147 = vector.broadcast %146 : vector<8x1xf32> to vector<8x256xf32>
    %148 = arith.mulf %145, %147 : vector<8x256xf32>
    %c0_114 = arith.constant 0 : index
    %c0_115 = arith.constant 0 : index
    %149 = vector.load %arg5[%c0_114, %c0_115] : memref<8x1xf32, #tpu.memory_space<vmem>>, vector<8x1xf32>
    %150 = vector.broadcast %149 : vector<8x1xf32> to vector<8x256xf32>
    %151 = arith.addf %148, %150 : vector<8x256xf32>
    %cst_116 = arith.constant 0.000000e+00 : f32
    %152 = vector.broadcast %cst_116 : f32 to vector<8x256xf32>
    %153 = arith.maximumf %151, %152 : vector<8x256xf32>
    %c0_117 = arith.constant 0 : index
    %c0_118 = arith.constant 0 : index
    %c0_119 = arith.constant 0 : index
    %154 = vector.load %arg8[%c0_117, %c0_118, %c0_119] : memref<1x8x256xf32, #tpu.memory_space<vmem>>, vector<1x8x256xf32>
    %155 = vector.shape_cast %154 : vector<1x8x256xf32> to vector<8x256xf32>
    %156 = vector.shape_cast %153 : vector<8x256xf32> to vector<1x8x256xf32>
    tpu.vector_store %arg8[%c0_117, %c0_118, %c0_119], %156 {strides = array<i32>} : memref<1x8x256xf32, #tpu.memory_space<vmem>>, vector<1x8x256xf32>,
    %cst_120 = arith.constant 0.000000e+00 : f32
    %157 = vector.broadcast %cst_120 : f32 to vector<8x256xf32>
    %c1_i32_121 = arith.constant 1 : i32
    %158 = arith.addi %0, %c1_i32_121 : i32
    %c0_i32_122 = arith.constant 0 : i32
    %159 = arith.addi %158, %c0_i32_122 : i32
    %c0_123 = arith.constant 0 : index
    %160 = arith.index_cast %159 : i32 to index
    %c1_124 = arith.constant 1 : index
    %c0_125 = arith.constant 0 : index
    %161 = vector.load %arg2[%c0_123, %160, %c1_124, %c0_125] : memref<1x18x18x4xf32, #tpu.memory_space<vmem>>, vector<1x16x16x4xf32>
    %162 = vector.shape_cast %161 : vector<1x16x16x4xf32> to vector<16x16x4xf32>
    %163 = vector.shape_cast %162 : vector<16x16x4xf32> to vector<256x4xf32>
    %c12 = arith.constant 12 : index
    %c0_126 = arith.constant 0 : index
    %c0_127 = arith.constant 0 : index
    %164 = vector.load %arg3[%c12, %c0_126, %c0_127] : memref<16x8x4xf32, #tpu.memory_space<vmem>>, vector<1x8x4xf32>
    %165 = vector.shape_cast %164 : vector<1x8x4xf32> to vector<8x4xf32>
    %cst_128 = arith.constant dense<0.000000e+00> : vector<8x256xf32>
    %166 = tpu.matmul %165, %163, %cst_128 {dimension_numbers = #tpu.dot_dimension_numbers<[1], [1], [0], [0], [0, 0, 1, 0], [], []>} : vector<8x4xf32>, vector<256x4xf32>, vector<8x256xf32> -> vector<8x256xf32>
    %167 = arith.addf %157, %166 : vector<8x256xf32>
    %c1_i32_129 = arith.constant 1 : i32
    %168 = arith.addi %0, %c1_i32_129 : i32
    %c0_i32_130 = arith.constant 0 : i32
    %169 = arith.addi %168, %c0_i32_130 : i32
    %c0_131 = arith.constant 0 : index
    %170 = arith.index_cast %169 : i32 to index
    %c2_132 = arith.constant 2 : index
    %c0_133 = arith.constant 0 : index
    %171 = vector.load %arg2[%c0_131, %170, %c2_132, %c0_133] : memref<1x18x18x4xf32, #tpu.memory_space<vmem>>, vector<1x16x16x4xf32>
    %172 = vector.shape_cast %171 : vector<1x16x16x4xf32> to vector<16x16x4xf32>
    %173 = vector.shape_cast %172 : vector<16x16x4xf32> to vector<256x4xf32>
    %c13 = arith.constant 13 : index
    %c0_134 = arith.constant 0 : index
    %c0_135 = arith.constant 0 : index
    %174 = vector.load %arg3[%c13, %c0_134, %c0_135] : memref<16x8x4xf32, #tpu.memory_space<vmem>>, vector<1x8x4xf32>
    %175 = vector.shape_cast %174 : vector<1x8x4xf32> to vector<8x4xf32>
    %cst_136 = arith.constant dense<0.000000e+00> : vector<8x256xf32>
    %176 = tpu.matmul %175, %173, %cst_136 {dimension_numbers = #tpu.dot_dimension_numbers<[1], [1], [0], [0], [0, 0, 1, 0], [], []>} : vector<8x4xf32>, vector<256x4xf32>, vector<8x256xf32> -> vector<8x256xf32>
    %177 = arith.addf %167, %176 : vector<8x256xf32>
    %c1_i32_137 = arith.constant 1 : i32
    %178 = arith.addi %0, %c1_i32_137 : i32
    %c1_i32_138 = arith.constant 1 : i32
    %179 = arith.addi %178, %c1_i32_138 : i32
    %c0_139 = arith.constant 0 : index
    %180 = arith.index_cast %179 : i32 to index
    %c1_140 = arith.constant 1 : index
    %c0_141 = arith.constant 0 : index
    %181 = vector.load %arg2[%c0_139, %180, %c1_140, %c0_141] : memref<1x18x18x4xf32, #tpu.memory_space<vmem>>, vector<1x16x16x4xf32>
    %182 = vector.shape_cast %181 : vector<1x16x16x4xf32> to vector<16x16x4xf32>
    %183 = vector.shape_cast %182 : vector<16x16x4xf32> to vector<256x4xf32>
    %c14 = arith.constant 14 : index
    %c0_142 = arith.constant 0 : index
    %c0_143 = arith.constant 0 : index
    %184 = vector.load %arg3[%c14, %c0_142, %c0_143] : memref<16x8x4xf32, #tpu.memory_space<vmem>>, vector<1x8x4xf32>
    %185 = vector.shape_cast %184 : vector<1x8x4xf32> to vector<8x4xf32>
    %cst_144 = arith.constant dense<0.000000e+00> : vector<8x256xf32>
    %186 = tpu.matmul %185, %183, %cst_144 {dimension_numbers = #tpu.dot_dimension_numbers<[1], [1], [0], [0], [0, 0, 1, 0], [], []>} : vector<8x4xf32>, vector<256x4xf32>, vector<8x256xf32> -> vector<8x256xf32>
    %187 = arith.addf %177, %186 : vector<8x256xf32>
    %c1_i32_145 = arith.constant 1 : i32
    %188 = arith.addi %0, %c1_i32_145 : i32
    %c1_i32_146 = arith.constant 1 : i32
    %189 = arith.addi %188, %c1_i32_146 : i32
    %c0_147 = arith.constant 0 : index
    %190 = arith.index_cast %189 : i32 to index
    %c2_148 = arith.constant 2 : index
    %c0_149 = arith.constant 0 : index
    %191 = vector.load %arg2[%c0_147, %190, %c2_148, %c0_149] : memref<1x18x18x4xf32, #tpu.memory_space<vmem>>, vector<1x16x16x4xf32>
    %192 = vector.shape_cast %191 : vector<1x16x16x4xf32> to vector<16x16x4xf32>
    %193 = vector.shape_cast %192 : vector<16x16x4xf32> to vector<256x4xf32>
    %c15 = arith.constant 15 : index
    %c0_150 = arith.constant 0 : index
    %c0_151 = arith.constant 0 : index
    %194 = vector.load %arg3[%c15, %c0_150, %c0_151] : memref<16x8x4xf32, #tpu.memory_space<vmem>>, vector<1x8x4xf32>
    %195 = vector.shape_cast %194 : vector<1x8x4xf32> to vector<8x4xf32>
    %cst_152 = arith.constant dense<0.000000e+00> : vector<8x256xf32>
    %196 = tpu.matmul %195, %193, %cst_152 {dimension_numbers = #tpu.dot_dimension_numbers<[1], [1], [0], [0], [0, 0, 1, 0], [], []>} : vector<8x4xf32>, vector<256x4xf32>, vector<8x256xf32> -> vector<8x256xf32>
    %197 = arith.addf %187, %196 : vector<8x256xf32>
    %c0_153 = arith.constant 0 : index
    %c0_154 = arith.constant 0 : index
    %198 = vector.load %arg4[%c0_153, %c0_154] : memref<8x1xf32, #tpu.memory_space<vmem>>, vector<8x1xf32>
    %199 = vector.broadcast %198 : vector<8x1xf32> to vector<8x256xf32>
    %200 = arith.mulf %197, %199 : vector<8x256xf32>
    %c0_155 = arith.constant 0 : index
    %c0_156 = arith.constant 0 : index
    %201 = vector.load %arg5[%c0_155, %c0_156] : memref<8x1xf32, #tpu.memory_space<vmem>>, vector<8x1xf32>
    %202 = vector.broadcast %201 : vector<8x1xf32> to vector<8x256xf32>
    %203 = arith.addf %200, %202 : vector<8x256xf32>
    %cst_157 = arith.constant 0.000000e+00 : f32
    %204 = vector.broadcast %cst_157 : f32 to vector<8x256xf32>
    %205 = arith.maximumf %203, %204 : vector<8x256xf32>
    %c0_158 = arith.constant 0 : index
    %c0_159 = arith.constant 0 : index
    %c0_160 = arith.constant 0 : index
    %206 = vector.load %arg9[%c0_158, %c0_159, %c0_160] : memref<1x8x256xf32, #tpu.memory_space<vmem>>, vector<1x8x256xf32>
    %207 = vector.shape_cast %206 : vector<1x8x256xf32> to vector<8x256xf32>
    %208 = vector.shape_cast %205 : vector<8x256xf32> to vector<1x8x256xf32>
    tpu.vector_store %arg9[%c0_158, %c0_159, %c0_160], %208 {strides = array<i32>} : memref<1x8x256xf32, #tpu.memory_space<vmem>>, vector<1x8x256xf32>,
    return
  }
  func.func @transform_0(%arg0: i32, %arg1: i32) -> (i32, i32, i32, i32) {
    %c0_i32 = arith.constant 0 : i32
    %c0_i32_0 = arith.constant 0 : i32
    %c0_i32_1 = arith.constant 0 : i32
    %c0_i32_2 = arith.constant 0 : i32
    return %arg0, %c0_i32, %c0_i32_0, %c0_i32_1 : i32, i32, i32, i32
  }
  func.func @transform_1(%arg0: i32, %arg1: i32) -> (i32, i32, i32) {
    %c0_i32 = arith.constant 0 : i32
    %c0_i32_0 = arith.constant 0 : i32
    %c0_i32_1 = arith.constant 0 : i32
    %c0_i32_2 = arith.constant 0 : i32
    return %c0_i32, %c0_i32_0, %c0_i32_1 : i32, i32, i32
  }
  func.func @transform_2(%arg0: i32, %arg1: i32) -> (i32, i32) {
    %c0_i32 = arith.constant 0 : i32
    %c0_i32_0 = arith.constant 0 : i32
    %c0_i32_1 = arith.constant 0 : i32
    return %c0_i32, %c0_i32_0 : i32, i32
  }
  func.func @transform_3(%arg0: i32, %arg1: i32) -> (i32, i32) {
    %c0_i32 = arith.constant 0 : i32
    %c0_i32_0 = arith.constant 0 : i32
    %c0_i32_1 = arith.constant 0 : i32
    return %c0_i32, %c0_i32_0 : i32, i32
  }
  func.func @transform_4(%arg0: i32, %arg1: i32) -> (i32, i32, i32) {
    %c0_i32 = arith.constant 0 : i32
    %c0_i32_0 = arith.constant 0 : i32
    return %arg0, %c0_i32, %arg1 : i32, i32, i32
  }
  func.func @transform_5(%arg0: i32, %arg1: i32) -> (i32, i32, i32) {
    %c0_i32 = arith.constant 0 : i32
    %c0_i32_0 = arith.constant 0 : i32
    return %arg0, %c0_i32, %arg1 : i32, i32, i32
  }
  func.func @transform_6(%arg0: i32, %arg1: i32) -> (i32, i32, i32) {
    %c0_i32 = arith.constant 0 : i32
    %c0_i32_0 = arith.constant 0 : i32
    return %arg0, %c0_i32, %arg1 : i32, i32, i32
  }
  func.func @transform_7(%arg0: i32, %arg1: i32) -> (i32, i32, i32) {
    %c0_i32 = arith.constant 0 : i32
    %c0_i32_0 = arith.constant 0 : i32
    return %arg0, %c0_i32, %arg1 : i32, i32, i32
  }
}

</mosaic_0001>

<llo_original>
// kernel: up_conv_forward.2
$region0: #{up_conv_forward.2}
  #allocation0 [shape = 'u32[]', space=smem, size = 0x4, offset = 0x4, fixed_abs, tag = 'smem constant byte address 0x4 - core index']
  #allocation1 [shape = 'u32[144,128]{1,0:T(1,128)}', space=vmem, size = 0x12000, scoped, tag = 'internal scratch']
  %s0 = inlined_call_operand.vmem [shape: f32[2,18,18,4], index: 0, kind: input, shape index: {}]
  %s1 = inlined_call_operand.vmem [shape: f32[16,8,4], index: 1, kind: input, shape index: {}]
  %s2 = inlined_call_operand.vmem [shape: f32[8,1], index: 2, kind: output, shape index: {0}]
  %s3 = inlined_call_operand.vmem [shape: f32[8,1], index: 3, kind: output, shape index: {1}]
  %4 = xla_tuple %s2, %s3
  %s5 = sld [smem:[#allocation0]]
  $region53: #{up_conv_forward.2} parent=0
    _
  %s7 = ssub.s32 1, %s5
  %s8 = scalar_select 0, %s7, %s5
  loop: start=0, step=1, limit=4
  $region2: #{up_conv_forward.2} parent=0 // loop_pre_header
    _
  $region3: #{up_conv_forward.2} parent=0 // loop_header
    %s10 = sphi 0, %s14
    %p11 = scmp.ge.s32.totalorder %s10, 4
    %s17 = sphi 0, %s29
    %s18 = sphi 0, %s25
    %s19 = sphi 0, %s17
    %s20 = sphi 0, %s18
    %s21 = sphi 0, %s19
    %s22 = sphi 0, %s20
    %s32 = sphi 0, %s34
    %s35 = sphi 0, %s32
    %s36 = sphi 0, %s35
    %s52 = sphi 0, %s36
    %s56 = sphi 0, %s56
    %s58 = sphi 0, %s56
    %s59 = sphi 0, %s58
    %s73 = sphi 0, %s59
    %s77 = sphi 0, %s77
    %s79 = sphi 0, %s77
    %s80 = sphi 0, %s79
    %s94 = sphi 0, %s80
    %s98 = sphi 0, %s98
    %s100 = sphi 0, %s98
    %s101 = sphi 0, %s100
    %s115 = sphi 0, %s101
  $region4: #{up_conv_forward.2} parent=0 // loop_header_branch
    %13 = sbr.rel (%p11) target = $region8
  $region5: #{up_conv_forward.2} parent=0 // loop_body
    %s15 = ssub.s32 %s10, 1
    %s16 = ssub.s32 %s10, 2
    %s23 = sadd.s32 1, %s18
    %p24 = scmp.ge.s32.totalorder %s23, 1
    %s25 = scalar_select %p24, 0, %s23
    %s26 = sadd.s32 1, %s17
    %s27 = scalar_select %p24, %s26, %s17
    %p28 = scmp.ge.s32.totalorder %s27, 2
    %s29 = scalar_select %p28, 0, %s27
    %s30 = ssub.s32 %s17, %s29
    %p31 = scmp.eq.s32.totalorder %s30, 0
    %s33 = sadd.s32 %s32, 1
    %s34 = scalar_select %p31, %s32, %s33
    %p37 = pneg %p31
    %p38 = scmp.eq.s32.totalorder %s10, 1
    %p39 = por %p37, %p38
    %p40 = scmp.ne.s32.totalorder %s32, %s35
    %p41 = scmp.eq.s32.totalorder %s10, 0
    %p42 = por %p40, %p41
    %p43 = scmp.ne.s32.totalorder %s32, %s35
    %p44 = scmp.eq.s32.totalorder %s15, 1
    %p45 = por %p43, %p44
    %p46 = scmp.ne.s32.totalorder %s35, %s36
    %p47 = scmp.eq.s32.totalorder %s15, 0
    %p48 = por %p46, %p47
    %p49 = scmp.ne.s32.totalorder %s35, %s36
    %p50 = scmp.eq.s32.totalorder %s16, 1
    %p51 = por %p49, %p50
    %p53 = scmp.ne.s32.totalorder %s36, %s52
    %p54 = scmp.eq.s32.totalorder %s16, 0
    %p55 = por %p53, %p54
    %s57 = sadd.s32 %s56, 1
    %p60 = scmp.eq.s32.totalorder %s10, 1
    %p61 = scmp.ne.s32.totalorder %s56, %s58
    %p62 = scmp.eq.s32.totalorder %s10, 0
    %p63 = por %p61, %p62
    %p64 = scmp.ne.s32.totalorder %s56, %s58
    %p65 = scmp.eq.s32.totalorder %s15, 1
    %p66 = por %p64, %p65
    %p67 = scmp.ne.s32.totalorder %s58, %s59
    %p68 = scmp.eq.s32.totalorder %s15, 0
    %p69 = por %p67, %p68
    %p70 = scmp.ne.s32.totalorder %s58, %s59
    %p71 = scmp.eq.s32.totalorder %s16, 1
    %p72 = por %p70, %p71
    %p74 = scmp.ne.s32.totalorder %s59, %s73
    %p75 = scmp.eq.s32.totalorder %s16, 0
    %p76 = por %p74, %p75
    %s78 = sadd.s32 %s77, 1
    %p81 = scmp.eq.s32.totalorder %s10, 1
    %p82 = scmp.ne.s32.totalorder %s77, %s79
    %p83 = scmp.eq.s32.totalorder %s10, 0
    %p84 = por %p82, %p83
    %p85 = scmp.ne.s32.totalorder %s77, %s79
    %p86 = scmp.eq.s32.totalorder %s15, 1
    %p87 = por %p85, %p86
    %p88 = scmp.ne.s32.totalorder %s79, %s80
    %p89 = scmp.eq.s32.totalorder %s15, 0
    %p90 = por %p88, %p89
    %p91 = scmp.ne.s32.totalorder %s79, %s80
    %p92 = scmp.eq.s32.totalorder %s16, 1
    %p93 = por %p91, %p92
    %p95 = scmp.ne.s32.totalorder %s80, %s94
    %p96 = scmp.eq.s32.totalorder %s16, 0
    %p97 = por %p95, %p96
    %s99 = sadd.s32 %s98, 1
    %p102 = scmp.eq.s32.totalorder %s10, 1
    %p103 = scmp.ne.s32.totalorder %s98, %s100
    %p104 = scmp.eq.s32.totalorder %s10, 0
    %p105 = por %p103, %p104
    %p106 = scmp.ne.s32.totalorder %s98, %s100
    %p107 = scmp.eq.s32.totalorder %s15, 1
    %p108 = por %p106, %p107
    %p109 = scmp.ne.s32.totalorder %s100, %s101
    %p110 = scmp.eq.s32.totalorder %s15, 0
    %p111 = por %p109, %p110
    %p112 = scmp.ne.s32.totalorder %s100, %s101
    %p113 = scmp.eq.s32.totalorder %s16, 1
    %p114 = por %p112, %p113
    %p116 = scmp.ne.s32.totalorder %s101, %s115
    %p117 = scmp.eq.s32.totalorder %s16, 0
    %p118 = por %p116, %p117
    %p119 = scmp.le.s32.totalorder 1, %s10
    %p120 = scmp.lt.s32.totalorder %s10, 3
    %p121 = pnand %p119, %p120
    %p122 = pneg %p121
    // Predicated region
    $region9: #{up_conv_forward.2} parent=5 // pred_check
      _
    $region10: #{up_conv_forward.2} parent=5 // pred_check_branch
      %124 = sbr.rel (%p121) target = $region12
    $region11: #{up_conv_forward.2} parent=5 // pred_region
      %s125 = ssub.s32 %s10, 1
      // Predicated region
      $region13: #{up_conv_forward.2} parent=11 // pred_check
        %p126 = pneg %p69
      $region14: #{up_conv_forward.2} parent=11 // pred_check_branch
        %128 = sbr.rel (%p126) target = $region16
      $region15: #{up_conv_forward.2} parent=11 // pred_region
        _
      $region16: #{up_conv_forward.2} parent=11 // pred_fallthru
        _
    $region12: #{up_conv_forward.2} parent=5 // pred_fallthru
      _
    %p129 = scmp.lt.s32.totalorder %s10, 2
    // Predicated region
    $region17: #{up_conv_forward.2} parent=5 // pred_check
      %p130 = pneg %p129
    $region18: #{up_conv_forward.2} parent=5 // pred_check_branch
      %132 = sbr.rel (%p130) target = $region20
    $region19: #{up_conv_forward.2} parent=5 // pred_region
      // Predicated region
      $region21: #{up_conv_forward.2} parent=19 // pred_check
        %p133 = pneg %p42
      $region22: #{up_conv_forward.2} parent=19 // pred_check_branch
        %135 = sbr.rel (%p133) target = $region24
      $region23: #{up_conv_forward.2} parent=19 // pred_region
        %p136 = scmp.lt.s32.totalorder %s17, 1
        %s137 = scalar_select %p136, %s17, 1
        %s138 = smul.addr %s137, 54
        %s139 = smul.addr %s138, 8
        %s140 = scalar_lea.vmem %s0, %s139
      $region24: #{up_conv_forward.2} parent=19 // pred_fallthru
        _
    $region20: #{up_conv_forward.2} parent=5 // pred_fallthru
      _
    %p141 = scmp.le.s32.totalorder 1, %s10
    %p142 = scmp.lt.s32.totalorder %s10, 3
    %p143 = pnand %p141, %p142
    %p144 = pneg %p143
    // Predicated region
    $region25: #{up_conv_forward.2} parent=5 // pred_check
      _
    $region26: #{up_conv_forward.2} parent=5 // pred_check_branch
      %146 = sbr.rel (%p143) target = $region28
    $region27: #{up_conv_forward.2} parent=5 // pred_region
      %s147 = ssub.s32 %s10, 1
      %p148 = scmp.lt.s32.totalorder %s19, 1
      %s149 = scalar_select %p148, %s19, 1
      %s150 = smul.addr %s149, 54
      %s151 = smul.addr %s150, 8
      %s152 = scalar_lea.vmem %s0, %s151
      %p153 = pneg %p48
      %p154 = pneg %p45
      %p155 = pneg %p69
      %p156 = pneg %p66
      %p157 = pneg %p90
      %p158 = pneg %p87
      %p159 = pneg %p111
      %p160 = pneg %p108
      %p161 = scmp.lt.s32.totalorder %s19, 1
      %s162 = scalar_select %p161, %s19, 1
      %s163 = smul.addr %s162, 54
      %s164 = smul.addr %s163, 8
      %s165 = scalar_lea.vmem %s0, %s164
      %p166 = scmp.eq.s32.totalorder %s19, 0
      %p167 = scmp.eq.s32.totalorder %s20, 0
      %p168 = pnand %p166, %p167
      %p169 = pneg %p168
      // Predicated region
      $region29: #{up_conv_forward.2} parent=27 // pred_check
        _
      $region30: #{up_conv_forward.2} parent=27 // pred_check_branch
        %171 = sbr.rel (%p168) target = $region32
      $region31: #{up_conv_forward.2} parent=27 // pred_region
        %vm172 = vcmask 7168
        %173 = vst.msk [vmem:[%s2] sm:$0xff] %vm172, 0.0
        %174 = vst.msk [vmem:[%s3] sm:$0xff] %vm172, 0.0
      $region32: #{up_conv_forward.2} parent=27 // pred_fallthru
        _
      %s175 = smul.u32 %s20, 16
      %s176 = smul.u32 %s175, 24
      %s177 = scalar_lea.vmem %s165, %s176
      %v178 = vld [vmem:[%s177] sm:$0xff]
      %v179 = vld [vmem:[%s177 + $0x8] sm:$0xff]
      %v180 = vld [vmem:[%s177 + $0x18] sm:$0xff]
      %v181 = vld [vmem:[%s177 + $0x20] sm:$0xff]
      %v182 = vld [vmem:[%s177 + $0x30] sm:$0xff]
      %v183 = vld [vmem:[%s177 + $0x38] sm:$0xff]
      %v184 = vld [vmem:[%s177 + $0x48] sm:$0xff]
      %v185 = vld [vmem:[%s177 + $0x50] sm:$0xff]
      %v186 = vld [vmem:[%s177 + $0x60] sm:$0xff]
      %v187 = vld [vmem:[%s177 + $0x68] sm:$0xff]
      %v188 = vld [vmem:[%s177 + $0x78] sm:$0xff]
      %v189 = vld [vmem:[%s177 + $0x80] sm:$0xff]
      %v190 = vld [vmem:[%s177 + $0x90] sm:$0xff]
      %v191 = vld [vmem:[%s177 + $0x98] sm:$0xff]
      %v192 = vld [vmem:[%s177 + $0xa8] sm:$0xff]
      %v193 = vld [vmem:[%s177 + $0xb0] sm:$0xff]
      %v194 = vld [vmem:[%s177 + $0xc0] sm:$0xff]
      %v195 = vld [vmem:[%s177 + $0xc8] sm:$0xff]
      %v196 = vld [vmem:[%s177 + $0xd8] sm:$0xff]
      %v197 = vld [vmem:[%s177 + $0xe0] sm:$0xff]
      %v198 = vld [vmem:[%s177 + $0xf0] sm:$0xff]
      %v199 = vld [vmem:[%s177 + $0xf8] sm:$0xff]
      %v200 = vld [vmem:[%s177 + $0x108] sm:$0xff]
      %v201 = vld [vmem:[%s177 + $0x110] sm:$0xff]
      %v202 = vld [vmem:[%s177 + $0x120] sm:$0xff]
      %v203 = vld [vmem:[%s177 + $0x128] sm:$0xff]
      %v204 = vld [vmem:[%s177 + $0x138] sm:$0xff]
      %v205 = vld [vmem:[%s177 + $0x140] sm:$0xff]
      %v206 = vld [vmem:[%s177 + $0x150] sm:$0xff]
      %v207 = vld [vmem:[%s177 + $0x158] sm:$0xff]
      %v208 = vld [vmem:[%s177 + $0x168] sm:$0xff]
      %v209 = vld [vmem:[%s177 + $0x170] sm:$0xff]
      %v210 = vld [vmem:[%s1] sm:$0xff]
      %v211 = vld [vmem:[%s177 + $0x1] sm:$0xff]
      %v212 = vld [vmem:[%s177 + $0x9] sm:$0xff]
      %v213 = vld [vmem:[%s177 + $0x19] sm:$0xff]
      %v214 = vld [vmem:[%s177 + $0x21] sm:$0xff]
      %v215 = vld [vmem:[%s177 + $0x31] sm:$0xff]
      %v216 = vld [vmem:[%s177 + $0x39] sm:$0xff]
      %v217 = vld [vmem:[%s177 + $0x49] sm:$0xff]
      %v218 = vld [vmem:[%s177 + $0x51] sm:$0xff]
      %v219 = vld [vmem:[%s177 + $0x61] sm:$0xff]
      %v220 = vld [vmem:[%s177 + $0x69] sm:$0xff]
      %v221 = vld [vmem:[%s177 + $0x79] sm:$0xff]
      %v222 = vld [vmem:[%s177 + $0x81] sm:$0xff]
      %v223 = vld [vmem:[%s177 + $0x91] sm:$0xff]
      %v224 = vld [vmem:[%s177 + $0x99] sm:$0xff]
      %v225 = vld [vmem:[%s177 + $0xa9] sm:$0xff]
      %v226 = vld [vmem:[%s177 + $0xb1] sm:$0xff]
      %v227 = vld [vmem:[%s177 + $0xc1] sm:$0xff]
      %v228 = vld [vmem:[%s177 + $0xc9] sm:$0xff]
      %v229 = vld [vmem:[%s177 + $0xd9] sm:$0xff]
      %v230 = vld [vmem:[%s177 + $0xe1] sm:$0xff]
      %v231 = vld [vmem:[%s177 + $0xf1] sm:$0xff]
      %v232 = vld [vmem:[%s177 + $0xf9] sm:$0xff]
      %v233 = vld [vmem:[%s177 + $0x109] sm:$0xff]
      %v234 = vld [vmem:[%s177 + $0x111] sm:$0xff]
      %v235 = vld [vmem:[%s177 + $0x121] sm:$0xff]
      %v236 = vld [vmem:[%s177 + $0x129] sm:$0xff]
      %v237 = vld [vmem:[%s177 + $0x139] sm:$0xff]
      %v238 = vld [vmem:[%s177 + $0x141] sm:$0xff]
      %v239 = vld [vmem:[%s177 + $0x151] sm:$0xff]
      %v240 = vld [vmem:[%s177 + $0x159] sm:$0xff]
      %v241 = vld [vmem:[%s177 + $0x169] sm:$0xff]
      %v242 = vld [vmem:[%s177 + $0x171] sm:$0xff]
      %s243 = scalar_lea.vmem %s1, 8
      %v244 = vld [vmem:[%s243] sm:$0xff]
      %vm245 = vcmask 31744
      %v247 = vsel %vm245, %v244, 0
      %v250 = vsel %vm245, %v211, 0
      %v253 = vsel %vm245, %v212, 0
      %v256 = vsel %vm245, %v213, 0
      %v259 = vsel %vm245, %v214, 0
      %v262 = vsel %vm245, %v215, 0
      %v265 = vsel %vm245, %v216, 0
      %v268 = vsel %vm245, %v217, 0
      %v271 = vsel %vm245, %v218, 0
      %v274 = vsel %vm245, %v219, 0
      %v277 = vsel %vm245, %v220, 0
      %v280 = vsel %vm245, %v221, 0
      %v283 = vsel %vm245, %v222, 0
      %v286 = vsel %vm245, %v223, 0
      %v289 = vsel %vm245, %v224, 0
      %v292 = vsel %vm245, %v225, 0
      %v295 = vsel %vm245, %v226, 0
      %v298 = vsel %vm245, %v227, 0
      %v301 = vsel %vm245, %v228, 0
      %v304 = vsel %vm245, %v229, 0
      %v307 = vsel %vm245, %v230, 0
      %v310 = vsel %vm245, %v231, 0
      %v313 = vsel %vm245, %v232, 0
      %v316 = vsel %vm245, %v233, 0
      %v319 = vsel %vm245, %v234, 0
      %v322 = vsel %vm245, %v235, 0
      %v325 = vsel %vm245, %v236, 0
      %v328 = vsel %vm245, %v237, 0
      %v331 = vsel %vm245, %v238, 0
      %v334 = vsel %vm245, %v239, 0
      %v337 = vsel %vm245, %v240, 0
      %v340 = vsel %vm245, %v241, 0
      %v343 = vsel %vm245, %v242, 0
      %345 = vmatprep.subr.mxu0 0.0
      %346 = vmatpush1.xpose.msra.mxu0 %v250
      %347 = vmatprep.subr.mxu0 0.0
      %348 = vmatpush1.xpose.msra.mxu0 %v253
      %349 = vmatprep.subr.mxu0 0.0
      %350 = vmatpush1.xpose.msra.mxu0 %v256
      %351 = vmatprep.subr.mxu0 0.0
      %352 = vmatpush1.xpose.msra.mxu0 %v259
      %353 = vmatprep.subr.mxu0 0.0
      %354 = vmatpush1.xpose.msra.mxu0 %v262
      %355 = vmatprep.subr.mxu0 0.0
      %356 = vmatpush1.xpose.msra.mxu0 %v265
      %357 = vmatprep.subr.mxu0 0.0
      %358 = vmatpush1.xpose.msra.mxu0 %v268
      %359 = vmatprep.subr.mxu0 0.0
      %360 = vmatpush1.xpose.msra.mxu0 %v271
      %361 = vmatprep.subr.mxu0 0.0
      %362 = vmatpush1.xpose.msra.mxu0 %v274
      %363 = vmatprep.subr.mxu0 0.0
      %364 = vmatpush1.xpose.msra.mxu0 %v277
      %365 = vmatprep.subr.mxu0 0.0
      %366 = vmatpush1.xpose.msra.mxu0 %v280
      %367 = vmatprep.subr.mxu0 0.0
      %368 = vmatpush1.xpose.msra.mxu0 %v283
      %369 = vmatprep.subr.mxu0 0.0
      %370 = vmatpush1.xpose.msra.mxu0 %v286
      %371 = vmatprep.subr.mxu0 0.0
      %372 = vmatpush1.xpose.msra.mxu0 %v289
      %373 = vmatprep.subr.mxu0 0.0
      %374 = vmatpush1.xpose.msra.mxu0 %v292
      %375 = vmatprep.subr.mxu0 0.0
      %376 = vmatpush1.xpose.msra.mxu0 %v295
      %377 = vmatprep.subr.mxu0 0.0
      %378 = vmatpush1.xpose.msra.mxu0 %v298
      %379 = vmatprep.subr.mxu0 0.0
      %380 = vmatpush1.xpose.msra.mxu0 %v301
      %381 = vmatprep.subr.mxu0 0.0
      %382 = vmatpush1.xpose.msra.mxu0 %v304
      %383 = vmatprep.subr.mxu0 0.0
      %384 = vmatpush1.xpose.msra.mxu0 %v307
      %385 = vmatprep.subr.mxu0 0.0
      %386 = vmatpush1.xpose.msra.mxu0 %v310
      %387 = vmatprep.subr.mxu0 0.0
      %388 = vmatpush1.xpose.msra.mxu0 %v313
      %389 = vmatprep.subr.mxu0 0.0
      %390 = vmatpush1.xpose.msra.mxu0 %v316
      %391 = vmatprep.subr.mxu0 0.0
      %392 = vmatpush1.xpose.msra.mxu0 %v319
      %393 = vmatprep.subr.mxu0 0.0
      %394 = vmatpush1.xpose.msra.mxu0 %v322
      %395 = vmatprep.subr.mxu0 0.0
      %396 = vmatpush1.xpose.msra.mxu0 %v325
      %397 = vmatprep.subr.mxu0 0.0
      %398 = vmatpush1.xpose.msra.mxu0 %v328
      %399 = vmatprep.subr.mxu0 0.0
      %400 = vmatpush1.xpose.msra.mxu0 %v331
      %401 = vmatprep.subr.mxu0 0.0
      %402 = vmatpush1.xpose.msra.mxu0 %v334
      %403 = vmatprep.subr.mxu0 0.0
      %404 = vmatpush1.xpose.msra.mxu0 %v337
      %405 = vmatprep.subr.mxu0 0.0
      %406 = vmatpush1.xpose.msra.mxu0 %v340
      %407 = vmatprep.subr.mxu0 0.0
      %408 = vmatpush1.xpose.msra.mxu0 %v343
      %409 = vmatprep.mubr.f32.mxu0 0.0
      %410 = vmatmul.mubr.f32.gmra.mrb[0].mxu0 %v247
      %v411 = vpop.f32.mrb[0].mxu0
      %v412 = vadd.f32 0.0, %v411
      %v413 = vpop.f32.mrb[0].mxu0
      %v414 = vadd.f32 0.0, %v413
      %415 = vdwg.mxu0
      %v417 = vsel %vm245, %v210, 0
      %v420 = vsel %vm245, %v178, 0
      %v423 = vsel %vm245, %v179, 0
      %v426 = vsel %vm245, %v180, 0
      %v429 = vsel %vm245, %v181, 0
      %v432 = vsel %vm245, %v182, 0
      %v435 = vsel %vm245, %v183, 0
      %v438 = vsel %vm245, %v184, 0
      %v441 = vsel %vm245, %v185, 0
      %v444 = vsel %vm245, %v186, 0
      %v447 = vsel %vm245, %v187, 0
      %v450 = vsel %vm245, %v188, 0
      %v453 = vsel %vm245, %v189, 0
      %v456 = vsel %vm245, %v190, 0
      %v459 = vsel %vm245, %v191, 0
      %v462 = vsel %vm245, %v192, 0
      %v465 = vsel %vm245, %v193, 0
      %v468 = vsel %vm245, %v194, 0
      %v471 = vsel %vm245, %v195, 0
      %v474 = vsel %vm245, %v196, 0
      %v477 = vsel %vm245, %v197, 0
      %v480 = vsel %vm245, %v198, 0
      %v483 = vsel %vm245, %v199, 0
      %v486 = vsel %vm245, %v200, 0
      %v489 = vsel %vm245, %v201, 0
      %v492 = vsel %vm245, %v202, 0
      %v495 = vsel %vm245, %v203, 0
      %v498 = vsel %vm245, %v204, 0
      %v501 = vsel %vm245, %v205, 0
      %v504 = vsel %vm245, %v206, 0
      %v507 = vsel %vm245, %v207, 0
      %v510 = vsel %vm245, %v208, 0
      %v513 = vsel %vm245, %v209, 0
      %515 = vmatprep.subr.mxu0 0.0
      %516 = vmatpush1.xpose.msra.mxu0 %v420
      %517 = vmatprep.subr.mxu0 0.0
      %518 = vmatpush1.xpose.msra.mxu0 %v423
      %519 = vmatprep.subr.mxu0 0.0
      %520 = vmatpush1.xpose.msra.mxu0 %v426
      %521 = vmatprep.subr.mxu0 0.0
      %522 = vmatpush1.xpose.msra.mxu0 %v429
      %523 = vmatprep.subr.mxu0 0.0
      %524 = vmatpush1.xpose.msra.mxu0 %v432
      %525 = vmatprep.subr.mxu0 0.0
      %526 = vmatpush1.xpose.msra.mxu0 %v435
      %527 = vmatprep.subr.mxu0 0.0
      %528 = vmatpush1.xpose.msra.mxu0 %v438
      %529 = vmatprep.subr.mxu0 0.0
      %530 = vmatpush1.xpose.msra.mxu0 %v441
      %531 = vmatprep.subr.mxu0 0.0
      %532 = vmatpush1.xpose.msra.mxu0 %v444
      %533 = vmatprep.subr.mxu0 0.0
      %534 = vmatpush1.xpose.msra.mxu0 %v447
      %535 = vmatprep.subr.mxu0 0.0
      %536 = vmatpush1.xpose.msra.mxu0 %v450
      %537 = vmatprep.subr.mxu0 0.0
      %538 = vmatpush1.xpose.msra.mxu0 %v453
      %539 = vmatprep.subr.mxu0 0.0
      %540 = vmatpush1.xpose.msra.mxu0 %v456
      %541 = vmatprep.subr.mxu0 0.0
      %542 = vmatpush1.xpose.msra.mxu0 %v459
      %543 = vmatprep.subr.mxu0 0.0
      %544 = vmatpush1.xpose.msra.mxu0 %v462
      %545 = vmatprep.subr.mxu0 0.0
      %546 = vmatpush1.xpose.msra.mxu0 %v465
      %547 = vmatprep.subr.mxu0 0.0
      %548 = vmatpush1.xpose.msra.mxu0 %v468
      %549 = vmatprep.subr.mxu0 0.0
      %550 = vmatpush1.xpose.msra.mxu0 %v471
      %551 = vmatprep.subr.mxu0 0.0
      %552 = vmatpush1.xpose.msra.mxu0 %v474
      %553 = vmatprep.subr.mxu0 0.0
      %554 = vmatpush1.xpose.msra.mxu0 %v477
      %555 = vmatprep.subr.mxu0 0.0
      %556 = vmatpush1.xpose.msra.mxu0 %v480
      %557 = vmatprep.subr.mxu0 0.0
      %558 = vmatpush1.xpose.msra.mxu0 %v483
      %559 = vmatprep.subr.mxu0 0.0
      %560 = vmatpush1.xpose.msra.mxu0 %v486
      %561 = vmatprep.subr.mxu0 0.0
      %562 = vmatpush1.xpose.msra.mxu0 %v489
      %563 = vmatprep.subr.mxu0 0.0
      %564 = vmatpush1.xpose.msra.mxu0 %v492
      %565 = vmatprep.subr.mxu0 0.0
      %566 = vmatpush1.xpose.msra.mxu0 %v495
      %567 = vmatprep.subr.mxu0 0.0
      %568 = vmatpush1.xpose.msra.mxu0 %v498
      %569 = vmatprep.subr.mxu0 0.0
      %570 = vmatpush1.xpose.msra.mxu0 %v501
      %571 = vmatprep.subr.mxu0 0.0
      %572 = vmatpush1.xpose.msra.mxu0 %v504
      %573 = vmatprep.subr.mxu0 0.0
      %574 = vmatpush1.xpose.msra.mxu0 %v507
      %575 = vmatprep.subr.mxu0 0.0
      %576 = vmatpush1.xpose.msra.mxu0 %v510
      %577 = vmatprep.subr.mxu0 0.0
      %578 = vmatpush1.xpose.msra.mxu0 %v513
      %579 = vmatprep.mubr.f32.mxu0 0.0
      %580 = vmatmul.mubr.f32.gmra.mrb[0].mxu0 %v417
      %v581 = vpop.f32.mrb[0].mxu0
      %v582 = vadd.f32 %v412, %v581
      %v583 = vpop.f32.mrb[0].mxu0
      %v584 = vadd.f32 %v414, %v583
      %585 = vdwg.mxu0
      %s586 = sadd.s32 %s175, 1
      %s587 = smul.u32 %s586, 24
      %s588 = scalar_lea.vmem %s165, %s587
      %v589 = vld [vmem:[%s588] sm:$0xff]
      %v590 = vld [vmem:[%s588 + $0x8] sm:$0xff]
      %v591 = vld [vmem:[%s588 + $0x18] sm:$0xff]
      %v592 = vld [vmem:[%s588 + $0x20] sm:$0xff]
      %v593 = vld [vmem:[%s588 + $0x30] sm:$0xff]
      %v594 = vld [vmem:[%s588 + $0x38] sm:$0xff]
      %v595 = vld [vmem:[%s588 + $0x48] sm:$0xff]
      %v596 = vld [vmem:[%s588 + $0x50] sm:$0xff]
      %v597 = vld [vmem:[%s588 + $0x60] sm:$0xff]
      %v598 = vld [vmem:[%s588 + $0x68] sm:$0xff]
      %v599 = vld [vmem:[%s588 + $0x78] sm:$0xff]
      %v600 = vld [vmem:[%s588 + $0x80] sm:$0xff]
      %v601 = vld [vmem:[%s588 + $0x90] sm:$0xff]
      %v602 = vld [vmem:[%s588 + $0x98] sm:$0xff]
      %v603 = vld [vmem:[%s588 + $0xa8] sm:$0xff]
      %v604 = vld [vmem:[%s588 + $0xb0] sm:$0xff]
      %v605 = vld [vmem:[%s588 + $0xc0] sm:$0xff]
      %v606 = vld [vmem:[%s588 + $0xc8] sm:$0xff]
      %v607 = vld [vmem:[%s588 + $0xd8] sm:$0xff]
      %v608 = vld [vmem:[%s588 + $0xe0] sm:$0xff]
      %v609 = vld [vmem:[%s588 + $0xf0] sm:$0xff]
      %v610 = vld [vmem:[%s588 + $0xf8] sm:$0xff]
      %v611 = vld [vmem:[%s588 + $0x108] sm:$0xff]
      %v612 = vld [vmem:[%s588 + $0x110] sm:$0xff]
      %v613 = vld [vmem:[%s588 + $0x120] sm:$0xff]
      %v614 = vld [vmem:[%s588 + $0x128] sm:$0xff]
      %v615 = vld [vmem:[%s588 + $0x138] sm:$0xff]
      %v616 = vld [vmem:[%s588 + $0x140] sm:$0xff]
      %v617 = vld [vmem:[%s588 + $0x150] sm:$0xff]
      %v618 = vld [vmem:[%s588 + $0x158] sm:$0xff]
      %v619 = vld [vmem:[%s588 + $0x168] sm:$0xff]
      %v620 = vld [vmem:[%s588 + $0x170] sm:$0xff]
      %s621 = scalar_lea.vmem %s1, 16
      %v622 = vld [vmem:[%s621] sm:$0xff]
      %v624 = vsel %vm245, %v622, 0
      %v627 = vsel %vm245, %v589, 0
      %v630 = vsel %vm245, %v590, 0
      %v633 = vsel %vm245, %v591, 0
      %v636 = vsel %vm245, %v592, 0
      %v639 = vsel %vm245, %v593, 0
      %v642 = vsel %vm245, %v594, 0
      %v645 = vsel %vm245, %v595, 0
      %v648 = vsel %vm245, %v596, 0
      %v651 = vsel %vm245, %v597, 0
      %v654 = vsel %vm245, %v598, 0
      %v657 = vsel %vm245, %v599, 0
      %v660 = vsel %vm245, %v600, 0
      %v663 = vsel %vm245, %v601, 0
      %v666 = vsel %vm245, %v602, 0
      %v669 = vsel %vm245, %v603, 0
      %v672 = vsel %vm245, %v604, 0
      %v675 = vsel %vm245, %v605, 0
      %v678 = vsel %vm245, %v606, 0
      %v681 = vsel %vm245, %v607, 0
      %v684 = vsel %vm245, %v608, 0
      %v687 = vsel %vm245, %v609, 0
      %v690 = vsel %vm245, %v610, 0
      %v693 = vsel %vm245, %v611, 0
      %v696 = vsel %vm245, %v612, 0
      %v699 = vsel %vm245, %v613, 0
      %v702 = vsel %vm245, %v614, 0
      %v705 = vsel %vm245, %v615, 0
      %v708 = vsel %vm245, %v616, 0
      %v711 = vsel %vm245, %v617, 0
      %v714 = vsel %vm245, %v618, 0
      %v717 = vsel %vm245, %v619, 0
      %v720 = vsel %vm245, %v620, 0
      %722 = vmatprep.subr.mxu0 0.0
      %723 = vmatpush1.xpose.msra.mxu0 %v627
      %724 = vmatprep.subr.mxu0 0.0
      %725 = vmatpush1.xpose.msra.mxu0 %v630
      %726 = vmatprep.subr.mxu0 0.0
      %727 = vmatpush1.xpose.msra.mxu0 %v633
      %728 = vmatprep.subr.mxu0 0.0
      %729 = vmatpush1.xpose.msra.mxu0 %v636
      %730 = vmatprep.subr.mxu0 0.0
      %731 = vmatpush1.xpose.msra.mxu0 %v639
      %732 = vmatprep.subr.mxu0 0.0
      %733 = vmatpush1.xpose.msra.mxu0 %v642
      %734 = vmatprep.subr.mxu0 0.0
      %735 = vmatpush1.xpose.msra.mxu0 %v645
      %736 = vmatprep.subr.mxu0 0.0
      %737 = vmatpush1.xpose.msra.mxu0 %v648
      %738 = vmatprep.subr.mxu0 0.0
      %739 = vmatpush1.xpose.msra.mxu0 %v651
      %740 = vmatprep.subr.mxu0 0.0
      %741 = vmatpush1.xpose.msra.mxu0 %v654
      %742 = vmatprep.subr.mxu0 0.0
      %743 = vmatpush1.xpose.msra.mxu0 %v657
      %744 = vmatprep.subr.mxu0 0.0
      %745 = vmatpush1.xpose.msra.mxu0 %v660
      %746 = vmatprep.subr.mxu0 0.0
      %747 = vmatpush1.xpose.msra.mxu0 %v663
      %748 = vmatprep.subr.mxu0 0.0
      %749 = vmatpush1.xpose.msra.mxu0 %v666
      %750 = vmatprep.subr.mxu0 0.0
      %751 = vmatpush1.xpose.msra.mxu0 %v669
      %752 = vmatprep.subr.mxu0 0.0
      %753 = vmatpush1.xpose.msra.mxu0 %v672
      %754 = vmatprep.subr.mxu0 0.0
      %755 = vmatpush1.xpose.msra.mxu0 %v675
      %756 = vmatprep.subr.mxu0 0.0
      %757 = vmatpush1.xpose.msra.mxu0 %v678
      %758 = vmatprep.subr.mxu0 0.0
      %759 = vmatpush1.xpose.msra.mxu0 %v681
      %760 = vmatprep.subr.mxu0 0.0
      %761 = vmatpush1.xpose.msra.mxu0 %v684
      %762 = vmatprep.subr.mxu0 0.0
      %763 = vmatpush1.xpose.msra.mxu0 %v687
      %764 = vmatprep.subr.mxu0 0.0
      %765 = vmatpush1.xpose.msra.mxu0 %v690
      %766 = vmatprep.subr.mxu0 0.0
      %767 = vmatpush1.xpose.msra.mxu0 %v693
      %768 = vmatprep.subr.mxu0 0.0
      %769 = vmatpush1.xpose.msra.mxu0 %v696
      %770 = vmatprep.subr.mxu0 0.0
      %771 = vmatpush1.xpose.msra.mxu0 %v699
      %772 = vmatprep.subr.mxu0 0.0
      %773 = vmatpush1.xpose.msra.mxu0 %v702
      %774 = vmatprep.subr.mxu0 0.0
      %775 = vmatpush1.xpose.msra.mxu0 %v705
      %776 = vmatprep.subr.mxu0 0.0
      %777 = vmatpush1.xpose.msra.mxu0 %v708
      %778 = vmatprep.subr.mxu0 0.0
      %779 = vmatpush1.xpose.msra.mxu0 %v711
      %780 = vmatprep.subr.mxu0 0.0
      %781 = vmatpush1.xpose.msra.mxu0 %v714
      %782 = vmatprep.subr.mxu0 0.0
      %783 = vmatpush1.xpose.msra.mxu0 %v717
      %784 = vmatprep.subr.mxu0 0.0
      %785 = vmatpush1.xpose.msra.mxu0 %v720
      %786 = vmatprep.mubr.f32.mxu0 0.0
      %787 = vmatmul.mubr.f32.gmra.mrb[0].mxu0 %v624
      %v788 = vpop.f32.mrb[0].mxu0
      %v789 = vadd.f32 0.0, %v788
      %v790 = vpop.f32.mrb[0].mxu0
      %v791 = vadd.f32 0.0, %v790
      %792 = vdwg.mxu0
      %v793 = vadd.f32 %v582, %v789
      %v794 = vadd.f32 %v584, %v791
      %v795 = vld [vmem:[%s588 + $0x1] sm:$0xff]
      %v796 = vld [vmem:[%s588 + $0x9] sm:$0xff]
      %v797 = vld [vmem:[%s588 + $0x19] sm:$0xff]
      %v798 = vld [vmem:[%s588 + $0x21] sm:$0xff]
      %v799 = vld [vmem:[%s588 + $0x31] sm:$0xff]
      %v800 = vld [vmem:[%s588 + $0x39] sm:$0xff]
      %v801 = vld [vmem:[%s588 + $0x49] sm:$0xff]
      %v802 = vld [vmem:[%s588 + $0x51] sm:$0xff]
      %v803 = vld [vmem:[%s588 + $0x61] sm:$0xff]
      %v804 = vld [vmem:[%s588 + $0x69] sm:$0xff]
      %v805 = vld [vmem:[%s588 + $0x79] sm:$0xff]
      %v806 = vld [vmem:[%s588 + $0x81] sm:$0xff]
      %v807 = vld [vmem:[%s588 + $0x91] sm:$0xff]
      %v808 = vld [vmem:[%s588 + $0x99] sm:$0xff]
      %v809 = vld [vmem:[%s588 + $0xa9] sm:$0xff]
      %v810 = vld [vmem:[%s588 + $0xb1] sm:$0xff]
      %v811 = vld [vmem:[%s588 + $0xc1] sm:$0xff]
      %v812 = vld [vmem:[%s588 + $0xc9] sm:$0xff]
      %v813 = vld [vmem:[%s588 + $0xd9] sm:$0xff]
      %v814 = vld [vmem:[%s588 + $0xe1] sm:$0xff]
      %v815 = vld [vmem:[%s588 + $0xf1] sm:$0xff]
      %v816 = vld [vmem:[%s588 + $0xf9] sm:$0xff]
      %v817 = vld [vmem:[%s588 + $0x109] sm:$0xff]
      %v818 = vld [vmem:[%s588 + $0x111] sm:$0xff]
      %v819 = vld [vmem:[%s588 + $0x121] sm:$0xff]
      %v820 = vld [vmem:[%s588 + $0x129] sm:$0xff]
      %v821 = vld [vmem:[%s588 + $0x139] sm:$0xff]
      %v822 = vld [vmem:[%s588 + $0x141] sm:$0xff]
      %v823 = vld [vmem:[%s588 + $0x151] sm:$0xff]
      %v824 = vld [vmem:[%s588 + $0x159] sm:$0xff]
      %v825 = vld [vmem:[%s588 + $0x169] sm:$0xff]
      %v826 = vld [vmem:[%s588 + $0x171] sm:$0xff]
      %s827 = scalar_lea.vmem %s1, 24
      %v828 = vld [vmem:[%s827] sm:$0xff]
      %v830 = vsel %vm245, %v828, 0
      %v833 = vsel %vm245, %v795, 0
      %v836 = vsel %vm245, %v796, 0
      %v839 = vsel %vm245, %v797, 0
      %v842 = vsel %vm245, %v798, 0
      %v845 = vsel %vm245, %v799, 0
      %v848 = vsel %vm245, %v800, 0
      %v851 = vsel %vm245, %v801, 0
      %v854 = vsel %vm245, %v802, 0
      %v857 = vsel %vm245, %v803, 0
      %v860 = vsel %vm245, %v804, 0
      %v863 = vsel %vm245, %v805, 0
      %v866 = vsel %vm245, %v806, 0
      %v869 = vsel %vm245, %v807, 0
      %v872 = vsel %vm245, %v808, 0
      %v875 = vsel %vm245, %v809, 0
      %v878 = vsel %vm245, %v810, 0
      %v881 = vsel %vm245, %v811, 0
      %v884 = vsel %vm245, %v812, 0
      %v887 = vsel %vm245, %v813, 0
      %v890 = vsel %vm245, %v814, 0
      %v893 = vsel %vm245, %v815, 0
      %v896 = vsel %vm245, %v816, 0
      %v899 = vsel %vm245, %v817, 0
      %v902 = vsel %vm245, %v818, 0
      %v905 = vsel %vm245, %v819, 0
      %v908 = vsel %vm245, %v820, 0
      %v911 = vsel %vm245, %v821, 0
      %v914 = vsel %vm245, %v822, 0
      %v917 = vsel %vm245, %v823, 0
      %v920 = vsel %vm245, %v824, 0
      %v923 = vsel %vm245, %v825, 0
      %v926 = vsel %vm245, %v826, 0
      %928 = vmatprep.subr.mxu0 0.0
      %929 = vmatpush1.xpose.msra.mxu0 %v833
      %930 = vmatprep.subr.mxu0 0.0
      %931 = vmatpush1.xpose.msra.mxu0 %v836
      %932 = vmatprep.subr.mxu0 0.0
      %933 = vmatpush1.xpose.msra.mxu0 %v839
      %934 = vmatprep.subr.mxu0 0.0
      %935 = vmatpush1.xpose.msra.mxu0 %v842
      %936 = vmatprep.subr.mxu0 0.0
      %937 = vmatpush1.xpose.msra.mxu0 %v845
      %938 = vmatprep.subr.mxu0 0.0
      %939 = vmatpush1.xpose.msra.mxu0 %v848
      %940 = vmatprep.subr.mxu0 0.0
      %941 = vmatpush1.xpose.msra.mxu0 %v851
      %942 = vmatprep.subr.mxu0 0.0
      %943 = vmatpush1.xpose.msra.mxu0 %v854
      %944 = vmatprep.subr.mxu0 0.0
      %945 = vmatpush1.xpose.msra.mxu0 %v857
      %946 = vmatprep.subr.mxu0 0.0
      %947 = vmatpush1.xpose.msra.mxu0 %v860
      %948 = vmatprep.subr.mxu0 0.0
      %949 = vmatpush1.xpose.msra.mxu0 %v863
      %950 = vmatprep.subr.mxu0 0.0
      %951 = vmatpush1.xpose.msra.mxu0 %v866
      %952 = vmatprep.subr.mxu0 0.0
      %953 = vmatpush1.xpose.msra.mxu0 %v869
      %954 = vmatprep.subr.mxu0 0.0
      %955 = vmatpush1.xpose.msra.mxu0 %v872
      %956 = vmatprep.subr.mxu0 0.0
      %957 = vmatpush1.xpose.msra.mxu0 %v875
      %958 = vmatprep.subr.mxu0 0.0
      %959 = vmatpush1.xpose.msra.mxu0 %v878
      %960 = vmatprep.subr.mxu0 0.0
      %961 = vmatpush1.xpose.msra.mxu0 %v881
      %962 = vmatprep.subr.mxu0 0.0
      %963 = vmatpush1.xpose.msra.mxu0 %v884
      %964 = vmatprep.subr.mxu0 0.0
      %965 = vmatpush1.xpose.msra.mxu0 %v887
      %966 = vmatprep.subr.mxu0 0.0
      %967 = vmatpush1.xpose.msra.mxu0 %v890
      %968 = vmatprep.subr.mxu0 0.0
      %969 = vmatpush1.xpose.msra.mxu0 %v893
      %970 = vmatprep.subr.mxu0 0.0
      %971 = vmatpush1.xpose.msra.mxu0 %v896
      %972 = vmatprep.subr.mxu0 0.0
      %973 = vmatpush1.xpose.msra.mxu0 %v899
      %974 = vmatprep.subr.mxu0 0.0
      %975 = vmatpush1.xpose.msra.mxu0 %v902
      %976 = vmatprep.subr.mxu0 0.0
      %977 = vmatpush1.xpose.msra.mxu0 %v905
      %978 = vmatprep.subr.mxu0 0.0
      %979 = vmatpush1.xpose.msra.mxu0 %v908
      %980 = vmatprep.subr.mxu0 0.0
      %981 = vmatpush1.xpose.msra.mxu0 %v911
      %982 = vmatprep.subr.mxu0 0.0
      %983 = vmatpush1.xpose.msra.mxu0 %v914
      %984 = vmatprep.subr.mxu0 0.0
      %985 = vmatpush1.xpose.msra.mxu0 %v917
      %986 = vmatprep.subr.mxu0 0.0
      %987 = vmatpush1.xpose.msra.mxu0 %v920
      %988 = vmatprep.subr.mxu0 0.0
      %989 = vmatpush1.xpose.msra.mxu0 %v923
      %990 = vmatprep.subr.mxu0 0.0
      %991 = vmatpush1.xpose.msra.mxu0 %v926
      %992 = vmatprep.mubr.f32.mxu0 0.0
      %993 = vmatmul.mubr.f32.gmra.mrb[0].mxu0 %v830
      %v994 = vpop.f32.mrb[0].mxu0
      %v995 = vadd.f32 0.0, %v994
      %v996 = vpop.f32.mrb[0].mxu0
      %v997 = vadd.f32 0.0, %v996
      %998 = vdwg.mxu0
      %v999 = vadd.f32 %v793, %v995
      %v1000 = vadd.f32 %v794, %v997
      %v1001 = vadd.f32 %v999, %v1000
      %1002 = vadd.xlane.f32.xlu0 %v1001
      %v1003 = vpop.xlane.xlu0 %1002
      %v1004 = vadd.f32 %v1003, 0.0
      %v1005 = vmul.f32 %v999, %v999
      %v1006 = vmul.f32 %v1000, %v1000
      %v1007 = vadd.f32 %v1005, %v1006
      %1008 = vadd.xlane.f32.xlu0 %v1007
      %v1009 = vpop.xlane.xlu0 %1008
      %v1010 = vadd.f32 %v1009, 0.0
      %s1011 = scalar_lea.vmem %s1, 32
      %v1012 = vld [vmem:[%s1011] sm:$0xff]
      %v1013 = vld [vmem:[%s177 + $0x2] sm:$0xff]
      %v1014 = vld [vmem:[%s177 + $0xa] sm:$0xff]
      %v1015 = vld [vmem:[%s177 + $0x1a] sm:$0xff]
      %v1016 = vld [vmem:[%s177 + $0x22] sm:$0xff]
      %v1017 = vld [vmem:[%s177 + $0x32] sm:$0xff]
      %v1018 = vld [vmem:[%s177 + $0x3a] sm:$0xff]
      %v1019 = vld [vmem:[%s177 + $0x4a] sm:$0xff]
      %v1020 = vld [vmem:[%s177 + $0x52] sm:$0xff]
      %v1021 = vld [vmem:[%s177 + $0x62] sm:$0xff]
      %v1022 = vld [vmem:[%s177 + $0x6a] sm:$0xff]
      %v1023 = vld [vmem:[%s177 + $0x7a] sm:$0xff]
      %v1024 = vld [vmem:[%s177 + $0x82] sm:$0xff]
      %v1025 = vld [vmem:[%s177 + $0x92] sm:$0xff]
      %v1026 = vld [vmem:[%s177 + $0x9a] sm:$0xff]
      %v1027 = vld [vmem:[%s177 + $0xaa] sm:$0xff]
      %v1028 = vld [vmem:[%s177 + $0xb2] sm:$0xff]
      %v1029 = vld [vmem:[%s177 + $0xc2] sm:$0xff]
      %v1030 = vld [vmem:[%s177 + $0xca] sm:$0xff]
      %v1031 = vld [vmem:[%s177 + $0xda] sm:$0xff]
      %v1032 = vld [vmem:[%s177 + $0xe2] sm:$0xff]
      %v1033 = vld [vmem:[%s177 + $0xf2] sm:$0xff]
      %v1034 = vld [vmem:[%s177 + $0xfa] sm:$0xff]
      %v1035 = vld [vmem:[%s177 + $0x10a] sm:$0xff]
      %v1036 = vld [vmem:[%s177 + $0x112] sm:$0xff]
      %v1037 = vld [vmem:[%s177 + $0x122] sm:$0xff]
      %v1038 = vld [vmem:[%s177 + $0x12a] sm:$0xff]
      %v1039 = vld [vmem:[%s177 + $0x13a] sm:$0xff]
      %v1040 = vld [vmem:[%s177 + $0x142] sm:$0xff]
      %v1041 = vld [vmem:[%s177 + $0x152] sm:$0xff]
      %v1042 = vld [vmem:[%s177 + $0x15a] sm:$0xff]
      %v1043 = vld [vmem:[%s177 + $0x16a] sm:$0xff]
      %v1044 = vld [vmem:[%s177 + $0x172] sm:$0xff]
      %s1045 = scalar_lea.vmem %s1, 40
      %v1046 = vld [vmem:[%s1045] sm:$0xff]
      %v1048 = vsel %vm245, %v1046, 0
      %v1051 = vsel %vm245, %v1013, 0
      %v1054 = vsel %vm245, %v1014, 0
      %v1057 = vsel %vm245, %v1015, 0
      %v1060 = vsel %vm245, %v1016, 0
      %v1063 = vsel %vm245, %v1017, 0
      %v1066 = vsel %vm245, %v1018, 0
      %v1069 = vsel %vm245, %v1019, 0
      %v1072 = vsel %vm245, %v1020, 0
      %v1075 = vsel %vm245, %v1021, 0
      %v1078 = vsel %vm245, %v1022, 0
      %v1081 = vsel %vm245, %v1023, 0
      %v1084 = vsel %vm245, %v1024, 0
      %v1087 = vsel %vm245, %v1025, 0
      %v1090 = vsel %vm245, %v1026, 0
      %v1093 = vsel %vm245, %v1027, 0
      %v1096 = vsel %vm245, %v1028, 0
      %v1099 = vsel %vm245, %v1029, 0
      %v1102 = vsel %vm245, %v1030, 0
      %v1105 = vsel %vm245, %v1031, 0
      %v1108 = vsel %vm245, %v1032, 0
      %v1111 = vsel %vm245, %v1033, 0
      %v1114 = vsel %vm245, %v1034, 0
      %v1117 = vsel %vm245, %v1035, 0
      %v1120 = vsel %vm245, %v1036, 0
      %v1123 = vsel %vm245, %v1037, 0
      %v1126 = vsel %vm245, %v1038, 0
      %v1129 = vsel %vm245, %v1039, 0
      %v1132 = vsel %vm245, %v1040, 0
      %v1135 = vsel %vm245, %v1041, 0
      %v1138 = vsel %vm245, %v1042, 0
      %v1141 = vsel %vm245, %v1043, 0
      %v1144 = vsel %vm245, %v1044, 0
      %1146 = vmatprep.subr.mxu0 0.0
      %1147 = vmatpush1.xpose.msra.mxu0 %v1051
      %1148 = vmatprep.subr.mxu0 0.0
      %1149 = vmatpush1.xpose.msra.mxu0 %v1054
      %1150 = vmatprep.subr.mxu0 0.0
      %1151 = vmatpush1.xpose.msra.mxu0 %v1057
      %1152 = vmatprep.subr.mxu0 0.0
      %1153 = vmatpush1.xpose.msra.mxu0 %v1060
      %1154 = vmatprep.subr.mxu0 0.0
      %1155 = vmatpush1.xpose.msra.mxu0 %v1063
      %1156 = vmatprep.subr.mxu0 0.0
      %1157 = vmatpush1.xpose.msra.mxu0 %v1066
      %1158 = vmatprep.subr.mxu0 0.0
      %1159 = vmatpush1.xpose.msra.mxu0 %v1069
      %1160 = vmatprep.subr.mxu0 0.0
      %1161 = vmatpush1.xpose.msra.mxu0 %v1072
      %1162 = vmatprep.subr.mxu0 0.0
      %1163 = vmatpush1.xpose.msra.mxu0 %v1075
      %1164 = vmatprep.subr.mxu0 0.0
      %1165 = vmatpush1.xpose.msra.mxu0 %v1078
      %1166 = vmatprep.subr.mxu0 0.0
      %1167 = vmatpush1.xpose.msra.mxu0 %v1081
      %1168 = vmatprep.subr.mxu0 0.0
      %1169 = vmatpush1.xpose.msra.mxu0 %v1084
      %1170 = vmatprep.subr.mxu0 0.0
      %1171 = vmatpush1.xpose.msra.mxu0 %v1087
      %1172 = vmatprep.subr.mxu0 0.0
      %1173 = vmatpush1.xpose.msra.mxu0 %v1090
      %1174 = vmatprep.subr.mxu0 0.0
      %1175 = vmatpush1.xpose.msra.mxu0 %v1093
      %1176 = vmatprep.subr.mxu0 0.0
      %1177 = vmatpush1.xpose.msra.mxu0 %v1096
      %1178 = vmatprep.subr.mxu0 0.0
      %1179 = vmatpush1.xpose.msra.mxu0 %v1099
      %1180 = vmatprep.subr.mxu0 0.0
      %1181 = vmatpush1.xpose.msra.mxu0 %v1102
      %1182 = vmatprep.subr.mxu0 0.0
      %1183 = vmatpush1.xpose.msra.mxu0 %v1105
      %1184 = vmatprep.subr.mxu0 0.0
      %1185 = vmatpush1.xpose.msra.mxu0 %v1108
      %1186 = vmatprep.subr.mxu0 0.0
      %1187 = vmatpush1.xpose.msra.mxu0 %v1111
      %1188 = vmatprep.subr.mxu0 0.0
      %1189 = vmatpush1.xpose.msra.mxu0 %v1114
      %1190 = vmatprep.subr.mxu0 0.0
      %1191 = vmatpush1.xpose.msra.mxu0 %v1117
      %1192 = vmatprep.subr.mxu0 0.0
      %1193 = vmatpush1.xpose.msra.mxu0 %v1120
      %1194 = vmatprep.subr.mxu0 0.0
      %1195 = vmatpush1.xpose.msra.mxu0 %v1123
      %1196 = vmatprep.subr.mxu0 0.0
      %1197 = vmatpush1.xpose.msra.mxu0 %v1126
      %1198 = vmatprep.subr.mxu0 0.0
      %1199 = vmatpush1.xpose.msra.mxu0 %v1129
      %1200 = vmatprep.subr.mxu0 0.0
      %1201 = vmatpush1.xpose.msra.mxu0 %v1132
      %1202 = vmatprep.subr.mxu0 0.0
      %1203 = vmatpush1.xpose.msra.mxu0 %v1135
      %1204 = vmatprep.subr.mxu0 0.0
      %1205 = vmatpush1.xpose.msra.mxu0 %v1138
      %1206 = vmatprep.subr.mxu0 0.0
      %1207 = vmatpush1.xpose.msra.mxu0 %v1141
      %1208 = vmatprep.subr.mxu0 0.0
      %1209 = vmatpush1.xpose.msra.mxu0 %v1144
      %1210 = vmatprep.mubr.f32.mxu0 0.0
      %1211 = vmatmul.mubr.f32.gmra.mrb[0].mxu0 %v1048
      %v1212 = vpop.f32.mrb[0].mxu0
      %v1213 = vadd.f32 0.0, %v1212
      %v1214 = vpop.f32.mrb[0].mxu0
      %v1215 = vadd.f32 0.0, %v1214
      %1216 = vdwg.mxu0
      %v1218 = vsel %vm245, %v1012, 0
      %1220 = vmatprep.subr.mxu0 0.0
      %1221 = vmatpush1.xpose.msra.mxu0 %v250
      %1222 = vmatprep.subr.mxu0 0.0
      %1223 = vmatpush1.xpose.msra.mxu0 %v253
      %1224 = vmatprep.subr.mxu0 0.0
      %1225 = vmatpush1.xpose.msra.mxu0 %v256
      %1226 = vmatprep.subr.mxu0 0.0
      %1227 = vmatpush1.xpose.msra.mxu0 %v259
      %1228 = vmatprep.subr.mxu0 0.0
      %1229 = vmatpush1.xpose.msra.mxu0 %v262
      %1230 = vmatprep.subr.mxu0 0.0
      %1231 = vmatpush1.xpose.msra.mxu0 %v265
      %1232 = vmatprep.subr.mxu0 0.0
      %1233 = vmatpush1.xpose.msra.mxu0 %v268
      %1234 = vmatprep.subr.mxu0 0.0
      %1235 = vmatpush1.xpose.msra.mxu0 %v271
      %1236 = vmatprep.subr.mxu0 0.0
      %1237 = vmatpush1.xpose.msra.mxu0 %v274
      %1238 = vmatprep.subr.mxu0 0.0
      %1239 = vmatpush1.xpose.msra.mxu0 %v277
      %1240 = vmatprep.subr.mxu0 0.0
      %1241 = vmatpush1.xpose.msra.mxu0 %v280
      %1242 = vmatprep.subr.mxu0 0.0
      %1243 = vmatpush1.xpose.msra.mxu0 %v283
      %1244 = vmatprep.subr.mxu0 0.0
      %1245 = vmatpush1.xpose.msra.mxu0 %v286
      %1246 = vmatprep.subr.mxu0 0.0
      %1247 = vmatpush1.xpose.msra.mxu0 %v289
      %1248 = vmatprep.subr.mxu0 0.0
      %1249 = vmatpush1.xpose.msra.mxu0 %v292
      %1250 = vmatprep.subr.mxu0 0.0
      %1251 = vmatpush1.xpose.msra.mxu0 %v295
      %1252 = vmatprep.subr.mxu0 0.0
      %1253 = vmatpush1.xpose.msra.mxu0 %v298
      %1254 = vmatprep.subr.mxu0 0.0
      %1255 = vmatpush1.xpose.msra.mxu0 %v301
      %1256 = vmatprep.subr.mxu0 0.0
      %1257 = vmatpush1.xpose.msra.mxu0 %v304
      %1258 = vmatprep.subr.mxu0 0.0
      %1259 = vmatpush1.xpose.msra.mxu0 %v307
      %1260 = vmatprep.subr.mxu0 0.0
      %1261 = vmatpush1.xpose.msra.mxu0 %v310
      %1262 = vmatprep.subr.mxu0 0.0
      %1263 = vmatpush1.xpose.msra.mxu0 %v313
      %1264 = vmatprep.subr.mxu0 0.0
      %1265 = vmatpush1.xpose.msra.mxu0 %v316
      %1266 = vmatprep.subr.mxu0 0.0
      %1267 = vmatpush1.xpose.msra.mxu0 %v319
      %1268 = vmatprep.subr.mxu0 0.0
      %1269 = vmatpush1.xpose.msra.mxu0 %v322
      %1270 = vmatprep.subr.mxu0 0.0
      %1271 = vmatpush1.xpose.msra.mxu0 %v325
      %1272 = vmatprep.subr.mxu0 0.0
      %1273 = vmatpush1.xpose.msra.mxu0 %v328
      %1274 = vmatprep.subr.mxu0 0.0
      %1275 = vmatpush1.xpose.msra.mxu0 %v331
      %1276 = vmatprep.subr.mxu0 0.0
      %1277 = vmatpush1.xpose.msra.mxu0 %v334
      %1278 = vmatprep.subr.mxu0 0.0
      %1279 = vmatpush1.xpose.msra.mxu0 %v337
      %1280 = vmatprep.subr.mxu0 0.0
      %1281 = vmatpush1.xpose.msra.mxu0 %v340
      %1282 = vmatprep.subr.mxu0 0.0
      %1283 = vmatpush1.xpose.msra.mxu0 %v343
      %1284 = vmatprep.mubr.f32.mxu0 0.0
      %1285 = vmatmul.mubr.f32.gmra.mrb[0].mxu0 %v1218
      %v1286 = vpop.f32.mrb[0].mxu0
      %v1287 = vadd.f32 %v1213, %v1286
      %v1288 = vpop.f32.mrb[0].mxu0
      %v1289 = vadd.f32 %v1215, %v1288
      %1290 = vdwg.mxu0
      %s1291 = scalar_lea.vmem %s1, 48
      %v1292 = vld [vmem:[%s1291] sm:$0xff]
      %v1294 = vsel %vm245, %v1292, 0
      %1296 = vmatprep.subr.mxu0 0.0
      %1297 = vmatpush1.xpose.msra.mxu0 %v833
      %1298 = vmatprep.subr.mxu0 0.0
      %1299 = vmatpush1.xpose.msra.mxu0 %v836
      %1300 = vmatprep.subr.mxu0 0.0
      %1301 = vmatpush1.xpose.msra.mxu0 %v839
      %1302 = vmatprep.subr.mxu0 0.0
      %1303 = vmatpush1.xpose.msra.mxu0 %v842
      %1304 = vmatprep.subr.mxu0 0.0
      %1305 = vmatpush1.xpose.msra.mxu0 %v845
      %1306 = vmatprep.subr.mxu0 0.0
      %1307 = vmatpush1.xpose.msra.mxu0 %v848
      %1308 = vmatprep.subr.mxu0 0.0
      %1309 = vmatpush1.xpose.msra.mxu0 %v851
      %1310 = vmatprep.subr.mxu0 0.0
      %1311 = vmatpush1.xpose.msra.mxu0 %v854
      %1312 = vmatprep.subr.mxu0 0.0
      %1313 = vmatpush1.xpose.msra.mxu0 %v857
      %1314 = vmatprep.subr.mxu0 0.0
      %1315 = vmatpush1.xpose.msra.mxu0 %v860
      %1316 = vmatprep.subr.mxu0 0.0
      %1317 = vmatpush1.xpose.msra.mxu0 %v863
      %1318 = vmatprep.subr.mxu0 0.0
      %1319 = vmatpush1.xpose.msra.mxu0 %v866
      %1320 = vmatprep.subr.mxu0 0.0
      %1321 = vmatpush1.xpose.msra.mxu0 %v869
      %1322 = vmatprep.subr.mxu0 0.0
      %1323 = vmatpush1.xpose.msra.mxu0 %v872
      %1324 = vmatprep.subr.mxu0 0.0
      %1325 = vmatpush1.xpose.msra.mxu0 %v875
      %1326 = vmatprep.subr.mxu0 0.0
      %1327 = vmatpush1.xpose.msra.mxu0 %v878
      %1328 = vmatprep.subr.mxu0 0.0
      %1329 = vmatpush1.xpose.msra.mxu0 %v881
      %1330 = vmatprep.subr.mxu0 0.0
      %1331 = vmatpush1.xpose.msra.mxu0 %v884
      %1332 = vmatprep.subr.mxu0 0.0
      %1333 = vmatpush1.xpose.msra.mxu0 %v887
      %1334 = vmatprep.subr.mxu0 0.0
      %1335 = vmatpush1.xpose.msra.mxu0 %v890
      %1336 = vmatprep.subr.mxu0 0.0
      %1337 = vmatpush1.xpose.msra.mxu0 %v893
      %1338 = vmatprep.subr.mxu0 0.0
      %1339 = vmatpush1.xpose.msra.mxu0 %v896
      %1340 = vmatprep.subr.mxu0 0.0
      %1341 = vmatpush1.xpose.msra.mxu0 %v899
      %1342 = vmatprep.subr.mxu0 0.0
      %1343 = vmatpush1.xpose.msra.mxu0 %v902
      %1344 = vmatprep.subr.mxu0 0.0
      %1345 = vmatpush1.xpose.msra.mxu0 %v905
      %1346 = vmatprep.subr.mxu0 0.0
      %1347 = vmatpush1.xpose.msra.mxu0 %v908
      %1348 = vmatprep.subr.mxu0 0.0
      %1349 = vmatpush1.xpose.msra.mxu0 %v911
      %1350 = vmatprep.subr.mxu0 0.0
      %1351 = vmatpush1.xpose.msra.mxu0 %v914
      %1352 = vmatprep.subr.mxu0 0.0
      %1353 = vmatpush1.xpose.msra.mxu0 %v917
      %1354 = vmatprep.subr.mxu0 0.0
      %1355 = vmatpush1.xpose.msra.mxu0 %v920
      %1356 = vmatprep.subr.mxu0 0.0
      %1357 = vmatpush1.xpose.msra.mxu0 %v923
      %1358 = vmatprep.subr.mxu0 0.0
      %1359 = vmatpush1.xpose.msra.mxu0 %v926
      %1360 = vmatprep.mubr.f32.mxu0 0.0
      %1361 = vmatmul.mubr.f32.gmra.mrb[0].mxu0 %v1294
      %v1362 = vpop.f32.mrb[0].mxu0
      %v1363 = vadd.f32 0.0, %v1362
      %v1364 = vpop.f32.mrb[0].mxu0
      %v1365 = vadd.f32 0.0, %v1364
      %1366 = vdwg.mxu0
      %v1367 = vadd.f32 %v1287, %v1363
      %v1368 = vadd.f32 %v1289, %v1365
      %v1369 = vld [vmem:[%s588 + $0x2] sm:$0xff]
      %v1370 = vld [vmem:[%s588 + $0xa] sm:$0xff]
      %v1371 = vld [vmem:[%s588 + $0x1a] sm:$0xff]
      %v1372 = vld [vmem:[%s588 + $0x22] sm:$0xff]
      %v1373 = vld [vmem:[%s588 + $0x32] sm:$0xff]
      %v1374 = vld [vmem:[%s588 + $0x3a] sm:$0xff]
      %v1375 = vld [vmem:[%s588 + $0x4a] sm:$0xff]
      %v1376 = vld [vmem:[%s588 + $0x52] sm:$0xff]
      %v1377 = vld [vmem:[%s588 + $0x62] sm:$0xff]
      %v1378 = vld [vmem:[%s588 + $0x6a] sm:$0xff]
      %v1379 = vld [vmem:[%s588 + $0x7a] sm:$0xff]
      %v1380 = vld [vmem:[%s588 + $0x82] sm:$0xff]
      %v1381 = vld [vmem:[%s588 + $0x92] sm:$0xff]
      %v1382 = vld [vmem:[%s588 + $0x9a] sm:$0xff]
      %v1383 = vld [vmem:[%s588 + $0xaa] sm:$0xff]
      %v1384 = vld [vmem:[%s588 + $0xb2] sm:$0xff]
      %v1385 = vld [vmem:[%s588 + $0xc2] sm:$0xff]
      %v1386 = vld [vmem:[%s588 + $0xca] sm:$0xff]
      %v1387 = vld [vmem:[%s588 + $0xda] sm:$0xff]
      %v1388 = vld [vmem:[%s588 + $0xe2] sm:$0xff]
      %v1389 = vld [vmem:[%s588 + $0xf2] sm:$0xff]
      %v1390 = vld [vmem:[%s588 + $0xfa] sm:$0xff]
      %v1391 = vld [vmem:[%s588 + $0x10a] sm:$0xff]
      %v1392 = vld [vmem:[%s588 + $0x112] sm:$0xff]
      %v1393 = vld [vmem:[%s588 + $0x122] sm:$0xff]
      %v1394 = vld [vmem:[%s588 + $0x12a] sm:$0xff]
      %v1395 = vld [vmem:[%s588 + $0x13a] sm:$0xff]
      %v1396 = vld [vmem:[%s588 + $0x142] sm:$0xff]
      %v1397 = vld [vmem:[%s588 + $0x152] sm:$0xff]
      %v1398 = vld [vmem:[%s588 + $0x15a] sm:$0xff]
      %v1399 = vld [vmem:[%s588 + $0x16a] sm:$0xff]
      %v1400 = vld [vmem:[%s588 + $0x172] sm:$0xff]
      %s1401 = scalar_lea.vmem %s1, 56
      %v1402 = vld [vmem:[%s1401] sm:$0xff]
      %v1404 = vsel %vm245, %v1402, 0
      %v1407 = vsel %vm245, %v1369, 0
      %v1410 = vsel %vm245, %v1370, 0
      %v1413 = vsel %vm245, %v1371, 0
      %v1416 = vsel %vm245, %v1372, 0
      %v1419 = vsel %vm245, %v1373, 0
      %v1422 = vsel %vm245, %v1374, 0
      %v1425 = vsel %vm245, %v1375, 0
      %v1428 = vsel %vm245, %v1376, 0
      %v1431 = vsel %vm245, %v1377, 0
      %v1434 = vsel %vm245, %v1378, 0
      %v1437 = vsel %vm245, %v1379, 0
      %v1440 = vsel %vm245, %v1380, 0
      %v1443 = vsel %vm245, %v1381, 0
      %v1446 = vsel %vm245, %v1382, 0
      %v1449 = vsel %vm245, %v1383, 0
      %v1452 = vsel %vm245, %v1384, 0
      %v1455 = vsel %vm245, %v1385, 0
      %v1458 = vsel %vm245, %v1386, 0
      %v1461 = vsel %vm245, %v1387, 0
      %v1464 = vsel %vm245, %v1388, 0
      %v1467 = vsel %vm245, %v1389, 0
      %v1470 = vsel %vm245, %v1390, 0
      %v1473 = vsel %vm245, %v1391, 0
      %v1476 = vsel %vm245, %v1392, 0
      %v1479 = vsel %vm245, %v1393, 0
      %v1482 = vsel %vm245, %v1394, 0
      %v1485 = vsel %vm245, %v1395, 0
      %v1488 = vsel %vm245, %v1396, 0
      %v1491 = vsel %vm245, %v1397, 0
      %v1494 = vsel %vm245, %v1398, 0
      %v1497 = vsel %vm245, %v1399, 0
      %v1500 = vsel %vm245, %v1400, 0
      %1502 = vmatprep.subr.mxu0 0.0
      %1503 = vmatpush1.xpose.msra.mxu0 %v1407
      %1504 = vmatprep.subr.mxu0 0.0
      %1505 = vmatpush1.xpose.msra.mxu0 %v1410
      %1506 = vmatprep.subr.mxu0 0.0
      %1507 = vmatpush1.xpose.msra.mxu0 %v1413
      %1508 = vmatprep.subr.mxu0 0.0
      %1509 = vmatpush1.xpose.msra.mxu0 %v1416
      %1510 = vmatprep.subr.mxu0 0.0
      %1511 = vmatpush1.xpose.msra.mxu0 %v1419
      %1512 = vmatprep.subr.mxu0 0.0
      %1513 = vmatpush1.xpose.msra.mxu0 %v1422
      %1514 = vmatprep.subr.mxu0 0.0
      %1515 = vmatpush1.xpose.msra.mxu0 %v1425
      %1516 = vmatprep.subr.mxu0 0.0
      %1517 = vmatpush1.xpose.msra.mxu0 %v1428
      %1518 = vmatprep.subr.mxu0 0.0
      %1519 = vmatpush1.xpose.msra.mxu0 %v1431
      %1520 = vmatprep.subr.mxu0 0.0
      %1521 = vmatpush1.xpose.msra.mxu0 %v1434
      %1522 = vmatprep.subr.mxu0 0.0
      %1523 = vmatpush1.xpose.msra.mxu0 %v1437
      %1524 = vmatprep.subr.mxu0 0.0
      %1525 = vmatpush1.xpose.msra.mxu0 %v1440
      %1526 = vmatprep.subr.mxu0 0.0
      %1527 = vmatpush1.xpose.msra.mxu0 %v1443
      %1528 = vmatprep.subr.mxu0 0.0
      %1529 = vmatpush1.xpose.msra.mxu0 %v1446
      %1530 = vmatprep.subr.mxu0 0.0
      %1531 = vmatpush1.xpose.msra.mxu0 %v1449
      %1532 = vmatprep.subr.mxu0 0.0
      %1533 = vmatpush1.xpose.msra.mxu0 %v1452
      %1534 = vmatprep.subr.mxu0 0.0
      %1535 = vmatpush1.xpose.msra.mxu0 %v1455
      %1536 = vmatprep.subr.mxu0 0.0
      %1537 = vmatpush1.xpose.msra.mxu0 %v1458
      %1538 = vmatprep.subr.mxu0 0.0
      %1539 = vmatpush1.xpose.msra.mxu0 %v1461
      %1540 = vmatprep.subr.mxu0 0.0
      %1541 = vmatpush1.xpose.msra.mxu0 %v1464
      %1542 = vmatprep.subr.mxu0 0.0
      %1543 = vmatpush1.xpose.msra.mxu0 %v1467
      %1544 = vmatprep.subr.mxu0 0.0
      %1545 = vmatpush1.xpose.msra.mxu0 %v1470
      %1546 = vmatprep.subr.mxu0 0.0
      %1547 = vmatpush1.xpose.msra.mxu0 %v1473
      %1548 = vmatprep.subr.mxu0 0.0
      %1549 = vmatpush1.xpose.msra.mxu0 %v1476
      %1550 = vmatprep.subr.mxu0 0.0
      %1551 = vmatpush1.xpose.msra.mxu0 %v1479
      %1552 = vmatprep.subr.mxu0 0.0
      %1553 = vmatpush1.xpose.msra.mxu0 %v1482
      %1554 = vmatprep.subr.mxu0 0.0
      %1555 = vmatpush1.xpose.msra.mxu0 %v1485
      %1556 = vmatprep.subr.mxu0 0.0
      %1557 = vmatpush1.xpose.msra.mxu0 %v1488
      %1558 = vmatprep.subr.mxu0 0.0
      %1559 = vmatpush1.xpose.msra.mxu0 %v1491
      %1560 = vmatprep.subr.mxu0 0.0
      %1561 = vmatpush1.xpose.msra.mxu0 %v1494
      %1562 = vmatprep.subr.mxu0 0.0
      %1563 = vmatpush1.xpose.msra.mxu0 %v1497
      %1564 = vmatprep.subr.mxu0 0.0
      %1565 = vmatpush1.xpose.msra.mxu0 %v1500
      %1566 = vmatprep.mubr.f32.mxu0 0.0
      %1567 = vmatmul.mubr.f32.gmra.mrb[0].mxu0 %v1404
      %v1568 = vpop.f32.mrb[0].mxu0
      %v1569 = vadd.f32 0.0, %v1568
      %v1570 = vpop.f32.mrb[0].mxu0
      %v1571 = vadd.f32 0.0, %v1570
      %1572 = vdwg.mxu0
      %v1573 = vadd.f32 %v1367, %v1569
      %v1574 = vadd.f32 %v1368, %v1571
      %v1575 = vadd.f32 %v1573, %v1574
      %1576 = vadd.xlane.f32.xlu0 %v1575
      %v1577 = vpop.xlane.xlu0 %1576
      %v1578 = vadd.f32 %v1004, %v1577
      %v1579 = vmul.f32 %v1573, %v1573
      %v1580 = vmul.f32 %v1574, %v1574
      %v1581 = vadd.f32 %v1579, %v1580
      %1582 = vadd.xlane.f32.xlu0 %v1581
      %v1583 = vpop.xlane.xlu0 %1582
      %v1584 = vadd.f32 %v1010, %v1583
      %s1585 = scalar_lea.vmem %s1, 64
      %v1586 = vld [vmem:[%s1585] sm:$0xff]
      %s1587 = scalar_lea.vmem %s1, 72
      %v1588 = vld [vmem:[%s1587] sm:$0xff]
      %v1590 = vsel %vm245, %v1588, 0
      %1592 = vmatprep.subr.mxu0 0.0
      %1593 = vmatpush1.xpose.msra.mxu0 %v833
      %1594 = vmatprep.subr.mxu0 0.0
      %1595 = vmatpush1.xpose.msra.mxu0 %v836
      %1596 = vmatprep.subr.mxu0 0.0
      %1597 = vmatpush1.xpose.msra.mxu0 %v839
      %1598 = vmatprep.subr.mxu0 0.0
      %1599 = vmatpush1.xpose.msra.mxu0 %v842
      %1600 = vmatprep.subr.mxu0 0.0
      %1601 = vmatpush1.xpose.msra.mxu0 %v845
      %1602 = vmatprep.subr.mxu0 0.0
      %1603 = vmatpush1.xpose.msra.mxu0 %v848
      %1604 = vmatprep.subr.mxu0 0.0
      %1605 = vmatpush1.xpose.msra.mxu0 %v851
      %1606 = vmatprep.subr.mxu0 0.0
      %1607 = vmatpush1.xpose.msra.mxu0 %v854
      %1608 = vmatprep.subr.mxu0 0.0
      %1609 = vmatpush1.xpose.msra.mxu0 %v857
      %1610 = vmatprep.subr.mxu0 0.0
      %1611 = vmatpush1.xpose.msra.mxu0 %v860
      %1612 = vmatprep.subr.mxu0 0.0
      %1613 = vmatpush1.xpose.msra.mxu0 %v863
      %1614 = vmatprep.subr.mxu0 0.0
      %1615 = vmatpush1.xpose.msra.mxu0 %v866
      %1616 = vmatprep.subr.mxu0 0.0
      %1617 = vmatpush1.xpose.msra.mxu0 %v869
      %1618 = vmatprep.subr.mxu0 0.0
      %1619 = vmatpush1.xpose.msra.mxu0 %v872
      %1620 = vmatprep.subr.mxu0 0.0
      %1621 = vmatpush1.xpose.msra.mxu0 %v875
      %1622 = vmatprep.subr.mxu0 0.0
      %1623 = vmatpush1.xpose.msra.mxu0 %v878
      %1624 = vmatprep.subr.mxu0 0.0
      %1625 = vmatpush1.xpose.msra.mxu0 %v881
      %1626 = vmatprep.subr.mxu0 0.0
      %1627 = vmatpush1.xpose.msra.mxu0 %v884
      %1628 = vmatprep.subr.mxu0 0.0
      %1629 = vmatpush1.xpose.msra.mxu0 %v887
      %1630 = vmatprep.subr.mxu0 0.0
      %1631 = vmatpush1.xpose.msra.mxu0 %v890
      %1632 = vmatprep.subr.mxu0 0.0
      %1633 = vmatpush1.xpose.msra.mxu0 %v893
      %1634 = vmatprep.subr.mxu0 0.0
      %1635 = vmatpush1.xpose.msra.mxu0 %v896
      %1636 = vmatprep.subr.mxu0 0.0
      %1637 = vmatpush1.xpose.msra.mxu0 %v899
      %1638 = vmatprep.subr.mxu0 0.0
      %1639 = vmatpush1.xpose.msra.mxu0 %v902
      %1640 = vmatprep.subr.mxu0 0.0
      %1641 = vmatpush1.xpose.msra.mxu0 %v905
      %1642 = vmatprep.subr.mxu0 0.0
      %1643 = vmatpush1.xpose.msra.mxu0 %v908
      %1644 = vmatprep.subr.mxu0 0.0
      %1645 = vmatpush1.xpose.msra.mxu0 %v911
      %1646 = vmatprep.subr.mxu0 0.0
      %1647 = vmatpush1.xpose.msra.mxu0 %v914
      %1648 = vmatprep.subr.mxu0 0.0
      %1649 = vmatpush1.xpose.msra.mxu0 %v917
      %1650 = vmatprep.subr.mxu0 0.0
      %1651 = vmatpush1.xpose.msra.mxu0 %v920
      %1652 = vmatprep.subr.mxu0 0.0
      %1653 = vmatpush1.xpose.msra.mxu0 %v923
      %1654 = vmatprep.subr.mxu0 0.0
      %1655 = vmatpush1.xpose.msra.mxu0 %v926
      %1656 = vmatprep.mubr.f32.mxu0 0.0
      %1657 = vmatmul.mubr.f32.gmra.mrb[0].mxu0 %v1590
      %v1658 = vpop.f32.mrb[0].mxu0
      %v1659 = vadd.f32 0.0, %v1658
      %v1660 = vpop.f32.mrb[0].mxu0
      %v1661 = vadd.f32 0.0, %v1660
      %1662 = vdwg.mxu0
      %v1664 = vsel %vm245, %v1586, 0
      %1666 = vmatprep.subr.mxu0 0.0
      %1667 = vmatpush1.xpose.msra.mxu0 %v627
      %1668 = vmatprep.subr.mxu0 0.0
      %1669 = vmatpush1.xpose.msra.mxu0 %v630
      %1670 = vmatprep.subr.mxu0 0.0
      %1671 = vmatpush1.xpose.msra.mxu0 %v633
      %1672 = vmatprep.subr.mxu0 0.0
      %1673 = vmatpush1.xpose.msra.mxu0 %v636
      %1674 = vmatprep.subr.mxu0 0.0
      %1675 = vmatpush1.xpose.msra.mxu0 %v639
      %1676 = vmatprep.subr.mxu0 0.0
      %1677 = vmatpush1.xpose.msra.mxu0 %v642
      %1678 = vmatprep.subr.mxu0 0.0
      %1679 = vmatpush1.xpose.msra.mxu0 %v645
      %1680 = vmatprep.subr.mxu0 0.0
      %1681 = vmatpush1.xpose.msra.mxu0 %v648
      %1682 = vmatprep.subr.mxu0 0.0
      %1683 = vmatpush1.xpose.msra.mxu0 %v651
      %1684 = vmatprep.subr.mxu0 0.0
      %1685 = vmatpush1.xpose.msra.mxu0 %v654
      %1686 = vmatprep.subr.mxu0 0.0
      %1687 = vmatpush1.xpose.msra.mxu0 %v657
      %1688 = vmatprep.subr.mxu0 0.0
      %1689 = vmatpush1.xpose.msra.mxu0 %v660
      %1690 = vmatprep.subr.mxu0 0.0
      %1691 = vmatpush1.xpose.msra.mxu0 %v663
      %1692 = vmatprep.subr.mxu0 0.0
      %1693 = vmatpush1.xpose.msra.mxu0 %v666
      %1694 = vmatprep.subr.mxu0 0.0
      %1695 = vmatpush1.xpose.msra.mxu0 %v669
      %1696 = vmatprep.subr.mxu0 0.0
      %1697 = vmatpush1.xpose.msra.mxu0 %v672
      %1698 = vmatprep.subr.mxu0 0.0
      %1699 = vmatpush1.xpose.msra.mxu0 %v675
      %1700 = vmatprep.subr.mxu0 0.0
      %1701 = vmatpush1.xpose.msra.mxu0 %v678
      %1702 = vmatprep.subr.mxu0 0.0
      %1703 = vmatpush1.xpose.msra.mxu0 %v681
      %1704 = vmatprep.subr.mxu0 0.0
      %1705 = vmatpush1.xpose.msra.mxu0 %v684
      %1706 = vmatprep.subr.mxu0 0.0
      %1707 = vmatpush1.xpose.msra.mxu0 %v687
      %1708 = vmatprep.subr.mxu0 0.0
      %1709 = vmatpush1.xpose.msra.mxu0 %v690
      %1710 = vmatprep.subr.mxu0 0.0
      %1711 = vmatpush1.xpose.msra.mxu0 %v693
      %1712 = vmatprep.subr.mxu0 0.0
      %1713 = vmatpush1.xpose.msra.mxu0 %v696
      %1714 = vmatprep.subr.mxu0 0.0
      %1715 = vmatpush1.xpose.msra.mxu0 %v699
      %1716 = vmatprep.subr.mxu0 0.0
      %1717 = vmatpush1.xpose.msra.mxu0 %v702
      %1718 = vmatprep.subr.mxu0 0.0
      %1719 = vmatpush1.xpose.msra.mxu0 %v705
      %1720 = vmatprep.subr.mxu0 0.0
      %1721 = vmatpush1.xpose.msra.mxu0 %v708
      %1722 = vmatprep.subr.mxu0 0.0
      %1723 = vmatpush1.xpose.msra.mxu0 %v711
      %1724 = vmatprep.subr.mxu0 0.0
      %1725 = vmatpush1.xpose.msra.mxu0 %v714
      %1726 = vmatprep.subr.mxu0 0.0
      %1727 = vmatpush1.xpose.msra.mxu0 %v717
      %1728 = vmatprep.subr.mxu0 0.0
      %1729 = vmatpush1.xpose.msra.mxu0 %v720
      %1730 = vmatprep.mubr.f32.mxu0 0.0
      %1731 = vmatmul.mubr.f32.gmra.mrb[0].mxu0 %v1664
      %v1732 = vpop.f32.mrb[0].mxu0
      %v1733 = vadd.f32 %v1659, %v1732
      %v1734 = vpop.f32.mrb[0].mxu0
      %v1735 = vadd.f32 %v1661, %v1734
      %1736 = vdwg.mxu0
      %s1737 = sadd.s32 %s175, 2
      %s1738 = smul.u32 %s1737, 24
      %s1739 = scalar_lea.vmem %s165, %s1738
      %v1740 = vld [vmem:[%s1739] sm:$0xff]
      %v1741 = vld [vmem:[%s1739 + $0x8] sm:$0xff]
      %v1742 = vld [vmem:[%s1739 + $0x18] sm:$0xff]
      %v1743 = vld [vmem:[%s1739 + $0x20] sm:$0xff]
      %v1744 = vld [vmem:[%s1739 + $0x30] sm:$0xff]
      %v1745 = vld [vmem:[%s1739 + $0x38] sm:$0xff]
      %v1746 = vld [vmem:[%s1739 + $0x48] sm:$0xff]
      %v1747 = vld [vmem:[%s1739 + $0x50] sm:$0xff]
      %v1748 = vld [vmem:[%s1739 + $0x60] sm:$0xff]
      %v1749 = vld [vmem:[%s1739 + $0x68] sm:$0xff]
      %v1750 = vld [vmem:[%s1739 + $0x78] sm:$0xff]
      %v1751 = vld [vmem:[%s1739 + $0x80] sm:$0xff]
      %v1752 = vld [vmem:[%s1739 + $0x90] sm:$0xff]
      %v1753 = vld [vmem:[%s1739 + $0x98] sm:$0xff]
      %v1754 = vld [vmem:[%s1739 + $0xa8] sm:$0xff]
      %v1755 = vld [vmem:[%s1739 + $0xb0] sm:$0xff]
      %v1756 = vld [vmem:[%s1739 + $0xc0] sm:$0xff]
      %v1757 = vld [vmem:[%s1739 + $0xc8] sm:$0xff]
      %v1758 = vld [vmem:[%s1739 + $0xd8] sm:$0xff]
      %v1759 = vld [vmem:[%s1739 + $0xe0] sm:$0xff]
      %v1760 = vld [vmem:[%s1739 + $0xf0] sm:$0xff]
      %v1761 = vld [vmem:[%s1739 + $0xf8] sm:$0xff]
      %v1762 = vld [vmem:[%s1739 + $0x108] sm:$0xff]
      %v1763 = vld [vmem:[%s1739 + $0x110] sm:$0xff]
      %v1764 = vld [vmem:[%s1739 + $0x120] sm:$0xff]
      %v1765 = vld [vmem:[%s1739 + $0x128] sm:$0xff]
      %v1766 = vld [vmem:[%s1739 + $0x138] sm:$0xff]
      %v1767 = vld [vmem:[%s1739 + $0x140] sm:$0xff]
      %v1768 = vld [vmem:[%s1739 + $0x150] sm:$0xff]
      %v1769 = vld [vmem:[%s1739 + $0x158] sm:$0xff]
      %v1770 = vld [vmem:[%s1739 + $0x168] sm:$0xff]
      %v1771 = vld [vmem:[%s1739 + $0x170] sm:$0xff]
      %s1772 = scalar_lea.vmem %s1, 80
      %v1773 = vld [vmem:[%s1772] sm:$0xff]
      %v1775 = vsel %vm245, %v1773, 0
      %v1778 = vsel %vm245, %v1740, 0
      %v1781 = vsel %vm245, %v1741, 0
      %v1784 = vsel %vm245, %v1742, 0
      %v1787 = vsel %vm245, %v1743, 0
      %v1790 = vsel %vm245, %v1744, 0
      %v1793 = vsel %vm245, %v1745, 0
      %v1796 = vsel %vm245, %v1746, 0
      %v1799 = vsel %vm245, %v1747, 0
      %v1802 = vsel %vm245, %v1748, 0
      %v1805 = vsel %vm245, %v1749, 0
      %v1808 = vsel %vm245, %v1750, 0
      %v1811 = vsel %vm245, %v1751, 0
      %v1814 = vsel %vm245, %v1752, 0
      %v1817 = vsel %vm245, %v1753, 0
      %v1820 = vsel %vm245, %v1754, 0
      %v1823 = vsel %vm245, %v1755, 0
      %v1826 = vsel %vm245, %v1756, 0
      %v1829 = vsel %vm245, %v1757, 0
      %v1832 = vsel %vm245, %v1758, 0
      %v1835 = vsel %vm245, %v1759, 0
      %v1838 = vsel %vm245, %v1760, 0
      %v1841 = vsel %vm245, %v1761, 0
      %v1844 = vsel %vm245, %v1762, 0
      %v1847 = vsel %vm245, %v1763, 0
      %v1850 = vsel %vm245, %v1764, 0
      %v1853 = vsel %vm245, %v1765, 0
      %v1856 = vsel %vm245, %v1766, 0
      %v1859 = vsel %vm245, %v1767, 0
      %v1862 = vsel %vm245, %v1768, 0
      %v1865 = vsel %vm245, %v1769, 0
      %v1868 = vsel %vm245, %v1770, 0
      %v1871 = vsel %vm245, %v1771, 0
      %1873 = vmatprep.subr.mxu0 0.0
      %1874 = vmatpush1.xpose.msra.mxu0 %v1778
      %1875 = vmatprep.subr.mxu0 0.0
      %1876 = vmatpush1.xpose.msra.mxu0 %v1781
      %1877 = vmatprep.subr.mxu0 0.0
      %1878 = vmatpush1.xpose.msra.mxu0 %v1784
      %1879 = vmatprep.subr.mxu0 0.0
      %1880 = vmatpush1.xpose.msra.mxu0 %v1787
      %1881 = vmatprep.subr.mxu0 0.0
      %1882 = vmatpush1.xpose.msra.mxu0 %v1790
      %1883 = vmatprep.subr.mxu0 0.0
      %1884 = vmatpush1.xpose.msra.mxu0 %v1793
      %1885 = vmatprep.subr.mxu0 0.0
      %1886 = vmatpush1.xpose.msra.mxu0 %v1796
      %1887 = vmatprep.subr.mxu0 0.0
      %1888 = vmatpush1.xpose.msra.mxu0 %v1799
      %1889 = vmatprep.subr.mxu0 0.0
      %1890 = vmatpush1.xpose.msra.mxu0 %v1802
      %1891 = vmatprep.subr.mxu0 0.0
      %1892 = vmatpush1.xpose.msra.mxu0 %v1805
      %1893 = vmatprep.subr.mxu0 0.0
      %1894 = vmatpush1.xpose.msra.mxu0 %v1808
      %1895 = vmatprep.subr.mxu0 0.0
      %1896 = vmatpush1.xpose.msra.mxu0 %v1811
      %1897 = vmatprep.subr.mxu0 0.0
      %1898 = vmatpush1.xpose.msra.mxu0 %v1814
      %1899 = vmatprep.subr.mxu0 0.0
      %1900 = vmatpush1.xpose.msra.mxu0 %v1817
      %1901 = vmatprep.subr.mxu0 0.0
      %1902 = vmatpush1.xpose.msra.mxu0 %v1820
      %1903 = vmatprep.subr.mxu0 0.0
      %1904 = vmatpush1.xpose.msra.mxu0 %v1823
      %1905 = vmatprep.subr.mxu0 0.0
      %1906 = vmatpush1.xpose.msra.mxu0 %v1826
      %1907 = vmatprep.subr.mxu0 0.0
      %1908 = vmatpush1.xpose.msra.mxu0 %v1829
      %1909 = vmatprep.subr.mxu0 0.0
      %1910 = vmatpush1.xpose.msra.mxu0 %v1832
      %1911 = vmatprep.subr.mxu0 0.0
      %1912 = vmatpush1.xpose.msra.mxu0 %v1835
      %1913 = vmatprep.subr.mxu0 0.0
      %1914 = vmatpush1.xpose.msra.mxu0 %v1838
      %1915 = vmatprep.subr.mxu0 0.0
      %1916 = vmatpush1.xpose.msra.mxu0 %v1841
      %1917 = vmatprep.subr.mxu0 0.0
      %1918 = vmatpush1.xpose.msra.mxu0 %v1844
      %1919 = vmatprep.subr.mxu0 0.0
      %1920 = vmatpush1.xpose.msra.mxu0 %v1847
      %1921 = vmatprep.subr.mxu0 0.0
      %1922 = vmatpush1.xpose.msra.mxu0 %v1850
      %1923 = vmatprep.subr.mxu0 0.0
      %1924 = vmatpush1.xpose.msra.mxu0 %v1853
      %1925 = vmatprep.subr.mxu0 0.0
      %1926 = vmatpush1.xpose.msra.mxu0 %v1856
      %1927 = vmatprep.subr.mxu0 0.0
      %1928 = vmatpush1.xpose.msra.mxu0 %v1859
      %1929 = vmatprep.subr.mxu0 0.0
      %1930 = vmatpush1.xpose.msra.mxu0 %v1862
      %1931 = vmatprep.subr.mxu0 0.0
      %1932 = vmatpush1.xpose.msra.mxu0 %v1865
      %1933 = vmatprep.subr.mxu0 0.0
      %1934 = vmatpush1.xpose.msra.mxu0 %v1868
      %1935 = vmatprep.subr.mxu0 0.0
      %1936 = vmatpush1.xpose.msra.mxu0 %v1871
      %1937 = vmatprep.mubr.f32.mxu0 0.0
      %1938 = vmatmul.mubr.f32.gmra.mrb[0].mxu0 %v1775
      %v1939 = vpop.f32.mrb[0].mxu0
      %v1940 = vadd.f32 0.0, %v1939
      %v1941 = vpop.f32.mrb[0].mxu0
      %v1942 = vadd.f32 0.0, %v1941
      %1943 = vdwg.mxu0
      %v1944 = vadd.f32 %v1733, %v1940
      %v1945 = vadd.f32 %v1735, %v1942
      %v1946 = vld [vmem:[%s1739 + $0x1] sm:$0xff]
      %v1947 = vld [vmem:[%s1739 + $0x9] sm:$0xff]
      %v1948 = vld [vmem:[%s1739 + $0x19] sm:$0xff]
      %v1949 = vld [vmem:[%s1739 + $0x21] sm:$0xff]
      %v1950 = vld [vmem:[%s1739 + $0x31] sm:$0xff]
      %v1951 = vld [vmem:[%s1739 + $0x39] sm:$0xff]
      %v1952 = vld [vmem:[%s1739 + $0x49] sm:$0xff]
      %v1953 = vld [vmem:[%s1739 + $0x51] sm:$0xff]
      %v1954 = vld [vmem:[%s1739 + $0x61] sm:$0xff]
      %v1955 = vld [vmem:[%s1739 + $0x69] sm:$0xff]
      %v1956 = vld [vmem:[%s1739 + $0x79] sm:$0xff]
      %v1957 = vld [vmem:[%s1739 + $0x81] sm:$0xff]
      %v1958 = vld [vmem:[%s1739 + $0x91] sm:$0xff]
      %v1959 = vld [vmem:[%s1739 + $0x99] sm:$0xff]
      %v1960 = vld [vmem:[%s1739 + $0xa9] sm:$0xff]
      %v1961 = vld [vmem:[%s1739 + $0xb1] sm:$0xff]
      %v1962 = vld [vmem:[%s1739 + $0xc1] sm:$0xff]
      %v1963 = vld [vmem:[%s1739 + $0xc9] sm:$0xff]
      %v1964 = vld [vmem:[%s1739 + $0xd9] sm:$0xff]
      %v1965 = vld [vmem:[%s1739 + $0xe1] sm:$0xff]
      %v1966 = vld [vmem:[%s1739 + $0xf1] sm:$0xff]
      %v1967 = vld [vmem:[%s1739 + $0xf9] sm:$0xff]
      %v1968 = vld [vmem:[%s1739 + $0x109] sm:$0xff]
      %v1969 = vld [vmem:[%s1739 + $0x111] sm:$0xff]
      %v1970 = vld [vmem:[%s1739 + $0x121] sm:$0xff]
      %v1971 = vld [vmem:[%s1739 + $0x129] sm:$0xff]
      %v1972 = vld [vmem:[%s1739 + $0x139] sm:$0xff]
      %v1973 = vld [vmem:[%s1739 + $0x141] sm:$0xff]
      %v1974 = vld [vmem:[%s1739 + $0x151] sm:$0xff]
      %v1975 = vld [vmem:[%s1739 + $0x159] sm:$0xff]
      %v1976 = vld [vmem:[%s1739 + $0x169] sm:$0xff]
      %v1977 = vld [vmem:[%s1739 + $0x171] sm:$0xff]
      %s1978 = scalar_lea.vmem %s1, 88
      %v1979 = vld [vmem:[%s1978] sm:$0xff]
      %v1981 = vsel %vm245, %v1979, 0
      %v1984 = vsel %vm245, %v1946, 0
      %v1987 = vsel %vm245, %v1947, 0
      %v1990 = vsel %vm245, %v1948, 0
      %v1993 = vsel %vm245, %v1949, 0
      %v1996 = vsel %vm245, %v1950, 0
      %v1999 = vsel %vm245, %v1951, 0
      %v2002 = vsel %vm245, %v1952, 0
      %v2005 = vsel %vm245, %v1953, 0
      %v2008 = vsel %vm245, %v1954, 0
      %v2011 = vsel %vm245, %v1955, 0
      %v2014 = vsel %vm245, %v1956, 0
      %v2017 = vsel %vm245, %v1957, 0
      %v2020 = vsel %vm245, %v1958, 0
      %v2023 = vsel %vm245, %v1959, 0
      %v2026 = vsel %vm245, %v1960, 0
      %v2029 = vsel %vm245, %v1961, 0
      %v2032 = vsel %vm245, %v1962, 0
      %v2035 = vsel %vm245, %v1963, 0
      %v2038 = vsel %vm245, %v1964, 0
      %v2041 = vsel %vm245, %v1965, 0
      %v2044 = vsel %vm245, %v1966, 0
      %v2047 = vsel %vm245, %v1967, 0
      %v2050 = vsel %vm245, %v1968, 0
      %v2053 = vsel %vm245, %v1969, 0
      %v2056 = vsel %vm245, %v1970, 0
      %v2059 = vsel %vm245, %v1971, 0
      %v2062 = vsel %vm245, %v1972, 0
      %v2065 = vsel %vm245, %v1973, 0
      %v2068 = vsel %vm245, %v1974, 0
      %v2071 = vsel %vm245, %v1975, 0
      %v2074 = vsel %vm245, %v1976, 0
      %v2077 = vsel %vm245, %v1977, 0
      %2079 = vmatprep.subr.mxu0 0.0
      %2080 = vmatpush1.xpose.msra.mxu0 %v1984
      %2081 = vmatprep.subr.mxu0 0.0
      %2082 = vmatpush1.xpose.msra.mxu0 %v1987
      %2083 = vmatprep.subr.mxu0 0.0
      %2084 = vmatpush1.xpose.msra.mxu0 %v1990
      %2085 = vmatprep.subr.mxu0 0.0
      %2086 = vmatpush1.xpose.msra.mxu0 %v1993
      %2087 = vmatprep.subr.mxu0 0.0
      %2088 = vmatpush1.xpose.msra.mxu0 %v1996
      %2089 = vmatprep.subr.mxu0 0.0
      %2090 = vmatpush1.xpose.msra.mxu0 %v1999
      %2091 = vmatprep.subr.mxu0 0.0
      %2092 = vmatpush1.xpose.msra.mxu0 %v2002
      %2093 = vmatprep.subr.mxu0 0.0
      %2094 = vmatpush1.xpose.msra.mxu0 %v2005
      %2095 = vmatprep.subr.mxu0 0.0
      %2096 = vmatpush1.xpose.msra.mxu0 %v2008
      %2097 = vmatprep.subr.mxu0 0.0
      %2098 = vmatpush1.xpose.msra.mxu0 %v2011
      %2099 = vmatprep.subr.mxu0 0.0
      %2100 = vmatpush1.xpose.msra.mxu0 %v2014
      %2101 = vmatprep.subr.mxu0 0.0
      %2102 = vmatpush1.xpose.msra.mxu0 %v2017
      %2103 = vmatprep.subr.mxu0 0.0
      %2104 = vmatpush1.xpose.msra.mxu0 %v2020
      %2105 = vmatprep.subr.mxu0 0.0
      %2106 = vmatpush1.xpose.msra.mxu0 %v2023
      %2107 = vmatprep.subr.mxu0 0.0
      %2108 = vmatpush1.xpose.msra.mxu0 %v2026
      %2109 = vmatprep.subr.mxu0 0.0
      %2110 = vmatpush1.xpose.msra.mxu0 %v2029
      %2111 = vmatprep.subr.mxu0 0.0
      %2112 = vmatpush1.xpose.msra.mxu0 %v2032
      %2113 = vmatprep.subr.mxu0 0.0
      %2114 = vmatpush1.xpose.msra.mxu0 %v2035
      %2115 = vmatprep.subr.mxu0 0.0
      %2116 = vmatpush1.xpose.msra.mxu0 %v2038
      %2117 = vmatprep.subr.mxu0 0.0
      %2118 = vmatpush1.xpose.msra.mxu0 %v2041
      %2119 = vmatprep.subr.mxu0 0.0
      %2120 = vmatpush1.xpose.msra.mxu0 %v2044
      %2121 = vmatprep.subr.mxu0 0.0
      %2122 = vmatpush1.xpose.msra.mxu0 %v2047
      %2123 = vmatprep.subr.mxu0 0.0
      %2124 = vmatpush1.xpose.msra.mxu0 %v2050
      %2125 = vmatprep.subr.mxu0 0.0
      %2126 = vmatpush1.xpose.msra.mxu0 %v2053
      %2127 = vmatprep.subr.mxu0 0.0
      %2128 = vmatpush1.xpose.msra.mxu0 %v2056
      %2129 = vmatprep.subr.mxu0 0.0
      %2130 = vmatpush1.xpose.msra.mxu0 %v2059
      %2131 = vmatprep.subr.mxu0 0.0
      %2132 = vmatpush1.xpose.msra.mxu0 %v2062
      %2133 = vmatprep.subr.mxu0 0.0
      %2134 = vmatpush1.xpose.msra.mxu0 %v2065
      %2135 = vmatprep.subr.mxu0 0.0
      %2136 = vmatpush1.xpose.msra.mxu0 %v2068
      %2137 = vmatprep.subr.mxu0 0.0
      %2138 = vmatpush1.xpose.msra.mxu0 %v2071
      %2139 = vmatprep.subr.mxu0 0.0
      %2140 = vmatpush1.xpose.msra.mxu0 %v2074
      %2141 = vmatprep.subr.mxu0 0.0
      %2142 = vmatpush1.xpose.msra.mxu0 %v2077
      %2143 = vmatprep.mubr.f32.mxu0 0.0
      %2144 = vmatmul.mubr.f32.gmra.mrb[0].mxu0 %v1981
      %v2145 = vpop.f32.mrb[0].mxu0
      %v2146 = vadd.f32 0.0, %v2145
      %v2147 = vpop.f32.mrb[0].mxu0
      %v2148 = vadd.f32 0.0, %v2147
      %2149 = vdwg.mxu0
      %v2150 = vadd.f32 %v1944, %v2146
      %v2151 = vadd.f32 %v1945, %v2148
      %v2152 = vadd.f32 %v2150, %v2151
      %2153 = vadd.xlane.f32.xlu0 %v2152
      %v2154 = vpop.xlane.xlu0 %2153
      %v2155 = vadd.f32 %v1578, %v2154
      %v2156 = vmul.f32 %v2150, %v2150
      %v2157 = vmul.f32 %v2151, %v2151
      %v2158 = vadd.f32 %v2156, %v2157
      %2159 = vadd.xlane.f32.xlu0 %v2158
      %v2160 = vpop.xlane.xlu0 %2159
      %v2161 = vadd.f32 %v1584, %v2160
      %s2162 = scalar_lea.vmem %s1, 96
      %v2163 = vld [vmem:[%s2162] sm:$0xff]
      %s2164 = scalar_lea.vmem %s1, 104
      %v2165 = vld [vmem:[%s2164] sm:$0xff]
      %v2167 = vsel %vm245, %v2165, 0
      %2169 = vmatprep.subr.mxu0 0.0
      %2170 = vmatpush1.xpose.msra.mxu0 %v1407
      %2171 = vmatprep.subr.mxu0 0.0
      %2172 = vmatpush1.xpose.msra.mxu0 %v1410
      %2173 = vmatprep.subr.mxu0 0.0
      %2174 = vmatpush1.xpose.msra.mxu0 %v1413
      %2175 = vmatprep.subr.mxu0 0.0
      %2176 = vmatpush1.xpose.msra.mxu0 %v1416
      %2177 = vmatprep.subr.mxu0 0.0
      %2178 = vmatpush1.xpose.msra.mxu0 %v1419
      %2179 = vmatprep.subr.mxu0 0.0
      %2180 = vmatpush1.xpose.msra.mxu0 %v1422
      %2181 = vmatprep.subr.mxu0 0.0
      %2182 = vmatpush1.xpose.msra.mxu0 %v1425
      %2183 = vmatprep.subr.mxu0 0.0
      %2184 = vmatpush1.xpose.msra.mxu0 %v1428
      %2185 = vmatprep.subr.mxu0 0.0
      %2186 = vmatpush1.xpose.msra.mxu0 %v1431
      %2187 = vmatprep.subr.mxu0 0.0
      %2188 = vmatpush1.xpose.msra.mxu0 %v1434
      %2189 = vmatprep.subr.mxu0 0.0
      %2190 = vmatpush1.xpose.msra.mxu0 %v1437
      %2191 = vmatprep.subr.mxu0 0.0
      %2192 = vmatpush1.xpose.msra.mxu0 %v1440
      %2193 = vmatprep.subr.mxu0 0.0
      %2194 = vmatpush1.xpose.msra.mxu0 %v1443
      %2195 = vmatprep.subr.mxu0 0.0
      %2196 = vmatpush1.xpose.msra.mxu0 %v1446
      %2197 = vmatprep.subr.mxu0 0.0
      %2198 = vmatpush1.xpose.msra.mxu0 %v1449
      %2199 = vmatprep.subr.mxu0 0.0
      %2200 = vmatpush1.xpose.msra.mxu0 %v1452
      %2201 = vmatprep.subr.mxu0 0.0
      %2202 = vmatpush1.xpose.msra.mxu0 %v1455
      %2203 = vmatprep.subr.mxu0 0.0
      %2204 = vmatpush1.xpose.msra.mxu0 %v1458
      %2205 = vmatprep.subr.mxu0 0.0
      %2206 = vmatpush1.xpose.msra.mxu0 %v1461
      %2207 = vmatprep.subr.mxu0 0.0
      %2208 = vmatpush1.xpose.msra.mxu0 %v1464
      %2209 = vmatprep.subr.mxu0 0.0
      %2210 = vmatpush1.xpose.msra.mxu0 %v1467
      %2211 = vmatprep.subr.mxu0 0.0
      %2212 = vmatpush1.xpose.msra.mxu0 %v1470
      %2213 = vmatprep.subr.mxu0 0.0
      %2214 = vmatpush1.xpose.msra.mxu0 %v1473
      %2215 = vmatprep.subr.mxu0 0.0
      %2216 = vmatpush1.xpose.msra.mxu0 %v1476
      %2217 = vmatprep.subr.mxu0 0.0
      %2218 = vmatpush1.xpose.msra.mxu0 %v1479
      %2219 = vmatprep.subr.mxu0 0.0
      %2220 = vmatpush1.xpose.msra.mxu0 %v1482
      %2221 = vmatprep.subr.mxu0 0.0
      %2222 = vmatpush1.xpose.msra.mxu0 %v1485
      %2223 = vmatprep.subr.mxu0 0.0
      %2224 = vmatpush1.xpose.msra.mxu0 %v1488
      %2225 = vmatprep.subr.mxu0 0.0
      %2226 = vmatpush1.xpose.msra.mxu0 %v1491
      %2227 = vmatprep.subr.mxu0 0.0
      %2228 = vmatpush1.xpose.msra.mxu0 %v1494
      %2229 = vmatprep.subr.mxu0 0.0
      %2230 = vmatpush1.xpose.msra.mxu0 %v1497
      %2231 = vmatprep.subr.mxu0 0.0
      %2232 = vmatpush1.xpose.msra.mxu0 %v1500
      %2233 = vmatprep.mubr.f32.mxu0 0.0
      %2234 = vmatmul.mubr.f32.gmra.mrb[0].mxu0 %v2167
      %v2235 = vpop.f32.mrb[0].mxu0
      %v2236 = vadd.f32 0.0, %v2235
      %v2237 = vpop.f32.mrb[0].mxu0
      %v2238 = vadd.f32 0.0, %v2237
      %2239 = vdwg.mxu0
      %v2241 = vsel %vm245, %v2163, 0
      %2243 = vmatprep.subr.mxu0 0.0
      %2244 = vmatpush1.xpose.msra.mxu0 %v833
      %2245 = vmatprep.subr.mxu0 0.0
      %2246 = vmatpush1.xpose.msra.mxu0 %v836
      %2247 = vmatprep.subr.mxu0 0.0
      %2248 = vmatpush1.xpose.msra.mxu0 %v839
      %2249 = vmatprep.subr.mxu0 0.0
      %2250 = vmatpush1.xpose.msra.mxu0 %v842
      %2251 = vmatprep.subr.mxu0 0.0
      %2252 = vmatpush1.xpose.msra.mxu0 %v845
      %2253 = vmatprep.subr.mxu0 0.0
      %2254 = vmatpush1.xpose.msra.mxu0 %v848
      %2255 = vmatprep.subr.mxu0 0.0
      %2256 = vmatpush1.xpose.msra.mxu0 %v851
      %2257 = vmatprep.subr.mxu0 0.0
      %2258 = vmatpush1.xpose.msra.mxu0 %v854
      %2259 = vmatprep.subr.mxu0 0.0
      %2260 = vmatpush1.xpose.msra.mxu0 %v857
      %2261 = vmatprep.subr.mxu0 0.0
      %2262 = vmatpush1.xpose.msra.mxu0 %v860
      %2263 = vmatprep.subr.mxu0 0.0
      %2264 = vmatpush1.xpose.msra.mxu0 %v863
      %2265 = vmatprep.subr.mxu0 0.0
      %2266 = vmatpush1.xpose.msra.mxu0 %v866
      %2267 = vmatprep.subr.mxu0 0.0
      %2268 = vmatpush1.xpose.msra.mxu0 %v869
      %2269 = vmatprep.subr.mxu0 0.0
      %2270 = vmatpush1.xpose.msra.mxu0 %v872
      %2271 = vmatprep.subr.mxu0 0.0
      %2272 = vmatpush1.xpose.msra.mxu0 %v875
      %2273 = vmatprep.subr.mxu0 0.0
      %2274 = vmatpush1.xpose.msra.mxu0 %v878
      %2275 = vmatprep.subr.mxu0 0.0
      %2276 = vmatpush1.xpose.msra.mxu0 %v881
      %2277 = vmatprep.subr.mxu0 0.0
      %2278 = vmatpush1.xpose.msra.mxu0 %v884
      %2279 = vmatprep.subr.mxu0 0.0
      %2280 = vmatpush1.xpose.msra.mxu0 %v887
      %2281 = vmatprep.subr.mxu0 0.0
      %2282 = vmatpush1.xpose.msra.mxu0 %v890
      %2283 = vmatprep.subr.mxu0 0.0
      %2284 = vmatpush1.xpose.msra.mxu0 %v893
      %2285 = vmatprep.subr.mxu0 0.0
      %2286 = vmatpush1.xpose.msra.mxu0 %v896
      %2287 = vmatprep.subr.mxu0 0.0
      %2288 = vmatpush1.xpose.msra.mxu0 %v899
      %2289 = vmatprep.subr.mxu0 0.0
      %2290 = vmatpush1.xpose.msra.mxu0 %v902
      %2291 = vmatprep.subr.mxu0 0.0
      %2292 = vmatpush1.xpose.msra.mxu0 %v905
      %2293 = vmatprep.subr.mxu0 0.0
      %2294 = vmatpush1.xpose.msra.mxu0 %v908
      %2295 = vmatprep.subr.mxu0 0.0
      %2296 = vmatpush1.xpose.msra.mxu0 %v911
      %2297 = vmatprep.subr.mxu0 0.0
      %2298 = vmatpush1.xpose.msra.mxu0 %v914
      %2299 = vmatprep.subr.mxu0 0.0
      %2300 = vmatpush1.xpose.msra.mxu0 %v917
      %2301 = vmatprep.subr.mxu0 0.0
      %2302 = vmatpush1.xpose.msra.mxu0 %v920
      %2303 = vmatprep.subr.mxu0 0.0
      %2304 = vmatpush1.xpose.msra.mxu0 %v923
      %2305 = vmatprep.subr.mxu0 0.0
      %2306 = vmatpush1.xpose.msra.mxu0 %v926
      %2307 = vmatprep.mubr.f32.mxu0 0.0
      %2308 = vmatmul.mubr.f32.gmra.mrb[0].mxu0 %v2241
      %v2309 = vpop.f32.mrb[0].mxu0
      %v2310 = vadd.f32 %v2236, %v2309
      %v2311 = vpop.f32.mrb[0].mxu0
      %v2312 = vadd.f32 %v2238, %v2311
      %2313 = vdwg.mxu0
      %s2314 = scalar_lea.vmem %s1, 112
      %v2315 = vld [vmem:[%s2314] sm:$0xff]
      %v2317 = vsel %vm245, %v2315, 0
      %2319 = vmatprep.subr.mxu0 0.0
      %2320 = vmatpush1.xpose.msra.mxu0 %v1984
      %2321 = vmatprep.subr.mxu0 0.0
      %2322 = vmatpush1.xpose.msra.mxu0 %v1987
      %2323 = vmatprep.subr.mxu0 0.0
      %2324 = vmatpush1.xpose.msra.mxu0 %v1990
      %2325 = vmatprep.subr.mxu0 0.0
      %2326 = vmatpush1.xpose.msra.mxu0 %v1993
      %2327 = vmatprep.subr.mxu0 0.0
      %2328 = vmatpush1.xpose.msra.mxu0 %v1996
      %2329 = vmatprep.subr.mxu0 0.0
      %2330 = vmatpush1.xpose.msra.mxu0 %v1999
      %2331 = vmatprep.subr.mxu0 0.0
      %2332 = vmatpush1.xpose.msra.mxu0 %v2002
      %2333 = vmatprep.subr.mxu0 0.0
      %2334 = vmatpush1.xpose.msra.mxu0 %v2005
      %2335 = vmatprep.subr.mxu0 0.0
      %2336 = vmatpush1.xpose.msra.mxu0 %v2008
      %2337 = vmatprep.subr.mxu0 0.0
      %2338 = vmatpush1.xpose.msra.mxu0 %v2011
      %2339 = vmatprep.subr.mxu0 0.0
      %2340 = vmatpush1.xpose.msra.mxu0 %v2014
      %2341 = vmatprep.subr.mxu0 0.0
      %2342 = vmatpush1.xpose.msra.mxu0 %v2017
      %2343 = vmatprep.subr.mxu0 0.0
      %2344 = vmatpush1.xpose.msra.mxu0 %v2020
      %2345 = vmatprep.subr.mxu0 0.0
      %2346 = vmatpush1.xpose.msra.mxu0 %v2023
      %2347 = vmatprep.subr.mxu0 0.0
      %2348 = vmatpush1.xpose.msra.mxu0 %v2026
      %2349 = vmatprep.subr.mxu0 0.0
      %2350 = vmatpush1.xpose.msra.mxu0 %v2029
      %2351 = vmatprep.subr.mxu0 0.0
      %2352 = vmatpush1.xpose.msra.mxu0 %v2032
      %2353 = vmatprep.subr.mxu0 0.0
      %2354 = vmatpush1.xpose.msra.mxu0 %v2035
      %2355 = vmatprep.subr.mxu0 0.0
      %2356 = vmatpush1.xpose.msra.mxu0 %v2038
      %2357 = vmatprep.subr.mxu0 0.0
      %2358 = vmatpush1.xpose.msra.mxu0 %v2041
      %2359 = vmatprep.subr.mxu0 0.0
      %2360 = vmatpush1.xpose.msra.mxu0 %v2044
      %2361 = vmatprep.subr.mxu0 0.0
      %2362 = vmatpush1.xpose.msra.mxu0 %v2047
      %2363 = vmatprep.subr.mxu0 0.0
      %2364 = vmatpush1.xpose.msra.mxu0 %v2050
      %2365 = vmatprep.subr.mxu0 0.0
      %2366 = vmatpush1.xpose.msra.mxu0 %v2053
      %2367 = vmatprep.subr.mxu0 0.0
      %2368 = vmatpush1.xpose.msra.mxu0 %v2056
      %2369 = vmatprep.subr.mxu0 0.0
      %2370 = vmatpush1.xpose.msra.mxu0 %v2059
      %2371 = vmatprep.subr.mxu0 0.0
      %2372 = vmatpush1.xpose.msra.mxu0 %v2062
      %2373 = vmatprep.subr.mxu0 0.0
      %2374 = vmatpush1.xpose.msra.mxu0 %v2065
      %2375 = vmatprep.subr.mxu0 0.0
      %2376 = vmatpush1.xpose.msra.mxu0 %v2068
      %2377 = vmatprep.subr.mxu0 0.0
      %2378 = vmatpush1.xpose.msra.mxu0 %v2071
      %2379 = vmatprep.subr.mxu0 0.0
      %2380 = vmatpush1.xpose.msra.mxu0 %v2074
      %2381 = vmatprep.subr.mxu0 0.0
      %2382 = vmatpush1.xpose.msra.mxu0 %v2077
      %2383 = vmatprep.mubr.f32.mxu0 0.0
      %2384 = vmatmul.mubr.f32.gmra.mrb[0].mxu0 %v2317
      %v2385 = vpop.f32.mrb[0].mxu0
      %v2386 = vadd.f32 0.0, %v2385
      %v2387 = vpop.f32.mrb[0].mxu0
      %v2388 = vadd.f32 0.0, %v2387
      %2389 = vdwg.mxu0
      %v2390 = vadd.f32 %v2310, %v2386
      %v2391 = vadd.f32 %v2312, %v2388
      %v2392 = vld [vmem:[%s1739 + $0x2] sm:$0xff]
      %v2393 = vld [vmem:[%s1739 + $0xa] sm:$0xff]
      %v2394 = vld [vmem:[%s1739 + $0x1a] sm:$0xff]
      %v2395 = vld [vmem:[%s1739 + $0x22] sm:$0xff]
      %v2396 = vld [vmem:[%s1739 + $0x32] sm:$0xff]
      %v2397 = vld [vmem:[%s1739 + $0x3a] sm:$0xff]
      %v2398 = vld [vmem:[%s1739 + $0x4a] sm:$0xff]
      %v2399 = vld [vmem:[%s1739 + $0x52] sm:$0xff]
      %v2400 = vld [vmem:[%s1739 + $0x62] sm:$0xff]
      %v2401 = vld [vmem:[%s1739 + $0x6a] sm:$0xff]
      %v2402 = vld [vmem:[%s1739 + $0x7a] sm:$0xff]
      %v2403 = vld [vmem:[%s1739 + $0x82] sm:$0xff]
      %v2404 = vld [vmem:[%s1739 + $0x92] sm:$0xff]
      %v2405 = vld [vmem:[%s1739 + $0x9a] sm:$0xff]
      %v2406 = vld [vmem:[%s1739 + $0xaa] sm:$0xff]
      %v2407 = vld [vmem:[%s1739 + $0xb2] sm:$0xff]
      %v2408 = vld [vmem:[%s1739 + $0xc2] sm:$0xff]
      %v2409 = vld [vmem:[%s1739 + $0xca] sm:$0xff]
      %v2410 = vld [vmem:[%s1739 + $0xda] sm:$0xff]
      %v2411 = vld [vmem:[%s1739 + $0xe2] sm:$0xff]
      %v2412 = vld [vmem:[%s1739 + $0xf2] sm:$0xff]
      %v2413 = vld [vmem:[%s1739 + $0xfa] sm:$0xff]
      %v2414 = vld [vmem:[%s1739 + $0x10a] sm:$0xff]
      %v2415 = vld [vmem:[%s1739 + $0x112] sm:$0xff]
      %v2416 = vld [vmem:[%s1739 + $0x122] sm:$0xff]
      %v2417 = vld [vmem:[%s1739 + $0x12a] sm:$0xff]
      %v2418 = vld [vmem:[%s1739 + $0x13a] sm:$0xff]
      %v2419 = vld [vmem:[%s1739 + $0x142] sm:$0xff]
      %v2420 = vld [vmem:[%s1739 + $0x152] sm:$0xff]
      %v2421 = vld [vmem:[%s1739 + $0x15a] sm:$0xff]
      %v2422 = vld [vmem:[%s1739 + $0x16a] sm:$0xff]
      %v2423 = vld [vmem:[%s1739 + $0x172] sm:$0xff]
      %s2424 = scalar_lea.vmem %s1, 120
      %v2425 = vld [vmem:[%s2424] sm:$0xff]
      %v2427 = vsel %vm245, %v2425, 0
      %v2430 = vsel %vm245, %v2392, 0
      %v2433 = vsel %vm245, %v2393, 0
      %v2436 = vsel %vm245, %v2394, 0
      %v2439 = vsel %vm245, %v2395, 0
      %v2442 = vsel %vm245, %v2396, 0
      %v2445 = vsel %vm245, %v2397, 0
      %v2448 = vsel %vm245, %v2398, 0
      %v2451 = vsel %vm245, %v2399, 0
      %v2454 = vsel %vm245, %v2400, 0
      %v2457 = vsel %vm245, %v2401, 0
      %v2460 = vsel %vm245, %v2402, 0
      %v2463 = vsel %vm245, %v2403, 0
      %v2466 = vsel %vm245, %v2404, 0
      %v2469 = vsel %vm245, %v2405, 0
      %v2472 = vsel %vm245, %v2406, 0
      %v2475 = vsel %vm245, %v2407, 0
      %v2478 = vsel %vm245, %v2408, 0
      %v2481 = vsel %vm245, %v2409, 0
      %v2484 = vsel %vm245, %v2410, 0
      %v2487 = vsel %vm245, %v2411, 0
      %v2490 = vsel %vm245, %v2412, 0
      %v2493 = vsel %vm245, %v2413, 0
      %v2496 = vsel %vm245, %v2414, 0
      %v2499 = vsel %vm245, %v2415, 0
      %v2502 = vsel %vm245, %v2416, 0
      %v2505 = vsel %vm245, %v2417, 0
      %v2508 = vsel %vm245, %v2418, 0
      %v2511 = vsel %vm245, %v2419, 0
      %v2514 = vsel %vm245, %v2420, 0
      %v2517 = vsel %vm245, %v2421, 0
      %v2520 = vsel %vm245, %v2422, 0
      %v2523 = vsel %vm245, %v2423, 0
      %2525 = vmatprep.subr.mxu0 0.0
      %2526 = vmatpush1.xpose.msra.mxu0 %v2430
      %2527 = vmatprep.subr.mxu0 0.0
      %2528 = vmatpush1.xpose.msra.mxu0 %v2433
      %2529 = vmatprep.subr.mxu0 0.0
      %2530 = vmatpush1.xpose.msra.mxu0 %v2436
      %2531 = vmatprep.subr.mxu0 0.0
      %2532 = vmatpush1.xpose.msra.mxu0 %v2439
      %2533 = vmatprep.subr.mxu0 0.0
      %2534 = vmatpush1.xpose.msra.mxu0 %v2442
      %2535 = vmatprep.subr.mxu0 0.0
      %2536 = vmatpush1.xpose.msra.mxu0 %v2445
      %2537 = vmatprep.subr.mxu0 0.0
      %2538 = vmatpush1.xpose.msra.mxu0 %v2448
      %2539 = vmatprep.subr.mxu0 0.0
      %2540 = vmatpush1.xpose.msra.mxu0 %v2451
      %2541 = vmatprep.subr.mxu0 0.0
      %2542 = vmatpush1.xpose.msra.mxu0 %v2454
      %2543 = vmatprep.subr.mxu0 0.0
      %2544 = vmatpush1.xpose.msra.mxu0 %v2457
      %2545 = vmatprep.subr.mxu0 0.0
      %2546 = vmatpush1.xpose.msra.mxu0 %v2460
      %2547 = vmatprep.subr.mxu0 0.0
      %2548 = vmatpush1.xpose.msra.mxu0 %v2463
      %2549 = vmatprep.subr.mxu0 0.0
      %2550 = vmatpush1.xpose.msra.mxu0 %v2466
      %2551 = vmatprep.subr.mxu0 0.0
      %2552 = vmatpush1.xpose.msra.mxu0 %v2469
      %2553 = vmatprep.subr.mxu0 0.0
      %2554 = vmatpush1.xpose.msra.mxu0 %v2472
      %2555 = vmatprep.subr.mxu0 0.0
      %2556 = vmatpush1.xpose.msra.mxu0 %v2475
      %2557 = vmatprep.subr.mxu0 0.0
      %2558 = vmatpush1.xpose.msra.mxu0 %v2478
      %2559 = vmatprep.subr.mxu0 0.0
      %2560 = vmatpush1.xpose.msra.mxu0 %v2481
      %2561 = vmatprep.subr.mxu0 0.0
      %2562 = vmatpush1.xpose.msra.mxu0 %v2484
      %2563 = vmatprep.subr.mxu0 0.0
      %2564 = vmatpush1.xpose.msra.mxu0 %v2487
      %2565 = vmatprep.subr.mxu0 0.0
      %2566 = vmatpush1.xpose.msra.mxu0 %v2490
      %2567 = vmatprep.subr.mxu0 0.0
      %2568 = vmatpush1.xpose.msra.mxu0 %v2493
      %2569 = vmatprep.subr.mxu0 0.0
      %2570 = vmatpush1.xpose.msra.mxu0 %v2496
      %2571 = vmatprep.subr.mxu0 0.0
      %2572 = vmatpush1.xpose.msra.mxu0 %v2499
      %2573 = vmatprep.subr.mxu0 0.0
      %2574 = vmatpush1.xpose.msra.mxu0 %v2502
      %2575 = vmatprep.subr.mxu0 0.0
      %2576 = vmatpush1.xpose.msra.mxu0 %v2505
      %2577 = vmatprep.subr.mxu0 0.0
      %2578 = vmatpush1.xpose.msra.mxu0 %v2508
      %2579 = vmatprep.subr.mxu0 0.0
      %2580 = vmatpush1.xpose.msra.mxu0 %v2511
      %2581 = vmatprep.subr.mxu0 0.0
      %2582 = vmatpush1.xpose.msra.mxu0 %v2514
      %2583 = vmatprep.subr.mxu0 0.0
      %2584 = vmatpush1.xpose.msra.mxu0 %v2517
      %2585 = vmatprep.subr.mxu0 0.0
      %2586 = vmatpush1.xpose.msra.mxu0 %v2520
      %2587 = vmatprep.subr.mxu0 0.0
      %2588 = vmatpush1.xpose.msra.mxu0 %v2523
      %2589 = vmatprep.mubr.f32.mxu0 0.0
      %2590 = vmatmul.mubr.f32.gmra.mrb[0].mxu0 %v2427
      %v2591 = vpop.f32.mrb[0].mxu0
      %v2592 = vadd.f32 0.0, %v2591
      %v2593 = vpop.f32.mrb[0].mxu0
      %v2594 = vadd.f32 0.0, %v2593
      %2595 = vdwg.mxu0
      %v2596 = vadd.f32 %v2390, %v2592
      %v2597 = vadd.f32 %v2391, %v2594
      %v2598 = vadd.f32 %v2596, %v2597
      %2599 = vadd.xlane.f32.xlu0 %v2598
      %v2600 = vpop.xlane.xlu0 %2599
      %v2601 = vadd.f32 %v2155, %v2600
      %v2602 = vmul.f32 %v2596, %v2596
      %v2603 = vmul.f32 %v2597, %v2597
      %v2604 = vadd.f32 %v2602, %v2603
      %2605 = vadd.xlane.f32.xlu0 %v2604
      %v2606 = vpop.xlane.xlu0 %2605
      %v2607 = vadd.f32 %v2161, %v2606
      %v2608 = vld [vmem:[%s2] sm:$0xff]
      %v2609 = vadd.f32 %v2608, %v2601
      %vm2610 = vcmask 7168
      %2611 = vst.msk [vmem:[%s2] sm:$0xff] %vm2610, %v2609
      %v2612 = vld [vmem:[%s3] sm:$0xff]
      %v2613 = vadd.f32 %v2612, %v2607
      %2614 = vst.msk [vmem:[%s3] sm:$0xff] %vm2610, %v2613
      // Predicated region
      $region33: #{up_conv_forward.2} parent=27 // pred_check
        %p2615 = pneg %p87
      $region34: #{up_conv_forward.2} parent=27 // pred_check_branch
        %2617 = sbr.rel (%p2615) target = $region36
      $region35: #{up_conv_forward.2} parent=27 // pred_region
        _
      $region36: #{up_conv_forward.2} parent=27 // pred_fallthru
        _
      // Predicated region
      $region37: #{up_conv_forward.2} parent=27 // pred_check
        %p2618 = pneg %p108
      $region38: #{up_conv_forward.2} parent=27 // pred_check_branch
        %2620 = sbr.rel (%p2618) target = $region40
      $region39: #{up_conv_forward.2} parent=27 // pred_region
        _
      $region40: #{up_conv_forward.2} parent=27 // pred_fallthru
        _
      // Predicated region
      $region41: #{up_conv_forward.2} parent=27 // pred_check
        %p2621 = pneg %p87
      $region42: #{up_conv_forward.2} parent=27 // pred_check_branch
        %2623 = sbr.rel (%p2621) target = $region44
      $region43: #{up_conv_forward.2} parent=27 // pred_region
        _
      $region44: #{up_conv_forward.2} parent=27 // pred_fallthru
        _
      // Predicated region
      $region45: #{up_conv_forward.2} parent=27 // pred_check
        %p2624 = pneg %p108
      $region46: #{up_conv_forward.2} parent=27 // pred_check_branch
        %2626 = sbr.rel (%p2624) target = $region48
      $region47: #{up_conv_forward.2} parent=27 // pred_region
        _
      $region48: #{up_conv_forward.2} parent=27 // pred_fallthru
        _
    $region28: #{up_conv_forward.2} parent=5 // pred_fallthru
      _
    %p2627 = scmp.le.s32.totalorder 2, %s10
    // Predicated region
    $region49: #{up_conv_forward.2} parent=5 // pred_check
      %p2628 = pneg %p2627
    $region50: #{up_conv_forward.2} parent=5 // pred_check_branch
      %2630 = sbr.rel (%p2628) target = $region52
    $region51: #{up_conv_forward.2} parent=5 // pred_region
      %s2631 = ssub.s32 %s10, 2
    $region52: #{up_conv_forward.2} parent=5 // pred_fallthru
      _
  $region6: #{up_conv_forward.2} parent=0 // loop_footer
    %s14 = sadd.s32 1, %s10
  $region7: #{up_conv_forward.2} parent=0 // loop_footer_branch
    %9 = sbr.rel target = $region3
  $region8: #{up_conv_forward.2} parent=0 // loop_exit
    _

// kernel: up_conv_forward.3
$region0: #{up_conv_forward.3}
  #allocation0 [shape = 'u32[]', space=smem, size = 0x4, offset = 0x4, fixed_abs, tag = 'smem constant byte address 0x4 - core index']
  #allocation1 [shape = 'u32[144,128]{1,0:T(1,128)}', space=vmem, size = 0x12000, scoped, tag = 'internal scratch']
  %s0 = inlined_call_operand.vmem [shape: f32[2,18,18,4], index: 0, kind: input, shape index: {}]
  %s1 = inlined_call_operand.vmem [shape: f32[16,8,4], index: 1, kind: input, shape index: {}]
  %s2 = inlined_call_operand.vmem [shape: f32[8,1], index: 2, kind: input, shape index: {}]
  %s3 = inlined_call_operand.vmem [shape: f32[8,1], index: 3, kind: input, shape index: {}]
  %s4 = inlined_call_operand.vmem [shape: f32[2,8,256], index: 4, kind: output, shape index: {0}]
  %s5 = inlined_call_operand.vmem [shape: f32[2,8,256], index: 5, kind: output, shape index: {1}]
  %s6 = inlined_call_operand.vmem [shape: f32[2,8,256], index: 6, kind: output, shape index: {2}]
  %s7 = inlined_call_operand.vmem [shape: f32[2,8,256], index: 7, kind: output, shape index: {3}]
  %8 = xla_tuple %s4, %s5, %s6, %s7
  %s9 = sld [smem:[#allocation0]]
  $region73: #{up_conv_forward.3} parent=0
    _
  %s11 = ssub.s32 1, %s9
  %s12 = scalar_select 0, %s11, %s9
  loop: start=0, step=1, limit=4
  $region2: #{up_conv_forward.3} parent=0 // loop_pre_header
    _
  $region3: #{up_conv_forward.3} parent=0 // loop_header
    %s14 = sphi 0, %s18
    %p15 = scmp.ge.s32.totalorder %s14, 4
    %s21 = sphi 0, %s33
    %s22 = sphi 0, %s29
    %s23 = sphi 0, %s21
    %s24 = sphi 0, %s22
    %s25 = sphi 0, %s23
    %s26 = sphi 0, %s24
    %s36 = sphi 0, %s38
    %s39 = sphi 0, %s36
    %s40 = sphi 0, %s39
    %s56 = sphi 0, %s40
    %s60 = sphi 0, %s60
    %s62 = sphi 0, %s60
    %s63 = sphi 0, %s62
    %s77 = sphi 0, %s63
    %s81 = sphi 0, %s81
    %s83 = sphi 0, %s81
    %s84 = sphi 0, %s83
    %s98 = sphi 0, %s84
    %s102 = sphi 0, %s102
    %s104 = sphi 0, %s102
    %s105 = sphi 0, %s104
    %s119 = sphi 0, %s105
    %s127 = sphi 0, %s129
    %s130 = sphi 0, %s127
    %s131 = sphi 0, %s130
    %s147 = sphi 0, %s131
    %s155 = sphi 0, %s157
    %s158 = sphi 0, %s155
    %s159 = sphi 0, %s158
    %s175 = sphi 0, %s159
    %s183 = sphi 0, %s185
    %s186 = sphi 0, %s183
    %s187 = sphi 0, %s186
    %s203 = sphi 0, %s187
    %s211 = sphi 0, %s213
    %s214 = sphi 0, %s211
    %s215 = sphi 0, %s214
    %s231 = sphi 0, %s215
  $region4: #{up_conv_forward.3} parent=0 // loop_header_branch
    %17 = sbr.rel (%p15) target = $region8
  $region5: #{up_conv_forward.3} parent=0 // loop_body
    %s19 = ssub.s32 %s14, 1
    %s20 = ssub.s32 %s14, 2
    %s27 = sadd.s32 1, %s22
    %p28 = scmp.ge.s32.totalorder %s27, 1
    %s29 = scalar_select %p28, 0, %s27
    %s30 = sadd.s32 1, %s21
    %s31 = scalar_select %p28, %s30, %s21
    %p32 = scmp.ge.s32.totalorder %s31, 2
    %s33 = scalar_select %p32, 0, %s31
    %s34 = ssub.s32 %s21, %s33
    %p35 = scmp.eq.s32.totalorder %s34, 0
    %s37 = sadd.s32 %s36, 1
    %s38 = scalar_select %p35, %s36, %s37
    %p41 = pneg %p35
    %p42 = scmp.eq.s32.totalorder %s14, 1
    %p43 = por %p41, %p42
    %p44 = scmp.ne.s32.totalorder %s36, %s39
    %p45 = scmp.eq.s32.totalorder %s14, 0
    %p46 = por %p44, %p45
    %p47 = scmp.ne.s32.totalorder %s36, %s39
    %p48 = scmp.eq.s32.totalorder %s19, 1
    %p49 = por %p47, %p48
    %p50 = scmp.ne.s32.totalorder %s39, %s40
    %p51 = scmp.eq.s32.totalorder %s19, 0
    %p52 = por %p50, %p51
    %p53 = scmp.ne.s32.totalorder %s39, %s40
    %p54 = scmp.eq.s32.totalorder %s20, 1
    %p55 = por %p53, %p54
    %p57 = scmp.ne.s32.totalorder %s40, %s56
    %p58 = scmp.eq.s32.totalorder %s20, 0
    %p59 = por %p57, %p58
    %s61 = sadd.s32 %s60, 1
    %p64 = scmp.eq.s32.totalorder %s14, 1
    %p65 = scmp.ne.s32.totalorder %s60, %s62
    %p66 = scmp.eq.s32.totalorder %s14, 0
    %p67 = por %p65, %p66
    %p68 = scmp.ne.s32.totalorder %s60, %s62
    %p69 = scmp.eq.s32.totalorder %s19, 1
    %p70 = por %p68, %p69
    %p71 = scmp.ne.s32.totalorder %s62, %s63
    %p72 = scmp.eq.s32.totalorder %s19, 0
    %p73 = por %p71, %p72
    %p74 = scmp.ne.s32.totalorder %s62, %s63
    %p75 = scmp.eq.s32.totalorder %s20, 1
    %p76 = por %p74, %p75
    %p78 = scmp.ne.s32.totalorder %s63, %s77
    %p79 = scmp.eq.s32.totalorder %s20, 0
    %p80 = por %p78, %p79
    %s82 = sadd.s32 %s81, 1
    %p85 = scmp.eq.s32.totalorder %s14, 1
    %p86 = scmp.ne.s32.totalorder %s81, %s83
    %p87 = scmp.eq.s32.totalorder %s14, 0
    %p88 = por %p86, %p87
    %p89 = scmp.ne.s32.totalorder %s81, %s83
    %p90 = scmp.eq.s32.totalorder %s19, 1
    %p91 = por %p89, %p90
    %p92 = scmp.ne.s32.totalorder %s83, %s84
    %p93 = scmp.eq.s32.totalorder %s19, 0
    %p94 = por %p92, %p93
    %p95 = scmp.ne.s32.totalorder %s83, %s84
    %p96 = scmp.eq.s32.totalorder %s20, 1
    %p97 = por %p95, %p96
    %p99 = scmp.ne.s32.totalorder %s84, %s98
    %p100 = scmp.eq.s32.totalorder %s20, 0
    %p101 = por %p99, %p100
    %s103 = sadd.s32 %s102, 1
    %p106 = scmp.eq.s32.totalorder %s14, 1
    %p107 = scmp.ne.s32.totalorder %s102, %s104
    %p108 = scmp.eq.s32.totalorder %s14, 0
    %p109 = por %p107, %p108
    %p110 = scmp.ne.s32.totalorder %s102, %s104
    %p111 = scmp.eq.s32.totalorder %s19, 1
    %p112 = por %p110, %p111
    %p113 = scmp.ne.s32.totalorder %s104, %s105
    %p114 = scmp.eq.s32.totalorder %s19, 0
    %p115 = por %p113, %p114
    %p116 = scmp.ne.s32.totalorder %s104, %s105
    %p117 = scmp.eq.s32.totalorder %s20, 1
    %p118 = por %p116, %p117
    %p120 = scmp.ne.s32.totalorder %s105, %s119
    %p121 = scmp.eq.s32.totalorder %s20, 0
    %p122 = por %p120, %p121
    %s123 = ssub.s32 %s21, %s33
    %s124 = ssub.s32 %s22, %s29
    %s125 = sor.u32 %s123, %s124
    %p126 = scmp.eq.s32.totalorder %s125, 0
    %s128 = sadd.s32 %s127, 1
    %s129 = scalar_select %p126, %s127, %s128
    %p132 = pneg %p126
    %p133 = scmp.eq.s32.totalorder %s14, 1
    %p134 = por %p132, %p133
    %p135 = scmp.ne.s32.totalorder %s127, %s130
    %p136 = scmp.eq.s32.totalorder %s14, 0
    %p137 = por %p135, %p136
    %p138 = scmp.ne.s32.totalorder %s127, %s130
    %p139 = scmp.eq.s32.totalorder %s19, 1
    %p140 = por %p138, %p139
    %p141 = scmp.ne.s32.totalorder %s130, %s131
    %p142 = scmp.eq.s32.totalorder %s19, 0
    %p143 = por %p141, %p142
    %p144 = scmp.ne.s32.totalorder %s130, %s131
    %p145 = scmp.eq.s32.totalorder %s20, 1
    %p146 = por %p144, %p145
    %p148 = scmp.ne.s32.totalorder %s131, %s147
    %p149 = scmp.eq.s32.totalorder %s20, 0
    %p150 = por %p148, %p149
    %s151 = ssub.s32 %s21, %s33
    %s152 = ssub.s32 %s22, %s29
    %s153 = sor.u32 %s151, %s152
    %p154 = scmp.eq.s32.totalorder %s153, 0
    %s156 = sadd.s32 %s155, 1
    %s157 = scalar_select %p154, %s155, %s156
    %p160 = pneg %p154
    %p161 = scmp.eq.s32.totalorder %s14, 1
    %p162 = por %p160, %p161
    %p163 = scmp.ne.s32.totalorder %s155, %s158
    %p164 = scmp.eq.s32.totalorder %s14, 0
    %p165 = por %p163, %p164
    %p166 = scmp.ne.s32.totalorder %s155, %s158
    %p167 = scmp.eq.s32.totalorder %s19, 1
    %p168 = por %p166, %p167
    %p169 = scmp.ne.s32.totalorder %s158, %s159
    %p170 = scmp.eq.s32.totalorder %s19, 0
    %p171 = por %p169, %p170
    %p172 = scmp.ne.s32.totalorder %s158, %s159
    %p173 = scmp.eq.s32.totalorder %s20, 1
    %p174 = por %p172, %p173
    %p176 = scmp.ne.s32.totalorder %s159, %s175
    %p177 = scmp.eq.s32.totalorder %s20, 0
    %p178 = por %p176, %p177
    %s179 = ssub.s32 %s21, %s33
    %s180 = ssub.s32 %s22, %s29
    %s181 = sor.u32 %s179, %s180
    %p182 = scmp.eq.s32.totalorder %s181, 0
    %s184 = sadd.s32 %s183, 1
    %s185 = scalar_select %p182, %s183, %s184
    %p188 = pneg %p182
    %p189 = scmp.eq.s32.totalorder %s14, 1
    %p190 = por %p188, %p189
    %p191 = scmp.ne.s32.totalorder %s183, %s186
    %p192 = scmp.eq.s32.totalorder %s14, 0
    %p193 = por %p191, %p192
    %p194 = scmp.ne.s32.totalorder %s183, %s186
    %p195 = scmp.eq.s32.totalorder %s19, 1
    %p196 = por %p194, %p195
    %p197 = scmp.ne.s32.totalorder %s186, %s187
    %p198 = scmp.eq.s32.totalorder %s19, 0
    %p199 = por %p197, %p198
    %p200 = scmp.ne.s32.totalorder %s186, %s187
    %p201 = scmp.eq.s32.totalorder %s20, 1
    %p202 = por %p200, %p201
    %p204 = scmp.ne.s32.totalorder %s187, %s203
    %p205 = scmp.eq.s32.totalorder %s20, 0
    %p206 = por %p204, %p205
    %s207 = ssub.s32 %s21, %s33
    %s208 = ssub.s32 %s22, %s29
    %s209 = sor.u32 %s207, %s208
    %p210 = scmp.eq.s32.totalorder %s209, 0
    %s212 = sadd.s32 %s211, 1
    %s213 = scalar_select %p210, %s211, %s212
    %p216 = pneg %p210
    %p217 = scmp.eq.s32.totalorder %s14, 1
    %p218 = por %p216, %p217
    %p219 = scmp.ne.s32.totalorder %s211, %s214
    %p220 = scmp.eq.s32.totalorder %s14, 0
    %p221 = por %p219, %p220
    %p222 = scmp.ne.s32.totalorder %s211, %s214
    %p223 = scmp.eq.s32.totalorder %s19, 1
    %p224 = por %p222, %p223
    %p225 = scmp.ne.s32.totalorder %s214, %s215
    %p226 = scmp.eq.s32.totalorder %s19, 0
    %p227 = por %p225, %p226
    %p228 = scmp.ne.s32.totalorder %s214, %s215
    %p229 = scmp.eq.s32.totalorder %s20, 1
    %p230 = por %p228, %p229
    %p232 = scmp.ne.s32.totalorder %s215, %s231
    %p233 = scmp.eq.s32.totalorder %s20, 0
    %p234 = por %p232, %p233
    %p235 = scmp.le.s32.totalorder 1, %s14
    %p236 = scmp.lt.s32.totalorder %s14, 3
    %p237 = pnand %p235, %p236
    %p238 = pneg %p237
    // Predicated region
    $region9: #{up_conv_forward.3} parent=5 // pred_check
      _
    $region10: #{up_conv_forward.3} parent=5 // pred_check_branch
      %240 = sbr.rel (%p237) target = $region12
    $region11: #{up_conv_forward.3} parent=5 // pred_region
      %s241 = ssub.s32 %s14, 1
      // Predicated region
      $region13: #{up_conv_forward.3} parent=11 // pred_check
        %p242 = pneg %p73
      $region14: #{up_conv_forward.3} parent=11 // pred_check_branch
        %244 = sbr.rel (%p242) target = $region16
      $region15: #{up_conv_forward.3} parent=11 // pred_region
        _
      $region16: #{up_conv_forward.3} parent=11 // pred_fallthru
        _
      // Predicated region
      $region17: #{up_conv_forward.3} parent=11 // pred_check
        %p245 = pneg %p94
      $region18: #{up_conv_forward.3} parent=11 // pred_check_branch
        %247 = sbr.rel (%p245) target = $region20
      $region19: #{up_conv_forward.3} parent=11 // pred_region
        _
      $region20: #{up_conv_forward.3} parent=11 // pred_fallthru
        _
      // Predicated region
      $region21: #{up_conv_forward.3} parent=11 // pred_check
        %p248 = pneg %p115
      $region22: #{up_conv_forward.3} parent=11 // pred_check_branch
        %250 = sbr.rel (%p248) target = $region24
      $region23: #{up_conv_forward.3} parent=11 // pred_region
        _
      $region24: #{up_conv_forward.3} parent=11 // pred_fallthru
        _
    $region12: #{up_conv_forward.3} parent=5 // pred_fallthru
      _
    %p251 = scmp.lt.s32.totalorder %s14, 2
    // Predicated region
    $region25: #{up_conv_forward.3} parent=5 // pred_check
      %p252 = pneg %p251
    $region26: #{up_conv_forward.3} parent=5 // pred_check_branch
      %254 = sbr.rel (%p252) target = $region28
    $region27: #{up_conv_forward.3} parent=5 // pred_region
      // Predicated region
      $region29: #{up_conv_forward.3} parent=27 // pred_check
        %p255 = pneg %p46
      $region30: #{up_conv_forward.3} parent=27 // pred_check_branch
        %257 = sbr.rel (%p255) target = $region32
      $region31: #{up_conv_forward.3} parent=27 // pred_region
        %p258 = scmp.lt.s32.totalorder %s21, 1
        %s259 = scalar_select %p258, %s21, 1
        %s260 = smul.addr %s259, 54
        %s261 = smul.addr %s260, 8
        %s262 = scalar_lea.vmem %s0, %s261
      $region32: #{up_conv_forward.3} parent=27 // pred_fallthru
        _
    $region28: #{up_conv_forward.3} parent=5 // pred_fallthru
      _
    %p263 = scmp.le.s32.totalorder 1, %s14
    %p264 = scmp.lt.s32.totalorder %s14, 3
    %p265 = pnand %p263, %p264
    %p266 = pneg %p265
    // Predicated region
    $region33: #{up_conv_forward.3} parent=5 // pred_check
      _
    $region34: #{up_conv_forward.3} parent=5 // pred_check_branch
      %268 = sbr.rel (%p265) target = $region36
    $region35: #{up_conv_forward.3} parent=5 // pred_region
      %s269 = ssub.s32 %s14, 1
      %p270 = scmp.lt.s32.totalorder %s23, 1
      %s271 = scalar_select %p270, %s23, 1
      %s272 = smul.addr %s271, 54
      %s273 = smul.addr %s272, 8
      %s274 = scalar_lea.vmem %s0, %s273
      %p275 = pneg %p52
      %p276 = pneg %p49
      %p277 = pneg %p73
      %p278 = pneg %p70
      %p279 = pneg %p94
      %p280 = pneg %p91
      %p281 = pneg %p115
      %p282 = pneg %p112
      %p283 = pneg %p143
      %p284 = pneg %p140
      %s285 = smul.u32 2, %s24
      %p286 = scmp.lt.s32.totalorder %s23, 1
      %s287 = scalar_select %p286, %s23, 1
      %p288 = scmp.lt.s32.totalorder %s285, 1
      %s289 = scalar_select %p288, %s285, 1
      %s290 = smul.addr %s287, 2
      %s291 = sadd.s32 %s289, %s290
      %s292 = smul.addr %s291, 8
      %s293 = scalar_lea.vmem %s4, %s292
      %p294 = pneg %p171
      %p295 = pneg %p168
      %s296 = smul.u32 2, %s24
      %p297 = scmp.lt.s32.totalorder %s23, 1
      %s298 = scalar_select %p297, %s23, 1
      %p299 = scmp.lt.s32.totalorder %s296, 1
      %s300 = scalar_select %p299, %s296, 1
      %s301 = smul.addr %s298, 2
      %s302 = sadd.s32 %s300, %s301
      %s303 = smul.addr %s302, 8
      %s304 = scalar_lea.vmem %s5, %s303
      %p305 = pneg %p199
      %p306 = pneg %p196
      %s307 = smul.u32 2, %s24
      %p308 = scmp.lt.s32.totalorder %s23, 1
      %s309 = scalar_select %p308, %s23, 1
      %p310 = scmp.lt.s32.totalorder %s307, 1
      %s311 = scalar_select %p310, %s307, 1
      %s312 = smul.addr %s309, 2
      %s313 = sadd.s32 %s311, %s312
      %s314 = smul.addr %s313, 8
      %s315 = scalar_lea.vmem %s6, %s314
      %p316 = pneg %p227
      %p317 = pneg %p224
      %s318 = smul.u32 2, %s24
      %p319 = scmp.lt.s32.totalorder %s23, 1
      %s320 = scalar_select %p319, %s23, 1
      %p321 = scmp.lt.s32.totalorder %s318, 1
      %s322 = scalar_select %p321, %s318, 1
      %s323 = smul.addr %s320, 2
      %s324 = sadd.s32 %s322, %s323
      %s325 = smul.addr %s324, 8
      %s326 = scalar_lea.vmem %s7, %s325
      %p327 = scmp.lt.s32.totalorder %s23, 1
      %s328 = scalar_select %p327, %s23, 1
      %s329 = smul.addr %s328, 54
      %s330 = smul.addr %s329, 8
      %s331 = scalar_lea.vmem %s0, %s330
      %s332 = smul.u32 2, %s24
      %p333 = scmp.lt.s32.totalorder %s23, 1
      %s334 = scalar_select %p333, %s23, 1
      %p335 = scmp.lt.s32.totalorder %s332, 1
      %s336 = scalar_select %p335, %s332, 1
      %s337 = smul.addr %s334, 2
      %s338 = sadd.s32 %s336, %s337
      %s339 = smul.addr %s338, 8
      %s340 = scalar_lea.vmem %s4, %s339
      %s341 = smul.u32 2, %s24
      %s342 = smul.u32 2, %s24
      %p343 = scmp.lt.s32.totalorder %s23, 1
      %s344 = scalar_select %p343, %s23, 1
      %p345 = scmp.lt.s32.totalorder %s342, 1
      %s346 = scalar_select %p345, %s342, 1
      %s347 = smul.addr %s344, 2
      %s348 = sadd.s32 %s346, %s347
      %s349 = smul.addr %s348, 8
      %s350 = scalar_lea.vmem %s5, %s349
      %s351 = smul.u32 2, %s24
      %s352 = smul.u32 2, %s24
      %p353 = scmp.lt.s32.totalorder %s23, 1
      %s354 = scalar_select %p353, %s23, 1
      %p355 = scmp.lt.s32.totalorder %s352, 1
      %s356 = scalar_select %p355, %s352, 1
      %s357 = smul.addr %s354, 2
      %s358 = sadd.s32 %s356, %s357
      %s359 = smul.addr %s358, 8
      %s360 = scalar_lea.vmem %s6, %s359
      %s361 = smul.u32 2, %s24
      %s362 = smul.u32 2, %s24
      %p363 = scmp.lt.s32.totalorder %s23, 1
      %s364 = scalar_select %p363, %s23, 1
      %p365 = scmp.lt.s32.totalorder %s362, 1
      %s366 = scalar_select %p365, %s362, 1
      %s367 = smul.addr %s364, 2
      %s368 = sadd.s32 %s366, %s367
      %s369 = smul.addr %s368, 8
      %s370 = scalar_lea.vmem %s7, %s369
      %s371 = smul.u32 2, %s24
      %s372 = smul.u32 %s24, 16
      %s373 = smul.u32 %s372, 24
      %s374 = scalar_lea.vmem %s331, %s373
      %v375 = vld [vmem:[%s374] sm:$0xff]
      %v376 = vld [vmem:[%s374 + $0x8] sm:$0xff]
      %v377 = vld [vmem:[%s374 + $0x18] sm:$0xff]
      %v378 = vld [vmem:[%s374 + $0x20] sm:$0xff]
      %v379 = vld [vmem:[%s374 + $0x30] sm:$0xff]
      %v380 = vld [vmem:[%s374 + $0x38] sm:$0xff]
      %v381 = vld [vmem:[%s374 + $0x48] sm:$0xff]
      %v382 = vld [vmem:[%s374 + $0x50] sm:$0xff]
      %v383 = vld [vmem:[%s374 + $0x60] sm:$0xff]
      %v384 = vld [vmem:[%s374 + $0x68] sm:$0xff]
      %v385 = vld [vmem:[%s374 + $0x78] sm:$0xff]
      %v386 = vld [vmem:[%s374 + $0x80] sm:$0xff]
      %v387 = vld [vmem:[%s374 + $0x90] sm:$0xff]
      %v388 = vld [vmem:[%s374 + $0x98] sm:$0xff]
      %v389 = vld [vmem:[%s374 + $0xa8] sm:$0xff]
      %v390 = vld [vmem:[%s374 + $0xb0] sm:$0xff]
      %v391 = vld [vmem:[%s374 + $0xc0] sm:$0xff]
      %v392 = vld [vmem:[%s374 + $0xc8] sm:$0xff]
      %v393 = vld [vmem:[%s374 + $0xd8] sm:$0xff]
      %v394 = vld [vmem:[%s374 + $0xe0] sm:$0xff]
      %v395 = vld [vmem:[%s374 + $0xf0] sm:$0xff]
      %v396 = vld [vmem:[%s374 + $0xf8] sm:$0xff]
      %v397 = vld [vmem:[%s374 + $0x108] sm:$0xff]
      %v398 = vld [vmem:[%s374 + $0x110] sm:$0xff]
      %v399 = vld [vmem:[%s374 + $0x120] sm:$0xff]
      %v400 = vld [vmem:[%s374 + $0x128] sm:$0xff]
      %v401 = vld [vmem:[%s374 + $0x138] sm:$0xff]
      %v402 = vld [vmem:[%s374 + $0x140] sm:$0xff]
      %v403 = vld [vmem:[%s374 + $0x150] sm:$0xff]
      %v404 = vld [vmem:[%s374 + $0x158] sm:$0xff]
      %v405 = vld [vmem:[%s374 + $0x168] sm:$0xff]
      %v406 = vld [vmem:[%s374 + $0x170] sm:$0xff]
      %v407 = vld [vmem:[%s1] sm:$0xff]
      %v408 = vld [vmem:[%s374 + $0x1] sm:$0xff]
      %v409 = vld [vmem:[%s374 + $0x9] sm:$0xff]
      %v410 = vld [vmem:[%s374 + $0x19] sm:$0xff]
      %v411 = vld [vmem:[%s374 + $0x21] sm:$0xff]
      %v412 = vld [vmem:[%s374 + $0x31] sm:$0xff]
      %v413 = vld [vmem:[%s374 + $0x39] sm:$0xff]
      %v414 = vld [vmem:[%s374 + $0x49] sm:$0xff]
      %v415 = vld [vmem:[%s374 + $0x51] sm:$0xff]
      %v416 = vld [vmem:[%s374 + $0x61] sm:$0xff]
      %v417 = vld [vmem:[%s374 + $0x69] sm:$0xff]
      %v418 = vld [vmem:[%s374 + $0x79] sm:$0xff]
      %v419 = vld [vmem:[%s374 + $0x81] sm:$0xff]
      %v420 = vld [vmem:[%s374 + $0x91] sm:$0xff]
      %v421 = vld [vmem:[%s374 + $0x99] sm:$0xff]
      %v422 = vld [vmem:[%s374 + $0xa9] sm:$0xff]
      %v423 = vld [vmem:[%s374 + $0xb1] sm:$0xff]
      %v424 = vld [vmem:[%s374 + $0xc1] sm:$0xff]
      %v425 = vld [vmem:[%s374 + $0xc9] sm:$0xff]
      %v426 = vld [vmem:[%s374 + $0xd9] sm:$0xff]
      %v427 = vld [vmem:[%s374 + $0xe1] sm:$0xff]
      %v428 = vld [vmem:[%s374 + $0xf1] sm:$0xff]
      %v429 = vld [vmem:[%s374 + $0xf9] sm:$0xff]
      %v430 = vld [vmem:[%s374 + $0x109] sm:$0xff]
      %v431 = vld [vmem:[%s374 + $0x111] sm:$0xff]
      %v432 = vld [vmem:[%s374 + $0x121] sm:$0xff]
      %v433 = vld [vmem:[%s374 + $0x129] sm:$0xff]
      %v434 = vld [vmem:[%s374 + $0x139] sm:$0xff]
      %v435 = vld [vmem:[%s374 + $0x141] sm:$0xff]
      %v436 = vld [vmem:[%s374 + $0x151] sm:$0xff]
      %v437 = vld [vmem:[%s374 + $0x159] sm:$0xff]
      %v438 = vld [vmem:[%s374 + $0x169] sm:$0xff]
      %v439 = vld [vmem:[%s374 + $0x171] sm:$0xff]
      %s440 = scalar_lea.vmem %s1, 8
      %v441 = vld [vmem:[%s440] sm:$0xff]
      %vm442 = vcmask 31744
      %v444 = vsel %vm442, %v441, 0
      %v447 = vsel %vm442, %v408, 0
      %v450 = vsel %vm442, %v409, 0
      %v453 = vsel %vm442, %v410, 0
      %v456 = vsel %vm442, %v411, 0
      %v459 = vsel %vm442, %v412, 0
      %v462 = vsel %vm442, %v413, 0
      %v465 = vsel %vm442, %v414, 0
      %v468 = vsel %vm442, %v415, 0
      %v471 = vsel %vm442, %v416, 0
      %v474 = vsel %vm442, %v417, 0
      %v477 = vsel %vm442, %v418, 0
      %v480 = vsel %vm442, %v419, 0
      %v483 = vsel %vm442, %v420, 0
      %v486 = vsel %vm442, %v421, 0
      %v489 = vsel %vm442, %v422, 0
      %v492 = vsel %vm442, %v423, 0
      %v495 = vsel %vm442, %v424, 0
      %v498 = vsel %vm442, %v425, 0
      %v501 = vsel %vm442, %v426, 0
      %v504 = vsel %vm442, %v427, 0
      %v507 = vsel %vm442, %v428, 0
      %v510 = vsel %vm442, %v429, 0
      %v513 = vsel %vm442, %v430, 0
      %v516 = vsel %vm442, %v431, 0
      %v519 = vsel %vm442, %v432, 0
      %v522 = vsel %vm442, %v433, 0
      %v525 = vsel %vm442, %v434, 0
      %v528 = vsel %vm442, %v435, 0
      %v531 = vsel %vm442, %v436, 0
      %v534 = vsel %vm442, %v437, 0
      %v537 = vsel %vm442, %v438, 0
      %v540 = vsel %vm442, %v439, 0
      %542 = vmatprep.subr.mxu0 0.0
      %543 = vmatpush1.xpose.msra.mxu0 %v447
      %544 = vmatprep.subr.mxu0 0.0
      %545 = vmatpush1.xpose.msra.mxu0 %v450
      %546 = vmatprep.subr.mxu0 0.0
      %547 = vmatpush1.xpose.msra.mxu0 %v453
      %548 = vmatprep.subr.mxu0 0.0
      %549 = vmatpush1.xpose.msra.mxu0 %v456
      %550 = vmatprep.subr.mxu0 0.0
      %551 = vmatpush1.xpose.msra.mxu0 %v459
      %552 = vmatprep.subr.mxu0 0.0
      %553 = vmatpush1.xpose.msra.mxu0 %v462
      %554 = vmatprep.subr.mxu0 0.0
      %555 = vmatpush1.xpose.msra.mxu0 %v465
      %556 = vmatprep.subr.mxu0 0.0
      %557 = vmatpush1.xpose.msra.mxu0 %v468
      %558 = vmatprep.subr.mxu0 0.0
      %559 = vmatpush1.xpose.msra.mxu0 %v471
      %560 = vmatprep.subr.mxu0 0.0
      %561 = vmatpush1.xpose.msra.mxu0 %v474
      %562 = vmatprep.subr.mxu0 0.0
      %563 = vmatpush1.xpose.msra.mxu0 %v477
      %564 = vmatprep.subr.mxu0 0.0
      %565 = vmatpush1.xpose.msra.mxu0 %v480
      %566 = vmatprep.subr.mxu0 0.0
      %567 = vmatpush1.xpose.msra.mxu0 %v483
      %568 = vmatprep.subr.mxu0 0.0
      %569 = vmatpush1.xpose.msra.mxu0 %v486
      %570 = vmatprep.subr.mxu0 0.0
      %571 = vmatpush1.xpose.msra.mxu0 %v489
      %572 = vmatprep.subr.mxu0 0.0
      %573 = vmatpush1.xpose.msra.mxu0 %v492
      %574 = vmatprep.subr.mxu0 0.0
      %575 = vmatpush1.xpose.msra.mxu0 %v495
      %576 = vmatprep.subr.mxu0 0.0
      %577 = vmatpush1.xpose.msra.mxu0 %v498
      %578 = vmatprep.subr.mxu0 0.0
      %579 = vmatpush1.xpose.msra.mxu0 %v501
      %580 = vmatprep.subr.mxu0 0.0
      %581 = vmatpush1.xpose.msra.mxu0 %v504
      %582 = vmatprep.subr.mxu0 0.0
      %583 = vmatpush1.xpose.msra.mxu0 %v507
      %584 = vmatprep.subr.mxu0 0.0
      %585 = vmatpush1.xpose.msra.mxu0 %v510
      %586 = vmatprep.subr.mxu0 0.0
      %587 = vmatpush1.xpose.msra.mxu0 %v513
      %588 = vmatprep.subr.mxu0 0.0
      %589 = vmatpush1.xpose.msra.mxu0 %v516
      %590 = vmatprep.subr.mxu0 0.0
      %591 = vmatpush1.xpose.msra.mxu0 %v519
      %592 = vmatprep.subr.mxu0 0.0
      %593 = vmatpush1.xpose.msra.mxu0 %v522
      %594 = vmatprep.subr.mxu0 0.0
      %595 = vmatpush1.xpose.msra.mxu0 %v525
      %596 = vmatprep.subr.mxu0 0.0
      %597 = vmatpush1.xpose.msra.mxu0 %v528
      %598 = vmatprep.subr.mxu0 0.0
      %599 = vmatpush1.xpose.msra.mxu0 %v531
      %600 = vmatprep.subr.mxu0 0.0
      %601 = vmatpush1.xpose.msra.mxu0 %v534
      %602 = vmatprep.subr.mxu0 0.0
      %603 = vmatpush1.xpose.msra.mxu0 %v537
      %604 = vmatprep.subr.mxu0 0.0
      %605 = vmatpush1.xpose.msra.mxu0 %v540
      %606 = vmatprep.mubr.f32.mxu0 0.0
      %607 = vmatmul.mubr.f32.gmra.mrb[0].mxu0 %v444
      %v608 = vpop.f32.mrb[0].mxu0
      %v609 = vadd.f32 0.0, %v608
      %v610 = vpop.f32.mrb[0].mxu0
      %v611 = vadd.f32 0.0, %v610
      %612 = vdwg.mxu0
      %v614 = vsel %vm442, %v407, 0
      %v617 = vsel %vm442, %v375, 0
      %v620 = vsel %vm442, %v376, 0
      %v623 = vsel %vm442, %v377, 0
      %v626 = vsel %vm442, %v378, 0
      %v629 = vsel %vm442, %v379, 0
      %v632 = vsel %vm442, %v380, 0
      %v635 = vsel %vm442, %v381, 0
      %v638 = vsel %vm442, %v382, 0
      %v641 = vsel %vm442, %v383, 0
      %v644 = vsel %vm442, %v384, 0
      %v647 = vsel %vm442, %v385, 0
      %v650 = vsel %vm442, %v386, 0
      %v653 = vsel %vm442, %v387, 0
      %v656 = vsel %vm442, %v388, 0
      %v659 = vsel %vm442, %v389, 0
      %v662 = vsel %vm442, %v390, 0
      %v665 = vsel %vm442, %v391, 0
      %v668 = vsel %vm442, %v392, 0
      %v671 = vsel %vm442, %v393, 0
      %v674 = vsel %vm442, %v394, 0
      %v677 = vsel %vm442, %v395, 0
      %v680 = vsel %vm442, %v396, 0
      %v683 = vsel %vm442, %v397, 0
      %v686 = vsel %vm442, %v398, 0
      %v689 = vsel %vm442, %v399, 0
      %v692 = vsel %vm442, %v400, 0
      %v695 = vsel %vm442, %v401, 0
      %v698 = vsel %vm442, %v402, 0
      %v701 = vsel %vm442, %v403, 0
      %v704 = vsel %vm442, %v404, 0
      %v707 = vsel %vm442, %v405, 0
      %v710 = vsel %vm442, %v406, 0
      %712 = vmatprep.subr.mxu0 0.0
      %713 = vmatpush1.xpose.msra.mxu0 %v617
      %714 = vmatprep.subr.mxu0 0.0
      %715 = vmatpush1.xpose.msra.mxu0 %v620
      %716 = vmatprep.subr.mxu0 0.0
      %717 = vmatpush1.xpose.msra.mxu0 %v623
      %718 = vmatprep.subr.mxu0 0.0
      %719 = vmatpush1.xpose.msra.mxu0 %v626
      %720 = vmatprep.subr.mxu0 0.0
      %721 = vmatpush1.xpose.msra.mxu0 %v629
      %722 = vmatprep.subr.mxu0 0.0
      %723 = vmatpush1.xpose.msra.mxu0 %v632
      %724 = vmatprep.subr.mxu0 0.0
      %725 = vmatpush1.xpose.msra.mxu0 %v635
      %726 = vmatprep.subr.mxu0 0.0
      %727 = vmatpush1.xpose.msra.mxu0 %v638
      %728 = vmatprep.subr.mxu0 0.0
      %729 = vmatpush1.xpose.msra.mxu0 %v641
      %730 = vmatprep.subr.mxu0 0.0
      %731 = vmatpush1.xpose.msra.mxu0 %v644
      %732 = vmatprep.subr.mxu0 0.0
      %733 = vmatpush1.xpose.msra.mxu0 %v647
      %734 = vmatprep.subr.mxu0 0.0
      %735 = vmatpush1.xpose.msra.mxu0 %v650
      %736 = vmatprep.subr.mxu0 0.0
      %737 = vmatpush1.xpose.msra.mxu0 %v653
      %738 = vmatprep.subr.mxu0 0.0
      %739 = vmatpush1.xpose.msra.mxu0 %v656
      %740 = vmatprep.subr.mxu0 0.0
      %741 = vmatpush1.xpose.msra.mxu0 %v659
      %742 = vmatprep.subr.mxu0 0.0
      %743 = vmatpush1.xpose.msra.mxu0 %v662
      %744 = vmatprep.subr.mxu0 0.0
      %745 = vmatpush1.xpose.msra.mxu0 %v665
      %746 = vmatprep.subr.mxu0 0.0
      %747 = vmatpush1.xpose.msra.mxu0 %v668
      %748 = vmatprep.subr.mxu0 0.0
      %749 = vmatpush1.xpose.msra.mxu0 %v671
      %750 = vmatprep.subr.mxu0 0.0
      %751 = vmatpush1.xpose.msra.mxu0 %v674
      %752 = vmatprep.subr.mxu0 0.0
      %753 = vmatpush1.xpose.msra.mxu0 %v677
      %754 = vmatprep.subr.mxu0 0.0
      %755 = vmatpush1.xpose.msra.mxu0 %v680
      %756 = vmatprep.subr.mxu0 0.0
      %757 = vmatpush1.xpose.msra.mxu0 %v683
      %758 = vmatprep.subr.mxu0 0.0
      %759 = vmatpush1.xpose.msra.mxu0 %v686
      %760 = vmatprep.subr.mxu0 0.0
      %761 = vmatpush1.xpose.msra.mxu0 %v689
      %762 = vmatprep.subr.mxu0 0.0
      %763 = vmatpush1.xpose.msra.mxu0 %v692
      %764 = vmatprep.subr.mxu0 0.0
      %765 = vmatpush1.xpose.msra.mxu0 %v695
      %766 = vmatprep.subr.mxu0 0.0
      %767 = vmatpush1.xpose.msra.mxu0 %v698
      %768 = vmatprep.subr.mxu0 0.0
      %769 = vmatpush1.xpose.msra.mxu0 %v701
      %770 = vmatprep.subr.mxu0 0.0
      %771 = vmatpush1.xpose.msra.mxu0 %v704
      %772 = vmatprep.subr.mxu0 0.0
      %773 = vmatpush1.xpose.msra.mxu0 %v707
      %774 = vmatprep.subr.mxu0 0.0
      %775 = vmatpush1.xpose.msra.mxu0 %v710
      %776 = vmatprep.mubr.f32.mxu0 0.0
      %777 = vmatmul.mubr.f32.gmra.mrb[0].mxu0 %v614
      %v778 = vpop.f32.mrb[0].mxu0
      %v779 = vadd.f32 %v609, %v778
      %v780 = vpop.f32.mrb[0].mxu0
      %v781 = vadd.f32 %v611, %v780
      %782 = vdwg.mxu0
      %s783 = sadd.s32 %s372, 1
      %s784 = smul.u32 %s783, 24
      %s785 = scalar_lea.vmem %s331, %s784
      %v786 = vld [vmem:[%s785] sm:$0xff]
      %v787 = vld [vmem:[%s785 + $0x8] sm:$0xff]
      %v788 = vld [vmem:[%s785 + $0x18] sm:$0xff]
      %v789 = vld [vmem:[%s785 + $0x20] sm:$0xff]
      %v790 = vld [vmem:[%s785 + $0x30] sm:$0xff]
      %v791 = vld [vmem:[%s785 + $0x38] sm:$0xff]
      %v792 = vld [vmem:[%s785 + $0x48] sm:$0xff]
      %v793 = vld [vmem:[%s785 + $0x50] sm:$0xff]
      %v794 = vld [vmem:[%s785 + $0x60] sm:$0xff]
      %v795 = vld [vmem:[%s785 + $0x68] sm:$0xff]
      %v796 = vld [vmem:[%s785 + $0x78] sm:$0xff]
      %v797 = vld [vmem:[%s785 + $0x80] sm:$0xff]
      %v798 = vld [vmem:[%s785 + $0x90] sm:$0xff]
      %v799 = vld [vmem:[%s785 + $0x98] sm:$0xff]
      %v800 = vld [vmem:[%s785 + $0xa8] sm:$0xff]
      %v801 = vld [vmem:[%s785 + $0xb0] sm:$0xff]
      %v802 = vld [vmem:[%s785 + $0xc0] sm:$0xff]
      %v803 = vld [vmem:[%s785 + $0xc8] sm:$0xff]
      %v804 = vld [vmem:[%s785 + $0xd8] sm:$0xff]
      %v805 = vld [vmem:[%s785 + $0xe0] sm:$0xff]
      %v806 = vld [vmem:[%s785 + $0xf0] sm:$0xff]
      %v807 = vld [vmem:[%s785 + $0xf8] sm:$0xff]
      %v808 = vld [vmem:[%s785 + $0x108] sm:$0xff]
      %v809 = vld [vmem:[%s785 + $0x110] sm:$0xff]
      %v810 = vld [vmem:[%s785 + $0x120] sm:$0xff]
      %v811 = vld [vmem:[%s785 + $0x128] sm:$0xff]
      %v812 = vld [vmem:[%s785 + $0x138] sm:$0xff]
      %v813 = vld [vmem:[%s785 + $0x140] sm:$0xff]
      %v814 = vld [vmem:[%s785 + $0x150] sm:$0xff]
      %v815 = vld [vmem:[%s785 + $0x158] sm:$0xff]
      %v816 = vld [vmem:[%s785 + $0x168] sm:$0xff]
      %v817 = vld [vmem:[%s785 + $0x170] sm:$0xff]
      %s818 = scalar_lea.vmem %s1, 16
      %v819 = vld [vmem:[%s818] sm:$0xff]
      %v821 = vsel %vm442, %v819, 0
      %v824 = vsel %vm442, %v786, 0
      %v827 = vsel %vm442, %v787, 0
      %v830 = vsel %vm442, %v788, 0
      %v833 = vsel %vm442, %v789, 0
      %v836 = vsel %vm442, %v790, 0
      %v839 = vsel %vm442, %v791, 0
      %v842 = vsel %vm442, %v792, 0
      %v845 = vsel %vm442, %v793, 0
      %v848 = vsel %vm442, %v794, 0
      %v851 = vsel %vm442, %v795, 0
      %v854 = vsel %vm442, %v796, 0
      %v857 = vsel %vm442, %v797, 0
      %v860 = vsel %vm442, %v798, 0
      %v863 = vsel %vm442, %v799, 0
      %v866 = vsel %vm442, %v800, 0
      %v869 = vsel %vm442, %v801, 0
      %v872 = vsel %vm442, %v802, 0
      %v875 = vsel %vm442, %v803, 0
      %v878 = vsel %vm442, %v804, 0
      %v881 = vsel %vm442, %v805, 0
      %v884 = vsel %vm442, %v806, 0
      %v887 = vsel %vm442, %v807, 0
      %v890 = vsel %vm442, %v808, 0
      %v893 = vsel %vm442, %v809, 0
      %v896 = vsel %vm442, %v810, 0
      %v899 = vsel %vm442, %v811, 0
      %v902 = vsel %vm442, %v812, 0
      %v905 = vsel %vm442, %v813, 0
      %v908 = vsel %vm442, %v814, 0
      %v911 = vsel %vm442, %v815, 0
      %v914 = vsel %vm442, %v816, 0
      %v917 = vsel %vm442, %v817, 0
      %919 = vmatprep.subr.mxu0 0.0
      %920 = vmatpush1.xpose.msra.mxu0 %v824
      %921 = vmatprep.subr.mxu0 0.0
      %922 = vmatpush1.xpose.msra.mxu0 %v827
      %923 = vmatprep.subr.mxu0 0.0
      %924 = vmatpush1.xpose.msra.mxu0 %v830
      %925 = vmatprep.subr.mxu0 0.0
      %926 = vmatpush1.xpose.msra.mxu0 %v833
      %927 = vmatprep.subr.mxu0 0.0
      %928 = vmatpush1.xpose.msra.mxu0 %v836
      %929 = vmatprep.subr.mxu0 0.0
      %930 = vmatpush1.xpose.msra.mxu0 %v839
      %931 = vmatprep.subr.mxu0 0.0
      %932 = vmatpush1.xpose.msra.mxu0 %v842
      %933 = vmatprep.subr.mxu0 0.0
      %934 = vmatpush1.xpose.msra.mxu0 %v845
      %935 = vmatprep.subr.mxu0 0.0
      %936 = vmatpush1.xpose.msra.mxu0 %v848
      %937 = vmatprep.subr.mxu0 0.0
      %938 = vmatpush1.xpose.msra.mxu0 %v851
      %939 = vmatprep.subr.mxu0 0.0
      %940 = vmatpush1.xpose.msra.mxu0 %v854
      %941 = vmatprep.subr.mxu0 0.0
      %942 = vmatpush1.xpose.msra.mxu0 %v857
      %943 = vmatprep.subr.mxu0 0.0
      %944 = vmatpush1.xpose.msra.mxu0 %v860
      %945 = vmatprep.subr.mxu0 0.0
      %946 = vmatpush1.xpose.msra.mxu0 %v863
      %947 = vmatprep.subr.mxu0 0.0
      %948 = vmatpush1.xpose.msra.mxu0 %v866
      %949 = vmatprep.subr.mxu0 0.0
      %950 = vmatpush1.xpose.msra.mxu0 %v869
      %951 = vmatprep.subr.mxu0 0.0
      %952 = vmatpush1.xpose.msra.mxu0 %v872
      %953 = vmatprep.subr.mxu0 0.0
      %954 = vmatpush1.xpose.msra.mxu0 %v875
      %955 = vmatprep.subr.mxu0 0.0
      %956 = vmatpush1.xpose.msra.mxu0 %v878
      %957 = vmatprep.subr.mxu0 0.0
      %958 = vmatpush1.xpose.msra.mxu0 %v881
      %959 = vmatprep.subr.mxu0 0.0
      %960 = vmatpush1.xpose.msra.mxu0 %v884
      %961 = vmatprep.subr.mxu0 0.0
      %962 = vmatpush1.xpose.msra.mxu0 %v887
      %963 = vmatprep.subr.mxu0 0.0
      %964 = vmatpush1.xpose.msra.mxu0 %v890
      %965 = vmatprep.subr.mxu0 0.0
      %966 = vmatpush1.xpose.msra.mxu0 %v893
      %967 = vmatprep.subr.mxu0 0.0
      %968 = vmatpush1.xpose.msra.mxu0 %v896
      %969 = vmatprep.subr.mxu0 0.0
      %970 = vmatpush1.xpose.msra.mxu0 %v899
      %971 = vmatprep.subr.mxu0 0.0
      %972 = vmatpush1.xpose.msra.mxu0 %v902
      %973 = vmatprep.subr.mxu0 0.0
      %974 = vmatpush1.xpose.msra.mxu0 %v905
      %975 = vmatprep.subr.mxu0 0.0
      %976 = vmatpush1.xpose.msra.mxu0 %v908
      %977 = vmatprep.subr.mxu0 0.0
      %978 = vmatpush1.xpose.msra.mxu0 %v911
      %979 = vmatprep.subr.mxu0 0.0
      %980 = vmatpush1.xpose.msra.mxu0 %v914
      %981 = vmatprep.subr.mxu0 0.0
      %982 = vmatpush1.xpose.msra.mxu0 %v917
      %983 = vmatprep.mubr.f32.mxu0 0.0
      %984 = vmatmul.mubr.f32.gmra.mrb[0].mxu0 %v821
      %v985 = vpop.f32.mrb[0].mxu0
      %v986 = vadd.f32 0.0, %v985
      %v987 = vpop.f32.mrb[0].mxu0
      %v988 = vadd.f32 0.0, %v987
      %989 = vdwg.mxu0
      %v990 = vadd.f32 %v779, %v986
      %v991 = vadd.f32 %v781, %v988
      %v992 = vld [vmem:[%s785 + $0x1] sm:$0xff]
      %v993 = vld [vmem:[%s785 + $0x9] sm:$0xff]
      %v994 = vld [vmem:[%s785 + $0x19] sm:$0xff]
      %v995 = vld [vmem:[%s785 + $0x21] sm:$0xff]
      %v996 = vld [vmem:[%s785 + $0x31] sm:$0xff]
      %v997 = vld [vmem:[%s785 + $0x39] sm:$0xff]
      %v998 = vld [vmem:[%s785 + $0x49] sm:$0xff]
      %v999 = vld [vmem:[%s785 + $0x51] sm:$0xff]
      %v1000 = vld [vmem:[%s785 + $0x61] sm:$0xff]
      %v1001 = vld [vmem:[%s785 + $0x69] sm:$0xff]
      %v1002 = vld [vmem:[%s785 + $0x79] sm:$0xff]
      %v1003 = vld [vmem:[%s785 + $0x81] sm:$0xff]
      %v1004 = vld [vmem:[%s785 + $0x91] sm:$0xff]
      %v1005 = vld [vmem:[%s785 + $0x99] sm:$0xff]
      %v1006 = vld [vmem:[%s785 + $0xa9] sm:$0xff]
      %v1007 = vld [vmem:[%s785 + $0xb1] sm:$0xff]
      %v1008 = vld [vmem:[%s785 + $0xc1] sm:$0xff]
      %v1009 = vld [vmem:[%s785 + $0xc9] sm:$0xff]
      %v1010 = vld [vmem:[%s785 + $0xd9] sm:$0xff]
      %v1011 = vld [vmem:[%s785 + $0xe1] sm:$0xff]
      %v1012 = vld [vmem:[%s785 + $0xf1] sm:$0xff]
      %v1013 = vld [vmem:[%s785 + $0xf9] sm:$0xff]
      %v1014 = vld [vmem:[%s785 + $0x109] sm:$0xff]
      %v1015 = vld [vmem:[%s785 + $0x111] sm:$0xff]
      %v1016 = vld [vmem:[%s785 + $0x121] sm:$0xff]
      %v1017 = vld [vmem:[%s785 + $0x129] sm:$0xff]
      %v1018 = vld [vmem:[%s785 + $0x139] sm:$0xff]
      %v1019 = vld [vmem:[%s785 + $0x141] sm:$0xff]
      %v1020 = vld [vmem:[%s785 + $0x151] sm:$0xff]
      %v1021 = vld [vmem:[%s785 + $0x159] sm:$0xff]
      %v1022 = vld [vmem:[%s785 + $0x169] sm:$0xff]
      %v1023 = vld [vmem:[%s785 + $0x171] sm:$0xff]
      %s1024 = scalar_lea.vmem %s1, 24
      %v1025 = vld [vmem:[%s1024] sm:$0xff]
      %v1027 = vsel %vm442, %v1025, 0
      %v1030 = vsel %vm442, %v992, 0
      %v1033 = vsel %vm442, %v993, 0
      %v1036 = vsel %vm442, %v994, 0
      %v1039 = vsel %vm442, %v995, 0
      %v1042 = vsel %vm442, %v996, 0
      %v1045 = vsel %vm442, %v997, 0
      %v1048 = vsel %vm442, %v998, 0
      %v1051 = vsel %vm442, %v999, 0
      %v1054 = vsel %vm442, %v1000, 0
      %v1057 = vsel %vm442, %v1001, 0
      %v1060 = vsel %vm442, %v1002, 0
      %v1063 = vsel %vm442, %v1003, 0
      %v1066 = vsel %vm442, %v1004, 0
      %v1069 = vsel %vm442, %v1005, 0
      %v1072 = vsel %vm442, %v1006, 0
      %v1075 = vsel %vm442, %v1007, 0
      %v1078 = vsel %vm442, %v1008, 0
      %v1081 = vsel %vm442, %v1009, 0
      %v1084 = vsel %vm442, %v1010, 0
      %v1087 = vsel %vm442, %v1011, 0
      %v1090 = vsel %vm442, %v1012, 0
      %v1093 = vsel %vm442, %v1013, 0
      %v1096 = vsel %vm442, %v1014, 0
      %v1099 = vsel %vm442, %v1015, 0
      %v1102 = vsel %vm442, %v1016, 0
      %v1105 = vsel %vm442, %v1017, 0
      %v1108 = vsel %vm442, %v1018, 0
      %v1111 = vsel %vm442, %v1019, 0
      %v1114 = vsel %vm442, %v1020, 0
      %v1117 = vsel %vm442, %v1021, 0
      %v1120 = vsel %vm442, %v1022, 0
      %v1123 = vsel %vm442, %v1023, 0
      %1125 = vmatprep.subr.mxu0 0.0
      %1126 = vmatpush1.xpose.msra.mxu0 %v1030
      %1127 = vmatprep.subr.mxu0 0.0
      %1128 = vmatpush1.xpose.msra.mxu0 %v1033
      %1129 = vmatprep.subr.mxu0 0.0
      %1130 = vmatpush1.xpose.msra.mxu0 %v1036
      %1131 = vmatprep.subr.mxu0 0.0
      %1132 = vmatpush1.xpose.msra.mxu0 %v1039
      %1133 = vmatprep.subr.mxu0 0.0
      %1134 = vmatpush1.xpose.msra.mxu0 %v1042
      %1135 = vmatprep.subr.mxu0 0.0
      %1136 = vmatpush1.xpose.msra.mxu0 %v1045
      %1137 = vmatprep.subr.mxu0 0.0
      %1138 = vmatpush1.xpose.msra.mxu0 %v1048
      %1139 = vmatprep.subr.mxu0 0.0
      %1140 = vmatpush1.xpose.msra.mxu0 %v1051
      %1141 = vmatprep.subr.mxu0 0.0
      %1142 = vmatpush1.xpose.msra.mxu0 %v1054
      %1143 = vmatprep.subr.mxu0 0.0
      %1144 = vmatpush1.xpose.msra.mxu0 %v1057
      %1145 = vmatprep.subr.mxu0 0.0
      %1146 = vmatpush1.xpose.msra.mxu0 %v1060
      %1147 = vmatprep.subr.mxu0 0.0
      %1148 = vmatpush1.xpose.msra.mxu0 %v1063
      %1149 = vmatprep.subr.mxu0 0.0
      %1150 = vmatpush1.xpose.msra.mxu0 %v1066
      %1151 = vmatprep.subr.mxu0 0.0
      %1152 = vmatpush1.xpose.msra.mxu0 %v1069
      %1153 = vmatprep.subr.mxu0 0.0
      %1154 = vmatpush1.xpose.msra.mxu0 %v1072
      %1155 = vmatprep.subr.mxu0 0.0
      %1156 = vmatpush1.xpose.msra.mxu0 %v1075
      %1157 = vmatprep.subr.mxu0 0.0
      %1158 = vmatpush1.xpose.msra.mxu0 %v1078
      %1159 = vmatprep.subr.mxu0 0.0
      %1160 = vmatpush1.xpose.msra.mxu0 %v1081
      %1161 = vmatprep.subr.mxu0 0.0
      %1162 = vmatpush1.xpose.msra.mxu0 %v1084
      %1163 = vmatprep.subr.mxu0 0.0
      %1164 = vmatpush1.xpose.msra.mxu0 %v1087
      %1165 = vmatprep.subr.mxu0 0.0
      %1166 = vmatpush1.xpose.msra.mxu0 %v1090
      %1167 = vmatprep.subr.mxu0 0.0
      %1168 = vmatpush1.xpose.msra.mxu0 %v1093
      %1169 = vmatprep.subr.mxu0 0.0
      %1170 = vmatpush1.xpose.msra.mxu0 %v1096
      %1171 = vmatprep.subr.mxu0 0.0
      %1172 = vmatpush1.xpose.msra.mxu0 %v1099
      %1173 = vmatprep.subr.mxu0 0.0
      %1174 = vmatpush1.xpose.msra.mxu0 %v1102
      %1175 = vmatprep.subr.mxu0 0.0
      %1176 = vmatpush1.xpose.msra.mxu0 %v1105
      %1177 = vmatprep.subr.mxu0 0.0
      %1178 = vmatpush1.xpose.msra.mxu0 %v1108
      %1179 = vmatprep.subr.mxu0 0.0
      %1180 = vmatpush1.xpose.msra.mxu0 %v1111
      %1181 = vmatprep.subr.mxu0 0.0
      %1182 = vmatpush1.xpose.msra.mxu0 %v1114
      %1183 = vmatprep.subr.mxu0 0.0
      %1184 = vmatpush1.xpose.msra.mxu0 %v1117
      %1185 = vmatprep.subr.mxu0 0.0
      %1186 = vmatpush1.xpose.msra.mxu0 %v1120
      %1187 = vmatprep.subr.mxu0 0.0
      %1188 = vmatpush1.xpose.msra.mxu0 %v1123
      %1189 = vmatprep.mubr.f32.mxu0 0.0
      %1190 = vmatmul.mubr.f32.gmra.mrb[0].mxu0 %v1027
      %v1191 = vpop.f32.mrb[0].mxu0
      %v1192 = vadd.f32 0.0, %v1191
      %v1193 = vpop.f32.mrb[0].mxu0
      %v1194 = vadd.f32 0.0, %v1193
      %1195 = vdwg.mxu0
      %v1196 = vadd.f32 %v990, %v1192
      %v1197 = vadd.f32 %v991, %v1194
      %v1198 = vld [vmem:[%s2] sm:$0xff]
      %1200 = vset.pattern.permute.xlu0 0
      %1201 = vperm.xlu0 %1200, %v1198
      %v1202 = vpop.permute.xlu0 %1201
      %v1204 = vmul.f32 %v1196, %v1202
      %v1205 = vmul.f32 %v1197, %v1202
      %v1206 = vld [vmem:[%s3] sm:$0xff]
      %1208 = vset.pattern.permute.xlu0 0
      %1209 = vperm.xlu0 %1208, %v1206
      %v1210 = vpop.permute.xlu0 %1209
      %v1212 = vadd.f32 %v1204, %v1210
      %v1213 = vadd.f32 %v1205, %v1210
      %v1214 = vmax.f32 %v1212, 0.0
      %v1215 = vmax.f32 %v1213, 0.0
      %1216 = vst [vmem:[%s340] sm:$0xff] %v1214
      %1217 = vst [vmem:[%s340 + $0x8] sm:$0xff] %v1215
      %v1218 = vld [vmem:[%s374 + $0x1] sm:$0xff]
      %v1219 = vld [vmem:[%s374 + $0x9] sm:$0xff]
      %v1220 = vld [vmem:[%s374 + $0x19] sm:$0xff]
      %v1221 = vld [vmem:[%s374 + $0x21] sm:$0xff]
      %v1222 = vld [vmem:[%s374 + $0x31] sm:$0xff]
      %v1223 = vld [vmem:[%s374 + $0x39] sm:$0xff]
      %v1224 = vld [vmem:[%s374 + $0x49] sm:$0xff]
      %v1225 = vld [vmem:[%s374 + $0x51] sm:$0xff]
      %v1226 = vld [vmem:[%s374 + $0x61] sm:$0xff]
      %v1227 = vld [vmem:[%s374 + $0x69] sm:$0xff]
      %v1228 = vld [vmem:[%s374 + $0x79] sm:$0xff]
      %v1229 = vld [vmem:[%s374 + $0x81] sm:$0xff]
      %v1230 = vld [vmem:[%s374 + $0x91] sm:$0xff]
      %v1231 = vld [vmem:[%s374 + $0x99] sm:$0xff]
      %v1232 = vld [vmem:[%s374 + $0xa9] sm:$0xff]
      %v1233 = vld [vmem:[%s374 + $0xb1] sm:$0xff]
      %v1234 = vld [vmem:[%s374 + $0xc1] sm:$0xff]
      %v1235 = vld [vmem:[%s374 + $0xc9] sm:$0xff]
      %v1236 = vld [vmem:[%s374 + $0xd9] sm:$0xff]
      %v1237 = vld [vmem:[%s374 + $0xe1] sm:$0xff]
      %v1238 = vld [vmem:[%s374 + $0xf1] sm:$0xff]
      %v1239 = vld [vmem:[%s374 + $0xf9] sm:$0xff]
      %v1240 = vld [vmem:[%s374 + $0x109] sm:$0xff]
      %v1241 = vld [vmem:[%s374 + $0x111] sm:$0xff]
      %v1242 = vld [vmem:[%s374 + $0x121] sm:$0xff]
      %v1243 = vld [vmem:[%s374 + $0x129] sm:$0xff]
      %v1244 = vld [vmem:[%s374 + $0x139] sm:$0xff]
      %v1245 = vld [vmem:[%s374 + $0x141] sm:$0xff]
      %v1246 = vld [vmem:[%s374 + $0x151] sm:$0xff]
      %v1247 = vld [vmem:[%s374 + $0x159] sm:$0xff]
      %v1248 = vld [vmem:[%s374 + $0x169] sm:$0xff]
      %v1249 = vld [vmem:[%s374 + $0x171] sm:$0xff]
      %s1250 = scalar_lea.vmem %s1, 32
      %v1251 = vld [vmem:[%s1250] sm:$0xff]
      %v1252 = vld [vmem:[%s374 + $0x2] sm:$0xff]
      %v1253 = vld [vmem:[%s374 + $0xa] sm:$0xff]
      %v1254 = vld [vmem:[%s374 + $0x1a] sm:$0xff]
      %v1255 = vld [vmem:[%s374 + $0x22] sm:$0xff]
      %v1256 = vld [vmem:[%s374 + $0x32] sm:$0xff]
      %v1257 = vld [vmem:[%s374 + $0x3a] sm:$0xff]
      %v1258 = vld [vmem:[%s374 + $0x4a] sm:$0xff]
      %v1259 = vld [vmem:[%s374 + $0x52] sm:$0xff]
      %v1260 = vld [vmem:[%s374 + $0x62] sm:$0xff]
      %v1261 = vld [vmem:[%s374 + $0x6a] sm:$0xff]
      %v1262 = vld [vmem:[%s374 + $0x7a] sm:$0xff]
      %v1263 = vld [vmem:[%s374 + $0x82] sm:$0xff]
      %v1264 = vld [vmem:[%s374 + $0x92] sm:$0xff]
      %v1265 = vld [vmem:[%s374 + $0x9a] sm:$0xff]
      %v1266 = vld [vmem:[%s374 + $0xaa] sm:$0xff]
      %v1267 = vld [vmem:[%s374 + $0xb2] sm:$0xff]
      %v1268 = vld [vmem:[%s374 + $0xc2] sm:$0xff]
      %v1269 = vld [vmem:[%s374 + $0xca] sm:$0xff]
      %v1270 = vld [vmem:[%s374 + $0xda] sm:$0xff]
      %v1271 = vld [vmem:[%s374 + $0xe2] sm:$0xff]
      %v1272 = vld [vmem:[%s374 + $0xf2] sm:$0xff]
      %v1273 = vld [vmem:[%s374 + $0xfa] sm:$0xff]
      %v1274 = vld [vmem:[%s374 + $0x10a] sm:$0xff]
      %v1275 = vld [vmem:[%s374 + $0x112] sm:$0xff]
      %v1276 = vld [vmem:[%s374 + $0x122] sm:$0xff]
      %v1277 = vld [vmem:[%s374 + $0x12a] sm:$0xff]
      %v1278 = vld [vmem:[%s374 + $0x13a] sm:$0xff]
      %v1279 = vld [vmem:[%s374 + $0x142] sm:$0xff]
      %v1280 = vld [vmem:[%s374 + $0x152] sm:$0xff]
      %v1281 = vld [vmem:[%s374 + $0x15a] sm:$0xff]
      %v1282 = vld [vmem:[%s374 + $0x16a] sm:$0xff]
      %v1283 = vld [vmem:[%s374 + $0x172] sm:$0xff]
      %s1284 = scalar_lea.vmem %s1, 40
      %v1285 = vld [vmem:[%s1284] sm:$0xff]
      %v1287 = vsel %vm442, %v1285, 0
      %v1290 = vsel %vm442, %v1252, 0
      %v1293 = vsel %vm442, %v1253, 0
      %v1296 = vsel %vm442, %v1254, 0
      %v1299 = vsel %vm442, %v1255, 0
      %v1302 = vsel %vm442, %v1256, 0
      %v1305 = vsel %vm442, %v1257, 0
      %v1308 = vsel %vm442, %v1258, 0
      %v1311 = vsel %vm442, %v1259, 0
      %v1314 = vsel %vm442, %v1260, 0
      %v1317 = vsel %vm442, %v1261, 0
      %v1320 = vsel %vm442, %v1262, 0
      %v1323 = vsel %vm442, %v1263, 0
      %v1326 = vsel %vm442, %v1264, 0
      %v1329 = vsel %vm442, %v1265, 0
      %v1332 = vsel %vm442, %v1266, 0
      %v1335 = vsel %vm442, %v1267, 0
      %v1338 = vsel %vm442, %v1268, 0
      %v1341 = vsel %vm442, %v1269, 0
      %v1344 = vsel %vm442, %v1270, 0
      %v1347 = vsel %vm442, %v1271, 0
      %v1350 = vsel %vm442, %v1272, 0
      %v1353 = vsel %vm442, %v1273, 0
      %v1356 = vsel %vm442, %v1274, 0
      %v1359 = vsel %vm442, %v1275, 0
      %v1362 = vsel %vm442, %v1276, 0
      %v1365 = vsel %vm442, %v1277, 0
      %v1368 = vsel %vm442, %v1278, 0
      %v1371 = vsel %vm442, %v1279, 0
      %v1374 = vsel %vm442, %v1280, 0
      %v1377 = vsel %vm442, %v1281, 0
      %v1380 = vsel %vm442, %v1282, 0
      %v1383 = vsel %vm442, %v1283, 0
      %1385 = vmatprep.subr.mxu0 0.0
      %1386 = vmatpush1.xpose.msra.mxu0 %v1290
      %1387 = vmatprep.subr.mxu0 0.0
      %1388 = vmatpush1.xpose.msra.mxu0 %v1293
      %1389 = vmatprep.subr.mxu0 0.0
      %1390 = vmatpush1.xpose.msra.mxu0 %v1296
      %1391 = vmatprep.subr.mxu0 0.0
      %1392 = vmatpush1.xpose.msra.mxu0 %v1299
      %1393 = vmatprep.subr.mxu0 0.0
      %1394 = vmatpush1.xpose.msra.mxu0 %v1302
      %1395 = vmatprep.subr.mxu0 0.0
      %1396 = vmatpush1.xpose.msra.mxu0 %v1305
      %1397 = vmatprep.subr.mxu0 0.0
      %1398 = vmatpush1.xpose.msra.mxu0 %v1308
      %1399 = vmatprep.subr.mxu0 0.0
      %1400 = vmatpush1.xpose.msra.mxu0 %v1311
      %1401 = vmatprep.subr.mxu0 0.0
      %1402 = vmatpush1.xpose.msra.mxu0 %v1314
      %1403 = vmatprep.subr.mxu0 0.0
      %1404 = vmatpush1.xpose.msra.mxu0 %v1317
      %1405 = vmatprep.subr.mxu0 0.0
      %1406 = vmatpush1.xpose.msra.mxu0 %v1320
      %1407 = vmatprep.subr.mxu0 0.0
      %1408 = vmatpush1.xpose.msra.mxu0 %v1323
      %1409 = vmatprep.subr.mxu0 0.0
      %1410 = vmatpush1.xpose.msra.mxu0 %v1326
      %1411 = vmatprep.subr.mxu0 0.0
      %1412 = vmatpush1.xpose.msra.mxu0 %v1329
      %1413 = vmatprep.subr.mxu0 0.0
      %1414 = vmatpush1.xpose.msra.mxu0 %v1332
      %1415 = vmatprep.subr.mxu0 0.0
      %1416 = vmatpush1.xpose.msra.mxu0 %v1335
      %1417 = vmatprep.subr.mxu0 0.0
      %1418 = vmatpush1.xpose.msra.mxu0 %v1338
      %1419 = vmatprep.subr.mxu0 0.0
      %1420 = vmatpush1.xpose.msra.mxu0 %v1341
      %1421 = vmatprep.subr.mxu0 0.0
      %1422 = vmatpush1.xpose.msra.mxu0 %v1344
      %1423 = vmatprep.subr.mxu0 0.0
      %1424 = vmatpush1.xpose.msra.mxu0 %v1347
      %1425 = vmatprep.subr.mxu0 0.0
      %1426 = vmatpush1.xpose.msra.mxu0 %v1350
      %1427 = vmatprep.subr.mxu0 0.0
      %1428 = vmatpush1.xpose.msra.mxu0 %v1353
      %1429 = vmatprep.subr.mxu0 0.0
      %1430 = vmatpush1.xpose.msra.mxu0 %v1356
      %1431 = vmatprep.subr.mxu0 0.0
      %1432 = vmatpush1.xpose.msra.mxu0 %v1359
      %1433 = vmatprep.subr.mxu0 0.0
      %1434 = vmatpush1.xpose.msra.mxu0 %v1362
      %1435 = vmatprep.subr.mxu0 0.0
      %1436 = vmatpush1.xpose.msra.mxu0 %v1365
      %1437 = vmatprep.subr.mxu0 0.0
      %1438 = vmatpush1.xpose.msra.mxu0 %v1368
      %1439 = vmatprep.subr.mxu0 0.0
      %1440 = vmatpush1.xpose.msra.mxu0 %v1371
      %1441 = vmatprep.subr.mxu0 0.0
      %1442 = vmatpush1.xpose.msra.mxu0 %v1374
      %1443 = vmatprep.subr.mxu0 0.0
      %1444 = vmatpush1.xpose.msra.mxu0 %v1377
      %1445 = vmatprep.subr.mxu0 0.0
      %1446 = vmatpush1.xpose.msra.mxu0 %v1380
      %1447 = vmatprep.subr.mxu0 0.0
      %1448 = vmatpush1.xpose.msra.mxu0 %v1383
      %1449 = vmatprep.mubr.f32.mxu0 0.0
      %1450 = vmatmul.mubr.f32.gmra.mrb[0].mxu0 %v1287
      %v1451 = vpop.f32.mrb[0].mxu0
      %v1452 = vadd.f32 0.0, %v1451
      %v1453 = vpop.f32.mrb[0].mxu0
      %v1454 = vadd.f32 0.0, %v1453
      %1455 = vdwg.mxu0
      %v1457 = vsel %vm442, %v1251, 0
      %v1460 = vsel %vm442, %v1218, 0
      %v1463 = vsel %vm442, %v1219, 0
      %v1466 = vsel %vm442, %v1220, 0
      %v1469 = vsel %vm442, %v1221, 0
      %v1472 = vsel %vm442, %v1222, 0
      %v1475 = vsel %vm442, %v1223, 0
      %v1478 = vsel %vm442, %v1224, 0
      %v1481 = vsel %vm442, %v1225, 0
      %v1484 = vsel %vm442, %v1226, 0
      %v1487 = vsel %vm442, %v1227, 0
      %v1490 = vsel %vm442, %v1228, 0
      %v1493 = vsel %vm442, %v1229, 0
      %v1496 = vsel %vm442, %v1230, 0
      %v1499 = vsel %vm442, %v1231, 0
      %v1502 = vsel %vm442, %v1232, 0
      %v1505 = vsel %vm442, %v1233, 0
      %v1508 = vsel %vm442, %v1234, 0
      %v1511 = vsel %vm442, %v1235, 0
      %v1514 = vsel %vm442, %v1236, 0
      %v1517 = vsel %vm442, %v1237, 0
      %v1520 = vsel %vm442, %v1238, 0
      %v1523 = vsel %vm442, %v1239, 0
      %v1526 = vsel %vm442, %v1240, 0
      %v1529 = vsel %vm442, %v1241, 0
      %v1532 = vsel %vm442, %v1242, 0
      %v1535 = vsel %vm442, %v1243, 0
      %v1538 = vsel %vm442, %v1244, 0
      %v1541 = vsel %vm442, %v1245, 0
      %v1544 = vsel %vm442, %v1246, 0
      %v1547 = vsel %vm442, %v1247, 0
      %v1550 = vsel %vm442, %v1248, 0
      %v1553 = vsel %vm442, %v1249, 0
      %1555 = vmatprep.subr.mxu0 0.0
      %1556 = vmatpush1.xpose.msra.mxu0 %v1460
      %1557 = vmatprep.subr.mxu0 0.0
      %1558 = vmatpush1.xpose.msra.mxu0 %v1463
      %1559 = vmatprep.subr.mxu0 0.0
      %1560 = vmatpush1.xpose.msra.mxu0 %v1466
      %1561 = vmatprep.subr.mxu0 0.0
      %1562 = vmatpush1.xpose.msra.mxu0 %v1469
      %1563 = vmatprep.subr.mxu0 0.0
      %1564 = vmatpush1.xpose.msra.mxu0 %v1472
      %1565 = vmatprep.subr.mxu0 0.0
      %1566 = vmatpush1.xpose.msra.mxu0 %v1475
      %1567 = vmatprep.subr.mxu0 0.0
      %1568 = vmatpush1.xpose.msra.mxu0 %v1478
      %1569 = vmatprep.subr.mxu0 0.0
      %1570 = vmatpush1.xpose.msra.mxu0 %v1481
      %1571 = vmatprep.subr.mxu0 0.0
      %1572 = vmatpush1.xpose.msra.mxu0 %v1484
      %1573 = vmatprep.subr.mxu0 0.0
      %1574 = vmatpush1.xpose.msra.mxu0 %v1487
      %1575 = vmatprep.subr.mxu0 0.0
      %1576 = vmatpush1.xpose.msra.mxu0 %v1490
      %1577 = vmatprep.subr.mxu0 0.0
      %1578 = vmatpush1.xpose.msra.mxu0 %v1493
      %1579 = vmatprep.subr.mxu0 0.0
      %1580 = vmatpush1.xpose.msra.mxu0 %v1496
      %1581 = vmatprep.subr.mxu0 0.0
      %1582 = vmatpush1.xpose.msra.mxu0 %v1499
      %1583 = vmatprep.subr.mxu0 0.0
      %1584 = vmatpush1.xpose.msra.mxu0 %v1502
      %1585 = vmatprep.subr.mxu0 0.0
      %1586 = vmatpush1.xpose.msra.mxu0 %v1505
      %1587 = vmatprep.subr.mxu0 0.0
      %1588 = vmatpush1.xpose.msra.mxu0 %v1508
      %1589 = vmatprep.subr.mxu0 0.0
      %1590 = vmatpush1.xpose.msra.mxu0 %v1511
      %1591 = vmatprep.subr.mxu0 0.0
      %1592 = vmatpush1.xpose.msra.mxu0 %v1514
      %1593 = vmatprep.subr.mxu0 0.0
      %1594 = vmatpush1.xpose.msra.mxu0 %v1517
      %1595 = vmatprep.subr.mxu0 0.0
      %1596 = vmatpush1.xpose.msra.mxu0 %v1520
      %1597 = vmatprep.subr.mxu0 0.0
      %1598 = vmatpush1.xpose.msra.mxu0 %v1523
      %1599 = vmatprep.subr.mxu0 0.0
      %1600 = vmatpush1.xpose.msra.mxu0 %v1526
      %1601 = vmatprep.subr.mxu0 0.0
      %1602 = vmatpush1.xpose.msra.mxu0 %v1529
      %1603 = vmatprep.subr.mxu0 0.0
      %1604 = vmatpush1.xpose.msra.mxu0 %v1532
      %1605 = vmatprep.subr.mxu0 0.0
      %1606 = vmatpush1.xpose.msra.mxu0 %v1535
      %1607 = vmatprep.subr.mxu0 0.0
      %1608 = vmatpush1.xpose.msra.mxu0 %v1538
      %1609 = vmatprep.subr.mxu0 0.0
      %1610 = vmatpush1.xpose.msra.mxu0 %v1541
      %1611 = vmatprep.subr.mxu0 0.0
      %1612 = vmatpush1.xpose.msra.mxu0 %v1544
      %1613 = vmatprep.subr.mxu0 0.0
      %1614 = vmatpush1.xpose.msra.mxu0 %v1547
      %1615 = vmatprep.subr.mxu0 0.0
      %1616 = vmatpush1.xpose.msra.mxu0 %v1550
      %1617 = vmatprep.subr.mxu0 0.0
      %1618 = vmatpush1.xpose.msra.mxu0 %v1553
      %1619 = vmatprep.mubr.f32.mxu0 0.0
      %1620 = vmatmul.mubr.f32.gmra.mrb[0].mxu0 %v1457
      %v1621 = vpop.f32.mrb[0].mxu0
      %v1622 = vadd.f32 %v1452, %v1621
      %v1623 = vpop.f32.mrb[0].mxu0
      %v1624 = vadd.f32 %v1454, %v1623
      %1625 = vdwg.mxu0
      %v1626 = vld [vmem:[%s785 + $0x1] sm:$0xff]
      %v1627 = vld [vmem:[%s785 + $0x9] sm:$0xff]
      %v1628 = vld [vmem:[%s785 + $0x19] sm:$0xff]
      %v1629 = vld [vmem:[%s785 + $0x21] sm:$0xff]
      %v1630 = vld [vmem:[%s785 + $0x31] sm:$0xff]
      %v1631 = vld [vmem:[%s785 + $0x39] sm:$0xff]
      %v1632 = vld [vmem:[%s785 + $0x49] sm:$0xff]
      %v1633 = vld [vmem:[%s785 + $0x51] sm:$0xff]
      %v1634 = vld [vmem:[%s785 + $0x61] sm:$0xff]
      %v1635 = vld [vmem:[%s785 + $0x69] sm:$0xff]
      %v1636 = vld [vmem:[%s785 + $0x79] sm:$0xff]
      %v1637 = vld [vmem:[%s785 + $0x81] sm:$0xff]
      %v1638 = vld [vmem:[%s785 + $0x91] sm:$0xff]
      %v1639 = vld [vmem:[%s785 + $0x99] sm:$0xff]
      %v1640 = vld [vmem:[%s785 + $0xa9] sm:$0xff]
      %v1641 = vld [vmem:[%s785 + $0xb1] sm:$0xff]
      %v1642 = vld [vmem:[%s785 + $0xc1] sm:$0xff]
      %v1643 = vld [vmem:[%s785 + $0xc9] sm:$0xff]
      %v1644 = vld [vmem:[%s785 + $0xd9] sm:$0xff]
      %v1645 = vld [vmem:[%s785 + $0xe1] sm:$0xff]
      %v1646 = vld [vmem:[%s785 + $0xf1] sm:$0xff]
      %v1647 = vld [vmem:[%s785 + $0xf9] sm:$0xff]
      %v1648 = vld [vmem:[%s785 + $0x109] sm:$0xff]
      %v1649 = vld [vmem:[%s785 + $0x111] sm:$0xff]
      %v1650 = vld [vmem:[%s785 + $0x121] sm:$0xff]
      %v1651 = vld [vmem:[%s785 + $0x129] sm:$0xff]
      %v1652 = vld [vmem:[%s785 + $0x139] sm:$0xff]
      %v1653 = vld [vmem:[%s785 + $0x141] sm:$0xff]
      %v1654 = vld [vmem:[%s785 + $0x151] sm:$0xff]
      %v1655 = vld [vmem:[%s785 + $0x159] sm:$0xff]
      %v1656 = vld [vmem:[%s785 + $0x169] sm:$0xff]
      %v1657 = vld [vmem:[%s785 + $0x171] sm:$0xff]
      %s1658 = scalar_lea.vmem %s1, 48
      %v1659 = vld [vmem:[%s1658] sm:$0xff]
      %v1661 = vsel %vm442, %v1659, 0
      %v1664 = vsel %vm442, %v1626, 0
      %v1667 = vsel %vm442, %v1627, 0
      %v1670 = vsel %vm442, %v1628, 0
      %v1673 = vsel %vm442, %v1629, 0
      %v1676 = vsel %vm442, %v1630, 0
      %v1679 = vsel %vm442, %v1631, 0
      %v1682 = vsel %vm442, %v1632, 0
      %v1685 = vsel %vm442, %v1633, 0
      %v1688 = vsel %vm442, %v1634, 0
      %v1691 = vsel %vm442, %v1635, 0
      %v1694 = vsel %vm442, %v1636, 0
      %v1697 = vsel %vm442, %v1637, 0
      %v1700 = vsel %vm442, %v1638, 0
      %v1703 = vsel %vm442, %v1639, 0
      %v1706 = vsel %vm442, %v1640, 0
      %v1709 = vsel %vm442, %v1641, 0
      %v1712 = vsel %vm442, %v1642, 0
      %v1715 = vsel %vm442, %v1643, 0
      %v1718 = vsel %vm442, %v1644, 0
      %v1721 = vsel %vm442, %v1645, 0
      %v1724 = vsel %vm442, %v1646, 0
      %v1727 = vsel %vm442, %v1647, 0
      %v1730 = vsel %vm442, %v1648, 0
      %v1733 = vsel %vm442, %v1649, 0
      %v1736 = vsel %vm442, %v1650, 0
      %v1739 = vsel %vm442, %v1651, 0
      %v1742 = vsel %vm442, %v1652, 0
      %v1745 = vsel %vm442, %v1653, 0
      %v1748 = vsel %vm442, %v1654, 0
      %v1751 = vsel %vm442, %v1655, 0
      %v1754 = vsel %vm442, %v1656, 0
      %v1757 = vsel %vm442, %v1657, 0
      %1759 = vmatprep.subr.mxu0 0.0
      %1760 = vmatpush1.xpose.msra.mxu0 %v1664
      %1761 = vmatprep.subr.mxu0 0.0
      %1762 = vmatpush1.xpose.msra.mxu0 %v1667
      %1763 = vmatprep.subr.mxu0 0.0
      %1764 = vmatpush1.xpose.msra.mxu0 %v1670
      %1765 = vmatprep.subr.mxu0 0.0
      %1766 = vmatpush1.xpose.msra.mxu0 %v1673
      %1767 = vmatprep.subr.mxu0 0.0
      %1768 = vmatpush1.xpose.msra.mxu0 %v1676
      %1769 = vmatprep.subr.mxu0 0.0
      %1770 = vmatpush1.xpose.msra.mxu0 %v1679
      %1771 = vmatprep.subr.mxu0 0.0
      %1772 = vmatpush1.xpose.msra.mxu0 %v1682
      %1773 = vmatprep.subr.mxu0 0.0
      %1774 = vmatpush1.xpose.msra.mxu0 %v1685
      %1775 = vmatprep.subr.mxu0 0.0
      %1776 = vmatpush1.xpose.msra.mxu0 %v1688
      %1777 = vmatprep.subr.mxu0 0.0
      %1778 = vmatpush1.xpose.msra.mxu0 %v1691
      %1779 = vmatprep.subr.mxu0 0.0
      %1780 = vmatpush1.xpose.msra.mxu0 %v1694
      %1781 = vmatprep.subr.mxu0 0.0
      %1782 = vmatpush1.xpose.msra.mxu0 %v1697
      %1783 = vmatprep.subr.mxu0 0.0
      %1784 = vmatpush1.xpose.msra.mxu0 %v1700
      %1785 = vmatprep.subr.mxu0 0.0
      %1786 = vmatpush1.xpose.msra.mxu0 %v1703
      %1787 = vmatprep.subr.mxu0 0.0
      %1788 = vmatpush1.xpose.msra.mxu0 %v1706
      %1789 = vmatprep.subr.mxu0 0.0
      %1790 = vmatpush1.xpose.msra.mxu0 %v1709
      %1791 = vmatprep.subr.mxu0 0.0
      %1792 = vmatpush1.xpose.msra.mxu0 %v1712
      %1793 = vmatprep.subr.mxu0 0.0
      %1794 = vmatpush1.xpose.msra.mxu0 %v1715
      %1795 = vmatprep.subr.mxu0 0.0
      %1796 = vmatpush1.xpose.msra.mxu0 %v1718
      %1797 = vmatprep.subr.mxu0 0.0
      %1798 = vmatpush1.xpose.msra.mxu0 %v1721
      %1799 = vmatprep.subr.mxu0 0.0
      %1800 = vmatpush1.xpose.msra.mxu0 %v1724
      %1801 = vmatprep.subr.mxu0 0.0
      %1802 = vmatpush1.xpose.msra.mxu0 %v1727
      %1803 = vmatprep.subr.mxu0 0.0
      %1804 = vmatpush1.xpose.msra.mxu0 %v1730
      %1805 = vmatprep.subr.mxu0 0.0
      %1806 = vmatpush1.xpose.msra.mxu0 %v1733
      %1807 = vmatprep.subr.mxu0 0.0
      %1808 = vmatpush1.xpose.msra.mxu0 %v1736
      %1809 = vmatprep.subr.mxu0 0.0
      %1810 = vmatpush1.xpose.msra.mxu0 %v1739
      %1811 = vmatprep.subr.mxu0 0.0
      %1812 = vmatpush1.xpose.msra.mxu0 %v1742
      %1813 = vmatprep.subr.mxu0 0.0
      %1814 = vmatpush1.xpose.msra.mxu0 %v1745
      %1815 = vmatprep.subr.mxu0 0.0
      %1816 = vmatpush1.xpose.msra.mxu0 %v1748
      %1817 = vmatprep.subr.mxu0 0.0
      %1818 = vmatpush1.xpose.msra.mxu0 %v1751
      %1819 = vmatprep.subr.mxu0 0.0
      %1820 = vmatpush1.xpose.msra.mxu0 %v1754
      %1821 = vmatprep.subr.mxu0 0.0
      %1822 = vmatpush1.xpose.msra.mxu0 %v1757
      %1823 = vmatprep.mubr.f32.mxu0 0.0
      %1824 = vmatmul.mubr.f32.gmra.mrb[0].mxu0 %v1661
      %v1825 = vpop.f32.mrb[0].mxu0
      %v1826 = vadd.f32 0.0, %v1825
      %v1827 = vpop.f32.mrb[0].mxu0
      %v1828 = vadd.f32 0.0, %v1827
      %1829 = vdwg.mxu0
      %v1830 = vadd.f32 %v1622, %v1826
      %v1831 = vadd.f32 %v1624, %v1828
      %v1832 = vld [vmem:[%s785 + $0x2] sm:$0xff]
      %v1833 = vld [vmem:[%s785 + $0xa] sm:$0xff]
      %v1834 = vld [vmem:[%s785 + $0x1a] sm:$0xff]
      %v1835 = vld [vmem:[%s785 + $0x22] sm:$0xff]
      %v1836 = vld [vmem:[%s785 + $0x32] sm:$0xff]
      %v1837 = vld [vmem:[%s785 + $0x3a] sm:$0xff]
      %v1838 = vld [vmem:[%s785 + $0x4a] sm:$0xff]
      %v1839 = vld [vmem:[%s785 + $0x52] sm:$0xff]
      %v1840 = vld [vmem:[%s785 + $0x62] sm:$0xff]
      %v1841 = vld [vmem:[%s785 + $0x6a] sm:$0xff]
      %v1842 = vld [vmem:[%s785 + $0x7a] sm:$0xff]
      %v1843 = vld [vmem:[%s785 + $0x82] sm:$0xff]
      %v1844 = vld [vmem:[%s785 + $0x92] sm:$0xff]
      %v1845 = vld [vmem:[%s785 + $0x9a] sm:$0xff]
      %v1846 = vld [vmem:[%s785 + $0xaa] sm:$0xff]
      %v1847 = vld [vmem:[%s785 + $0xb2] sm:$0xff]
      %v1848 = vld [vmem:[%s785 + $0xc2] sm:$0xff]
      %v1849 = vld [vmem:[%s785 + $0xca] sm:$0xff]
      %v1850 = vld [vmem:[%s785 + $0xda] sm:$0xff]
      %v1851 = vld [vmem:[%s785 + $0xe2] sm:$0xff]
      %v1852 = vld [vmem:[%s785 + $0xf2] sm:$0xff]
      %v1853 = vld [vmem:[%s785 + $0xfa] sm:$0xff]
      %v1854 = vld [vmem:[%s785 + $0x10a] sm:$0xff]
      %v1855 = vld [vmem:[%s785 + $0x112] sm:$0xff]
      %v1856 = vld [vmem:[%s785 + $0x122] sm:$0xff]
      %v1857 = vld [vmem:[%s785 + $0x12a] sm:$0xff]
      %v1858 = vld [vmem:[%s785 + $0x13a] sm:$0xff]
      %v1859 = vld [vmem:[%s785 + $0x142] sm:$0xff]
      %v1860 = vld [vmem:[%s785 + $0x152] sm:$0xff]
      %v1861 = vld [vmem:[%s785 + $0x15a] sm:$0xff]
      %v1862 = vld [vmem:[%s785 + $0x16a] sm:$0xff]
      %v1863 = vld [vmem:[%s785 + $0x172] sm:$0xff]
      %s1864 = scalar_lea.vmem %s1, 56
      %v1865 = vld [vmem:[%s1864] sm:$0xff]
      %v1867 = vsel %vm442, %v1865, 0
      %v1870 = vsel %vm442, %v1832, 0
      %v1873 = vsel %vm442, %v1833, 0
      %v1876 = vsel %vm442, %v1834, 0
      %v1879 = vsel %vm442, %v1835, 0
      %v1882 = vsel %vm442, %v1836, 0
      %v1885 = vsel %vm442, %v1837, 0
      %v1888 = vsel %vm442, %v1838, 0
      %v1891 = vsel %vm442, %v1839, 0
      %v1894 = vsel %vm442, %v1840, 0
      %v1897 = vsel %vm442, %v1841, 0
      %v1900 = vsel %vm442, %v1842, 0
      %v1903 = vsel %vm442, %v1843, 0
      %v1906 = vsel %vm442, %v1844, 0
      %v1909 = vsel %vm442, %v1845, 0
      %v1912 = vsel %vm442, %v1846, 0
      %v1915 = vsel %vm442, %v1847, 0
      %v1918 = vsel %vm442, %v1848, 0
      %v1921 = vsel %vm442, %v1849, 0
      %v1924 = vsel %vm442, %v1850, 0
      %v1927 = vsel %vm442, %v1851, 0
      %v1930 = vsel %vm442, %v1852, 0
      %v1933 = vsel %vm442, %v1853, 0
      %v1936 = vsel %vm442, %v1854, 0
      %v1939 = vsel %vm442, %v1855, 0
      %v1942 = vsel %vm442, %v1856, 0
      %v1945 = vsel %vm442, %v1857, 0
      %v1948 = vsel %vm442, %v1858, 0
      %v1951 = vsel %vm442, %v1859, 0
      %v1954 = vsel %vm442, %v1860, 0
      %v1957 = vsel %vm442, %v1861, 0
      %v1960 = vsel %vm442, %v1862, 0
      %v1963 = vsel %vm442, %v1863, 0
      %1965 = vmatprep.subr.mxu0 0.0
      %1966 = vmatpush1.xpose.msra.mxu0 %v1870
      %1967 = vmatprep.subr.mxu0 0.0
      %1968 = vmatpush1.xpose.msra.mxu0 %v1873
      %1969 = vmatprep.subr.mxu0 0.0
      %1970 = vmatpush1.xpose.msra.mxu0 %v1876
      %1971 = vmatprep.subr.mxu0 0.0
      %1972 = vmatpush1.xpose.msra.mxu0 %v1879
      %1973 = vmatprep.subr.mxu0 0.0
      %1974 = vmatpush1.xpose.msra.mxu0 %v1882
      %1975 = vmatprep.subr.mxu0 0.0
      %1976 = vmatpush1.xpose.msra.mxu0 %v1885
      %1977 = vmatprep.subr.mxu0 0.0
      %1978 = vmatpush1.xpose.msra.mxu0 %v1888
      %1979 = vmatprep.subr.mxu0 0.0
      %1980 = vmatpush1.xpose.msra.mxu0 %v1891
      %1981 = vmatprep.subr.mxu0 0.0
      %1982 = vmatpush1.xpose.msra.mxu0 %v1894
      %1983 = vmatprep.subr.mxu0 0.0
      %1984 = vmatpush1.xpose.msra.mxu0 %v1897
      %1985 = vmatprep.subr.mxu0 0.0
      %1986 = vmatpush1.xpose.msra.mxu0 %v1900
      %1987 = vmatprep.subr.mxu0 0.0
      %1988 = vmatpush1.xpose.msra.mxu0 %v1903
      %1989 = vmatprep.subr.mxu0 0.0
      %1990 = vmatpush1.xpose.msra.mxu0 %v1906
      %1991 = vmatprep.subr.mxu0 0.0
      %1992 = vmatpush1.xpose.msra.mxu0 %v1909
      %1993 = vmatprep.subr.mxu0 0.0
      %1994 = vmatpush1.xpose.msra.mxu0 %v1912
      %1995 = vmatprep.subr.mxu0 0.0
      %1996 = vmatpush1.xpose.msra.mxu0 %v1915
      %1997 = vmatprep.subr.mxu0 0.0
      %1998 = vmatpush1.xpose.msra.mxu0 %v1918
      %1999 = vmatprep.subr.mxu0 0.0
      %2000 = vmatpush1.xpose.msra.mxu0 %v1921
      %2001 = vmatprep.subr.mxu0 0.0
      %2002 = vmatpush1.xpose.msra.mxu0 %v1924
      %2003 = vmatprep.subr.mxu0 0.0
      %2004 = vmatpush1.xpose.msra.mxu0 %v1927
      %2005 = vmatprep.subr.mxu0 0.0
      %2006 = vmatpush1.xpose.msra.mxu0 %v1930
      %2007 = vmatprep.subr.mxu0 0.0
      %2008 = vmatpush1.xpose.msra.mxu0 %v1933
      %2009 = vmatprep.subr.mxu0 0.0
      %2010 = vmatpush1.xpose.msra.mxu0 %v1936
      %2011 = vmatprep.subr.mxu0 0.0
      %2012 = vmatpush1.xpose.msra.mxu0 %v1939
      %2013 = vmatprep.subr.mxu0 0.0
      %2014 = vmatpush1.xpose.msra.mxu0 %v1942
      %2015 = vmatprep.subr.mxu0 0.0
      %2016 = vmatpush1.xpose.msra.mxu0 %v1945
      %2017 = vmatprep.subr.mxu0 0.0
      %2018 = vmatpush1.xpose.msra.mxu0 %v1948
      %2019 = vmatprep.subr.mxu0 0.0
      %2020 = vmatpush1.xpose.msra.mxu0 %v1951
      %2021 = vmatprep.subr.mxu0 0.0
      %2022 = vmatpush1.xpose.msra.mxu0 %v1954
      %2023 = vmatprep.subr.mxu0 0.0
      %2024 = vmatpush1.xpose.msra.mxu0 %v1957
      %2025 = vmatprep.subr.mxu0 0.0
      %2026 = vmatpush1.xpose.msra.mxu0 %v1960
      %2027 = vmatprep.subr.mxu0 0.0
      %2028 = vmatpush1.xpose.msra.mxu0 %v1963
      %2029 = vmatprep.mubr.f32.mxu0 0.0
      %2030 = vmatmul.mubr.f32.gmra.mrb[0].mxu0 %v1867
      %v2031 = vpop.f32.mrb[0].mxu0
      %v2032 = vadd.f32 0.0, %v2031
      %v2033 = vpop.f32.mrb[0].mxu0
      %v2034 = vadd.f32 0.0, %v2033
      %2035 = vdwg.mxu0
      %v2036 = vadd.f32 %v1830, %v2032
      %v2037 = vadd.f32 %v1831, %v2034
      %v2038 = vld [vmem:[%s2] sm:$0xff]
      %2040 = vset.pattern.permute.xlu0 0
      %2041 = vperm.xlu0 %2040, %v2038
      %v2042 = vpop.permute.xlu0 %2041
      %v2044 = vmul.f32 %v2036, %v2042
      %v2045 = vmul.f32 %v2037, %v2042
      %v2046 = vld [vmem:[%s3] sm:$0xff]
      %2048 = vset.pattern.permute.xlu0 0
      %2049 = vperm.xlu0 %2048, %v2046
      %v2050 = vpop.permute.xlu0 %2049
      %v2052 = vadd.f32 %v2044, %v2050
      %v2053 = vadd.f32 %v2045, %v2050
      %v2054 = vmax.f32 %v2052, 0.0
      %v2055 = vmax.f32 %v2053, 0.0
      %2056 = vst [vmem:[%s350] sm:$0xff] %v2054
      %2057 = vst [vmem:[%s350 + $0x8] sm:$0xff] %v2055
      %v2058 = vld [vmem:[%s785] sm:$0xff]
      %v2059 = vld [vmem:[%s785 + $0x8] sm:$0xff]
      %v2060 = vld [vmem:[%s785 + $0x18] sm:$0xff]
      %v2061 = vld [vmem:[%s785 + $0x20] sm:$0xff]
      %v2062 = vld [vmem:[%s785 + $0x30] sm:$0xff]
      %v2063 = vld [vmem:[%s785 + $0x38] sm:$0xff]
      %v2064 = vld [vmem:[%s785 + $0x48] sm:$0xff]
      %v2065 = vld [vmem:[%s785 + $0x50] sm:$0xff]
      %v2066 = vld [vmem:[%s785 + $0x60] sm:$0xff]
      %v2067 = vld [vmem:[%s785 + $0x68] sm:$0xff]
      %v2068 = vld [vmem:[%s785 + $0x78] sm:$0xff]
      %v2069 = vld [vmem:[%s785 + $0x80] sm:$0xff]
      %v2070 = vld [vmem:[%s785 + $0x90] sm:$0xff]
      %v2071 = vld [vmem:[%s785 + $0x98] sm:$0xff]
      %v2072 = vld [vmem:[%s785 + $0xa8] sm:$0xff]
      %v2073 = vld [vmem:[%s785 + $0xb0] sm:$0xff]
      %v2074 = vld [vmem:[%s785 + $0xc0] sm:$0xff]
      %v2075 = vld [vmem:[%s785 + $0xc8] sm:$0xff]
      %v2076 = vld [vmem:[%s785 + $0xd8] sm:$0xff]
      %v2077 = vld [vmem:[%s785 + $0xe0] sm:$0xff]
      %v2078 = vld [vmem:[%s785 + $0xf0] sm:$0xff]
      %v2079 = vld [vmem:[%s785 + $0xf8] sm:$0xff]
      %v2080 = vld [vmem:[%s785 + $0x108] sm:$0xff]
      %v2081 = vld [vmem:[%s785 + $0x110] sm:$0xff]
      %v2082 = vld [vmem:[%s785 + $0x120] sm:$0xff]
      %v2083 = vld [vmem:[%s785 + $0x128] sm:$0xff]
      %v2084 = vld [vmem:[%s785 + $0x138] sm:$0xff]
      %v2085 = vld [vmem:[%s785 + $0x140] sm:$0xff]
      %v2086 = vld [vmem:[%s785 + $0x150] sm:$0xff]
      %v2087 = vld [vmem:[%s785 + $0x158] sm:$0xff]
      %v2088 = vld [vmem:[%s785 + $0x168] sm:$0xff]
      %v2089 = vld [vmem:[%s785 + $0x170] sm:$0xff]
      %s2090 = scalar_lea.vmem %s1, 64
      %v2091 = vld [vmem:[%s2090] sm:$0xff]
      %v2092 = vld [vmem:[%s785 + $0x1] sm:$0xff]
      %v2093 = vld [vmem:[%s785 + $0x9] sm:$0xff]
      %v2094 = vld [vmem:[%s785 + $0x19] sm:$0xff]
      %v2095 = vld [vmem:[%s785 + $0x21] sm:$0xff]
      %v2096 = vld [vmem:[%s785 + $0x31] sm:$0xff]
      %v2097 = vld [vmem:[%s785 + $0x39] sm:$0xff]
      %v2098 = vld [vmem:[%s785 + $0x49] sm:$0xff]
      %v2099 = vld [vmem:[%s785 + $0x51] sm:$0xff]
      %v2100 = vld [vmem:[%s785 + $0x61] sm:$0xff]
      %v2101 = vld [vmem:[%s785 + $0x69] sm:$0xff]
      %v2102 = vld [vmem:[%s785 + $0x79] sm:$0xff]
      %v2103 = vld [vmem:[%s785 + $0x81] sm:$0xff]
      %v2104 = vld [vmem:[%s785 + $0x91] sm:$0xff]
      %v2105 = vld [vmem:[%s785 + $0x99] sm:$0xff]
      %v2106 = vld [vmem:[%s785 + $0xa9] sm:$0xff]
      %v2107 = vld [vmem:[%s785 + $0xb1] sm:$0xff]
      %v2108 = vld [vmem:[%s785 + $0xc1] sm:$0xff]
      %v2109 = vld [vmem:[%s785 + $0xc9] sm:$0xff]
      %v2110 = vld [vmem:[%s785 + $0xd9] sm:$0xff]
      %v2111 = vld [vmem:[%s785 + $0xe1] sm:$0xff]
      %v2112 = vld [vmem:[%s785 + $0xf1] sm:$0xff]
      %v2113 = vld [vmem:[%s785 + $0xf9] sm:$0xff]
      %v2114 = vld [vmem:[%s785 + $0x109] sm:$0xff]
      %v2115 = vld [vmem:[%s785 + $0x111] sm:$0xff]
      %v2116 = vld [vmem:[%s785 + $0x121] sm:$0xff]
      %v2117 = vld [vmem:[%s785 + $0x129] sm:$0xff]
      %v2118 = vld [vmem:[%s785 + $0x139] sm:$0xff]
      %v2119 = vld [vmem:[%s785 + $0x141] sm:$0xff]
      %v2120 = vld [vmem:[%s785 + $0x151] sm:$0xff]
      %v2121 = vld [vmem:[%s785 + $0x159] sm:$0xff]
      %v2122 = vld [vmem:[%s785 + $0x169] sm:$0xff]
      %v2123 = vld [vmem:[%s785 + $0x171] sm:$0xff]
      %s2124 = scalar_lea.vmem %s1, 72
      %v2125 = vld [vmem:[%s2124] sm:$0xff]
      %v2127 = vsel %vm442, %v2125, 0
      %v2130 = vsel %vm442, %v2092, 0
      %v2133 = vsel %vm442, %v2093, 0
      %v2136 = vsel %vm442, %v2094, 0
      %v2139 = vsel %vm442, %v2095, 0
      %v2142 = vsel %vm442, %v2096, 0
      %v2145 = vsel %vm442, %v2097, 0
      %v2148 = vsel %vm442, %v2098, 0
      %v2151 = vsel %vm442, %v2099, 0
      %v2154 = vsel %vm442, %v2100, 0
      %v2157 = vsel %vm442, %v2101, 0
      %v2160 = vsel %vm442, %v2102, 0
      %v2163 = vsel %vm442, %v2103, 0
      %v2166 = vsel %vm442, %v2104, 0
      %v2169 = vsel %vm442, %v2105, 0
      %v2172 = vsel %vm442, %v2106, 0
      %v2175 = vsel %vm442, %v2107, 0
      %v2178 = vsel %vm442, %v2108, 0
      %v2181 = vsel %vm442, %v2109, 0
      %v2184 = vsel %vm442, %v2110, 0
      %v2187 = vsel %vm442, %v2111, 0
      %v2190 = vsel %vm442, %v2112, 0
      %v2193 = vsel %vm442, %v2113, 0
      %v2196 = vsel %vm442, %v2114, 0
      %v2199 = vsel %vm442, %v2115, 0
      %v2202 = vsel %vm442, %v2116, 0
      %v2205 = vsel %vm442, %v2117, 0
      %v2208 = vsel %vm442, %v2118, 0
      %v2211 = vsel %vm442, %v2119, 0
      %v2214 = vsel %vm442, %v2120, 0
      %v2217 = vsel %vm442, %v2121, 0
      %v2220 = vsel %vm442, %v2122, 0
      %v2223 = vsel %vm442, %v2123, 0
      %2225 = vmatprep.subr.mxu0 0.0
      %2226 = vmatpush1.xpose.msra.mxu0 %v2130
      %2227 = vmatprep.subr.mxu0 0.0
      %2228 = vmatpush1.xpose.msra.mxu0 %v2133
      %2229 = vmatprep.subr.mxu0 0.0
      %2230 = vmatpush1.xpose.msra.mxu0 %v2136
      %2231 = vmatprep.subr.mxu0 0.0
      %2232 = vmatpush1.xpose.msra.mxu0 %v2139
      %2233 = vmatprep.subr.mxu0 0.0
      %2234 = vmatpush1.xpose.msra.mxu0 %v2142
      %2235 = vmatprep.subr.mxu0 0.0
      %2236 = vmatpush1.xpose.msra.mxu0 %v2145
      %2237 = vmatprep.subr.mxu0 0.0
      %2238 = vmatpush1.xpose.msra.mxu0 %v2148
      %2239 = vmatprep.subr.mxu0 0.0
      %2240 = vmatpush1.xpose.msra.mxu0 %v2151
      %2241 = vmatprep.subr.mxu0 0.0
      %2242 = vmatpush1.xpose.msra.mxu0 %v2154
      %2243 = vmatprep.subr.mxu0 0.0
      %2244 = vmatpush1.xpose.msra.mxu0 %v2157
      %2245 = vmatprep.subr.mxu0 0.0
      %2246 = vmatpush1.xpose.msra.mxu0 %v2160
      %2247 = vmatprep.subr.mxu0 0.0
      %2248 = vmatpush1.xpose.msra.mxu0 %v2163
      %2249 = vmatprep.subr.mxu0 0.0
      %2250 = vmatpush1.xpose.msra.mxu0 %v2166
      %2251 = vmatprep.subr.mxu0 0.0
      %2252 = vmatpush1.xpose.msra.mxu0 %v2169
      %2253 = vmatprep.subr.mxu0 0.0
      %2254 = vmatpush1.xpose.msra.mxu0 %v2172
      %2255 = vmatprep.subr.mxu0 0.0
      %2256 = vmatpush1.xpose.msra.mxu0 %v2175
      %2257 = vmatprep.subr.mxu0 0.0
      %2258 = vmatpush1.xpose.msra.mxu0 %v2178
      %2259 = vmatprep.subr.mxu0 0.0
      %2260 = vmatpush1.xpose.msra.mxu0 %v2181
      %2261 = vmatprep.subr.mxu0 0.0
      %2262 = vmatpush1.xpose.msra.mxu0 %v2184
      %2263 = vmatprep.subr.mxu0 0.0
      %2264 = vmatpush1.xpose.msra.mxu0 %v2187
      %2265 = vmatprep.subr.mxu0 0.0
      %2266 = vmatpush1.xpose.msra.mxu0 %v2190
      %2267 = vmatprep.subr.mxu0 0.0
      %2268 = vmatpush1.xpose.msra.mxu0 %v2193
      %2269 = vmatprep.subr.mxu0 0.0
      %2270 = vmatpush1.xpose.msra.mxu0 %v2196
      %2271 = vmatprep.subr.mxu0 0.0
      %2272 = vmatpush1.xpose.msra.mxu0 %v2199
      %2273 = vmatprep.subr.mxu0 0.0
      %2274 = vmatpush1.xpose.msra.mxu0 %v2202
      %2275 = vmatprep.subr.mxu0 0.0
      %2276 = vmatpush1.xpose.msra.mxu0 %v2205
      %2277 = vmatprep.subr.mxu0 0.0
      %2278 = vmatpush1.xpose.msra.mxu0 %v2208
      %2279 = vmatprep.subr.mxu0 0.0
      %2280 = vmatpush1.xpose.msra.mxu0 %v2211
      %2281 = vmatprep.subr.mxu0 0.0
      %2282 = vmatpush1.xpose.msra.mxu0 %v2214
      %2283 = vmatprep.subr.mxu0 0.0
      %2284 = vmatpush1.xpose.msra.mxu0 %v2217
      %2285 = vmatprep.subr.mxu0 0.0
      %2286 = vmatpush1.xpose.msra.mxu0 %v2220
      %2287 = vmatprep.subr.mxu0 0.0
      %2288 = vmatpush1.xpose.msra.mxu0 %v2223
      %2289 = vmatprep.mubr.f32.mxu0 0.0
      %2290 = vmatmul.mubr.f32.gmra.mrb[0].mxu0 %v2127
      %v2291 = vpop.f32.mrb[0].mxu0
      %v2292 = vadd.f32 0.0, %v2291
      %v2293 = vpop.f32.mrb[0].mxu0
      %v2294 = vadd.f32 0.0, %v2293
      %2295 = vdwg.mxu0
      %v2297 = vsel %vm442, %v2091, 0
      %v2300 = vsel %vm442, %v2058, 0
      %v2303 = vsel %vm442, %v2059, 0
      %v2306 = vsel %vm442, %v2060, 0
      %v2309 = vsel %vm442, %v2061, 0
      %v2312 = vsel %vm442, %v2062, 0
      %v2315 = vsel %vm442, %v2063, 0
      %v2318 = vsel %vm442, %v2064, 0
      %v2321 = vsel %vm442, %v2065, 0
      %v2324 = vsel %vm442, %v2066, 0
      %v2327 = vsel %vm442, %v2067, 0
      %v2330 = vsel %vm442, %v2068, 0
      %v2333 = vsel %vm442, %v2069, 0
      %v2336 = vsel %vm442, %v2070, 0
      %v2339 = vsel %vm442, %v2071, 0
      %v2342 = vsel %vm442, %v2072, 0
      %v2345 = vsel %vm442, %v2073, 0
      %v2348 = vsel %vm442, %v2074, 0
      %v2351 = vsel %vm442, %v2075, 0
      %v2354 = vsel %vm442, %v2076, 0
      %v2357 = vsel %vm442, %v2077, 0
      %v2360 = vsel %vm442, %v2078, 0
      %v2363 = vsel %vm442, %v2079, 0
      %v2366 = vsel %vm442, %v2080, 0
      %v2369 = vsel %vm442, %v2081, 0
      %v2372 = vsel %vm442, %v2082, 0
      %v2375 = vsel %vm442, %v2083, 0
      %v2378 = vsel %vm442, %v2084, 0
      %v2381 = vsel %vm442, %v2085, 0
      %v2384 = vsel %vm442, %v2086, 0
      %v2387 = vsel %vm442, %v2087, 0
      %v2390 = vsel %vm442, %v2088, 0
      %v2393 = vsel %vm442, %v2089, 0
      %2395 = vmatprep.subr.mxu0 0.0
      %2396 = vmatpush1.xpose.msra.mxu0 %v2300
      %2397 = vmatprep.subr.mxu0 0.0
      %2398 = vmatpush1.xpose.msra.mxu0 %v2303
      %2399 = vmatprep.subr.mxu0 0.0
      %2400 = vmatpush1.xpose.msra.mxu0 %v2306
      %2401 = vmatprep.subr.mxu0 0.0
      %2402 = vmatpush1.xpose.msra.mxu0 %v2309
      %2403 = vmatprep.subr.mxu0 0.0
      %2404 = vmatpush1.xpose.msra.mxu0 %v2312
      %2405 = vmatprep.subr.mxu0 0.0
      %2406 = vmatpush1.xpose.msra.mxu0 %v2315
      %2407 = vmatprep.subr.mxu0 0.0
      %2408 = vmatpush1.xpose.msra.mxu0 %v2318
      %2409 = vmatprep.subr.mxu0 0.0
      %2410 = vmatpush1.xpose.msra.mxu0 %v2321
      %2411 = vmatprep.subr.mxu0 0.0
      %2412 = vmatpush1.xpose.msra.mxu0 %v2324
      %2413 = vmatprep.subr.mxu0 0.0
      %2414 = vmatpush1.xpose.msra.mxu0 %v2327
      %2415 = vmatprep.subr.mxu0 0.0
      %2416 = vmatpush1.xpose.msra.mxu0 %v2330
      %2417 = vmatprep.subr.mxu0 0.0
      %2418 = vmatpush1.xpose.msra.mxu0 %v2333
      %2419 = vmatprep.subr.mxu0 0.0
      %2420 = vmatpush1.xpose.msra.mxu0 %v2336
      %2421 = vmatprep.subr.mxu0 0.0
      %2422 = vmatpush1.xpose.msra.mxu0 %v2339
      %2423 = vmatprep.subr.mxu0 0.0
      %2424 = vmatpush1.xpose.msra.mxu0 %v2342
      %2425 = vmatprep.subr.mxu0 0.0
      %2426 = vmatpush1.xpose.msra.mxu0 %v2345
      %2427 = vmatprep.subr.mxu0 0.0
      %2428 = vmatpush1.xpose.msra.mxu0 %v2348
      %2429 = vmatprep.subr.mxu0 0.0
      %2430 = vmatpush1.xpose.msra.mxu0 %v2351
      %2431 = vmatprep.subr.mxu0 0.0
      %2432 = vmatpush1.xpose.msra.mxu0 %v2354
      %2433 = vmatprep.subr.mxu0 0.0
      %2434 = vmatpush1.xpose.msra.mxu0 %v2357
      %2435 = vmatprep.subr.mxu0 0.0
      %2436 = vmatpush1.xpose.msra.mxu0 %v2360
      %2437 = vmatprep.subr.mxu0 0.0
      %2438 = vmatpush1.xpose.msra.mxu0 %v2363
      %2439 = vmatprep.subr.mxu0 0.0
      %2440 = vmatpush1.xpose.msra.mxu0 %v2366
      %2441 = vmatprep.subr.mxu0 0.0
      %2442 = vmatpush1.xpose.msra.mxu0 %v2369
      %2443 = vmatprep.subr.mxu0 0.0
      %2444 = vmatpush1.xpose.msra.mxu0 %v2372
      %2445 = vmatprep.subr.mxu0 0.0
      %2446 = vmatpush1.xpose.msra.mxu0 %v2375
      %2447 = vmatprep.subr.mxu0 0.0
      %2448 = vmatpush1.xpose.msra.mxu0 %v2378
      %2449 = vmatprep.subr.mxu0 0.0
      %2450 = vmatpush1.xpose.msra.mxu0 %v2381
      %2451 = vmatprep.subr.mxu0 0.0
      %2452 = vmatpush1.xpose.msra.mxu0 %v2384
      %2453 = vmatprep.subr.mxu0 0.0
      %2454 = vmatpush1.xpose.msra.mxu0 %v2387
      %2455 = vmatprep.subr.mxu0 0.0
      %2456 = vmatpush1.xpose.msra.mxu0 %v2390
      %2457 = vmatprep.subr.mxu0 0.0
      %2458 = vmatpush1.xpose.msra.mxu0 %v2393
      %2459 = vmatprep.mubr.f32.mxu0 0.0
      %2460 = vmatmul.mubr.f32.gmra.mrb[0].mxu0 %v2297
      %v2461 = vpop.f32.mrb[0].mxu0
      %v2462 = vadd.f32 %v2292, %v2461
      %v2463 = vpop.f32.mrb[0].mxu0
      %v2464 = vadd.f32 %v2294, %v2463
      %2465 = vdwg.mxu0
      %s2466 = sadd.s32 %s372, 2
      %s2467 = smul.u32 %s2466, 24
      %s2468 = scalar_lea.vmem %s331, %s2467
      %v2469 = vld [vmem:[%s2468] sm:$0xff]
      %v2470 = vld [vmem:[%s2468 + $0x8] sm:$0xff]
      %v2471 = vld [vmem:[%s2468 + $0x18] sm:$0xff]
      %v2472 = vld [vmem:[%s2468 + $0x20] sm:$0xff]
      %v2473 = vld [vmem:[%s2468 + $0x30] sm:$0xff]
      %v2474 = vld [vmem:[%s2468 + $0x38] sm:$0xff]
      %v2475 = vld [vmem:[%s2468 + $0x48] sm:$0xff]
      %v2476 = vld [vmem:[%s2468 + $0x50] sm:$0xff]
      %v2477 = vld [vmem:[%s2468 + $0x60] sm:$0xff]
      %v2478 = vld [vmem:[%s2468 + $0x68] sm:$0xff]
      %v2479 = vld [vmem:[%s2468 + $0x78] sm:$0xff]
      %v2480 = vld [vmem:[%s2468 + $0x80] sm:$0xff]
      %v2481 = vld [vmem:[%s2468 + $0x90] sm:$0xff]
      %v2482 = vld [vmem:[%s2468 + $0x98] sm:$0xff]
      %v2483 = vld [vmem:[%s2468 + $0xa8] sm:$0xff]
      %v2484 = vld [vmem:[%s2468 + $0xb0] sm:$0xff]
      %v2485 = vld [vmem:[%s2468 + $0xc0] sm:$0xff]
      %v2486 = vld [vmem:[%s2468 + $0xc8] sm:$0xff]
      %v2487 = vld [vmem:[%s2468 + $0xd8] sm:$0xff]
      %v2488 = vld [vmem:[%s2468 + $0xe0] sm:$0xff]
      %v2489 = vld [vmem:[%s2468 + $0xf0] sm:$0xff]
      %v2490 = vld [vmem:[%s2468 + $0xf8] sm:$0xff]
      %v2491 = vld [vmem:[%s2468 + $0x108] sm:$0xff]
      %v2492 = vld [vmem:[%s2468 + $0x110] sm:$0xff]
      %v2493 = vld [vmem:[%s2468 + $0x120] sm:$0xff]
      %v2494 = vld [vmem:[%s2468 + $0x128] sm:$0xff]
      %v2495 = vld [vmem:[%s2468 + $0x138] sm:$0xff]
      %v2496 = vld [vmem:[%s2468 + $0x140] sm:$0xff]
      %v2497 = vld [vmem:[%s2468 + $0x150] sm:$0xff]
      %v2498 = vld [vmem:[%s2468 + $0x158] sm:$0xff]
      %v2499 = vld [vmem:[%s2468 + $0x168] sm:$0xff]
      %v2500 = vld [vmem:[%s2468 + $0x170] sm:$0xff]
      %s2501 = scalar_lea.vmem %s1, 80
      %v2502 = vld [vmem:[%s2501] sm:$0xff]
      %v2504 = vsel %vm442, %v2502, 0
      %v2507 = vsel %vm442, %v2469, 0
      %v2510 = vsel %vm442, %v2470, 0
      %v2513 = vsel %vm442, %v2471, 0
      %v2516 = vsel %vm442, %v2472, 0
      %v2519 = vsel %vm442, %v2473, 0
      %v2522 = vsel %vm442, %v2474, 0
      %v2525 = vsel %vm442, %v2475, 0
      %v2528 = vsel %vm442, %v2476, 0
      %v2531 = vsel %vm442, %v2477, 0
      %v2534 = vsel %vm442, %v2478, 0
      %v2537 = vsel %vm442, %v2479, 0
      %v2540 = vsel %vm442, %v2480, 0
      %v2543 = vsel %vm442, %v2481, 0
      %v2546 = vsel %vm442, %v2482, 0
      %v2549 = vsel %vm442, %v2483, 0
      %v2552 = vsel %vm442, %v2484, 0
      %v2555 = vsel %vm442, %v2485, 0
      %v2558 = vsel %vm442, %v2486, 0
      %v2561 = vsel %vm442, %v2487, 0
      %v2564 = vsel %vm442, %v2488, 0
      %v2567 = vsel %vm442, %v2489, 0
      %v2570 = vsel %vm442, %v2490, 0
      %v2573 = vsel %vm442, %v2491, 0
      %v2576 = vsel %vm442, %v2492, 0
      %v2579 = vsel %vm442, %v2493, 0
      %v2582 = vsel %vm442, %v2494, 0
      %v2585 = vsel %vm442, %v2495, 0
      %v2588 = vsel %vm442, %v2496, 0
      %v2591 = vsel %vm442, %v2497, 0
      %v2594 = vsel %vm442, %v2498, 0
      %v2597 = vsel %vm442, %v2499, 0
      %v2600 = vsel %vm442, %v2500, 0
      %2602 = vmatprep.subr.mxu0 0.0
      %2603 = vmatpush1.xpose.msra.mxu0 %v2507
      %2604 = vmatprep.subr.mxu0 0.0
      %2605 = vmatpush1.xpose.msra.mxu0 %v2510
      %2606 = vmatprep.subr.mxu0 0.0
      %2607 = vmatpush1.xpose.msra.mxu0 %v2513
      %2608 = vmatprep.subr.mxu0 0.0
      %2609 = vmatpush1.xpose.msra.mxu0 %v2516
      %2610 = vmatprep.subr.mxu0 0.0
      %2611 = vmatpush1.xpose.msra.mxu0 %v2519
      %2612 = vmatprep.subr.mxu0 0.0
      %2613 = vmatpush1.xpose.msra.mxu0 %v2522
      %2614 = vmatprep.subr.mxu0 0.0
      %2615 = vmatpush1.xpose.msra.mxu0 %v2525
      %2616 = vmatprep.subr.mxu0 0.0
      %2617 = vmatpush1.xpose.msra.mxu0 %v2528
      %2618 = vmatprep.subr.mxu0 0.0
      %2619 = vmatpush1.xpose.msra.mxu0 %v2531
      %2620 = vmatprep.subr.mxu0 0.0
      %2621 = vmatpush1.xpose.msra.mxu0 %v2534
      %2622 = vmatprep.subr.mxu0 0.0
      %2623 = vmatpush1.xpose.msra.mxu0 %v2537
      %2624 = vmatprep.subr.mxu0 0.0
      %2625 = vmatpush1.xpose.msra.mxu0 %v2540
      %2626 = vmatprep.subr.mxu0 0.0
      %2627 = vmatpush1.xpose.msra.mxu0 %v2543
      %2628 = vmatprep.subr.mxu0 0.0
      %2629 = vmatpush1.xpose.msra.mxu0 %v2546
      %2630 = vmatprep.subr.mxu0 0.0
      %2631 = vmatpush1.xpose.msra.mxu0 %v2549
      %2632 = vmatprep.subr.mxu0 0.0
      %2633 = vmatpush1.xpose.msra.mxu0 %v2552
      %2634 = vmatprep.subr.mxu0 0.0
      %2635 = vmatpush1.xpose.msra.mxu0 %v2555
      %2636 = vmatprep.subr.mxu0 0.0
      %2637 = vmatpush1.xpose.msra.mxu0 %v2558
      %2638 = vmatprep.subr.mxu0 0.0
      %2639 = vmatpush1.xpose.msra.mxu0 %v2561
      %2640 = vmatprep.subr.mxu0 0.0
      %2641 = vmatpush1.xpose.msra.mxu0 %v2564
      %2642 = vmatprep.subr.mxu0 0.0
      %2643 = vmatpush1.xpose.msra.mxu0 %v2567
      %2644 = vmatprep.subr.mxu0 0.0
      %2645 = vmatpush1.xpose.msra.mxu0 %v2570
      %2646 = vmatprep.subr.mxu0 0.0
      %2647 = vmatpush1.xpose.msra.mxu0 %v2573
      %2648 = vmatprep.subr.mxu0 0.0
      %2649 = vmatpush1.xpose.msra.mxu0 %v2576
      %2650 = vmatprep.subr.mxu0 0.0
      %2651 = vmatpush1.xpose.msra.mxu0 %v2579
      %2652 = vmatprep.subr.mxu0 0.0
      %2653 = vmatpush1.xpose.msra.mxu0 %v2582
      %2654 = vmatprep.subr.mxu0 0.0
      %2655 = vmatpush1.xpose.msra.mxu0 %v2585
      %2656 = vmatprep.subr.mxu0 0.0
      %2657 = vmatpush1.xpose.msra.mxu0 %v2588
      %2658 = vmatprep.subr.mxu0 0.0
      %2659 = vmatpush1.xpose.msra.mxu0 %v2591
      %2660 = vmatprep.subr.mxu0 0.0
      %2661 = vmatpush1.xpose.msra.mxu0 %v2594
      %2662 = vmatprep.subr.mxu0 0.0
      %2663 = vmatpush1.xpose.msra.mxu0 %v2597
      %2664 = vmatprep.subr.mxu0 0.0
      %2665 = vmatpush1.xpose.msra.mxu0 %v2600
      %2666 = vmatprep.mubr.f32.mxu0 0.0
      %2667 = vmatmul.mubr.f32.gmra.mrb[0].mxu0 %v2504
      %v2668 = vpop.f32.mrb[0].mxu0
      %v2669 = vadd.f32 0.0, %v2668
      %v2670 = vpop.f32.mrb[0].mxu0
      %v2671 = vadd.f32 0.0, %v2670
      %2672 = vdwg.mxu0
      %v2673 = vadd.f32 %v2462, %v2669
      %v2674 = vadd.f32 %v2464, %v2671
      %v2675 = vld [vmem:[%s2468 + $0x1] sm:$0xff]
      %v2676 = vld [vmem:[%s2468 + $0x9] sm:$0xff]
      %v2677 = vld [vmem:[%s2468 + $0x19] sm:$0xff]
      %v2678 = vld [vmem:[%s2468 + $0x21] sm:$0xff]
      %v2679 = vld [vmem:[%s2468 + $0x31] sm:$0xff]
      %v2680 = vld [vmem:[%s2468 + $0x39] sm:$0xff]
      %v2681 = vld [vmem:[%s2468 + $0x49] sm:$0xff]
      %v2682 = vld [vmem:[%s2468 + $0x51] sm:$0xff]
      %v2683 = vld [vmem:[%s2468 + $0x61] sm:$0xff]
      %v2684 = vld [vmem:[%s2468 + $0x69] sm:$0xff]
      %v2685 = vld [vmem:[%s2468 + $0x79] sm:$0xff]
      %v2686 = vld [vmem:[%s2468 + $0x81] sm:$0xff]
      %v2687 = vld [vmem:[%s2468 + $0x91] sm:$0xff]
      %v2688 = vld [vmem:[%s2468 + $0x99] sm:$0xff]
      %v2689 = vld [vmem:[%s2468 + $0xa9] sm:$0xff]
      %v2690 = vld [vmem:[%s2468 + $0xb1] sm:$0xff]
      %v2691 = vld [vmem:[%s2468 + $0xc1] sm:$0xff]
      %v2692 = vld [vmem:[%s2468 + $0xc9] sm:$0xff]
      %v2693 = vld [vmem:[%s2468 + $0xd9] sm:$0xff]
      %v2694 = vld [vmem:[%s2468 + $0xe1] sm:$0xff]
      %v2695 = vld [vmem:[%s2468 + $0xf1] sm:$0xff]
      %v2696 = vld [vmem:[%s2468 + $0xf9] sm:$0xff]
      %v2697 = vld [vmem:[%s2468 + $0x109] sm:$0xff]
      %v2698 = vld [vmem:[%s2468 + $0x111] sm:$0xff]
      %v2699 = vld [vmem:[%s2468 + $0x121] sm:$0xff]
      %v2700 = vld [vmem:[%s2468 + $0x129] sm:$0xff]
      %v2701 = vld [vmem:[%s2468 + $0x139] sm:$0xff]
      %v2702 = vld [vmem:[%s2468 + $0x141] sm:$0xff]
      %v2703 = vld [vmem:[%s2468 + $0x151] sm:$0xff]
      %v2704 = vld [vmem:[%s2468 + $0x159] sm:$0xff]
      %v2705 = vld [vmem:[%s2468 + $0x169] sm:$0xff]
      %v2706 = vld [vmem:[%s2468 + $0x171] sm:$0xff]
      %s2707 = scalar_lea.vmem %s1, 88
      %v2708 = vld [vmem:[%s2707] sm:$0xff]
      %v2710 = vsel %vm442, %v2708, 0
      %v2713 = vsel %vm442, %v2675, 0
      %v2716 = vsel %vm442, %v2676, 0
      %v2719 = vsel %vm442, %v2677, 0
      %v2722 = vsel %vm442, %v2678, 0
      %v2725 = vsel %vm442, %v2679, 0
      %v2728 = vsel %vm442, %v2680, 0
      %v2731 = vsel %vm442, %v2681, 0
      %v2734 = vsel %vm442, %v2682, 0
      %v2737 = vsel %vm442, %v2683, 0
      %v2740 = vsel %vm442, %v2684, 0
      %v2743 = vsel %vm442, %v2685, 0
      %v2746 = vsel %vm442, %v2686, 0
      %v2749 = vsel %vm442, %v2687, 0
      %v2752 = vsel %vm442, %v2688, 0
      %v2755 = vsel %vm442, %v2689, 0
      %v2758 = vsel %vm442, %v2690, 0
      %v2761 = vsel %vm442, %v2691, 0
      %v2764 = vsel %vm442, %v2692, 0
      %v2767 = vsel %vm442, %v2693, 0
      %v2770 = vsel %vm442, %v2694, 0
      %v2773 = vsel %vm442, %v2695, 0
      %v2776 = vsel %vm442, %v2696, 0
      %v2779 = vsel %vm442, %v2697, 0
      %v2782 = vsel %vm442, %v2698, 0
      %v2785 = vsel %vm442, %v2699, 0
      %v2788 = vsel %vm442, %v2700, 0
      %v2791 = vsel %vm442, %v2701, 0
      %v2794 = vsel %vm442, %v2702, 0
      %v2797 = vsel %vm442, %v2703, 0
      %v2800 = vsel %vm442, %v2704, 0
      %v2803 = vsel %vm442, %v2705, 0
      %v2806 = vsel %vm442, %v2706, 0
      %2808 = vmatprep.subr.mxu0 0.0
      %2809 = vmatpush1.xpose.msra.mxu0 %v2713
      %2810 = vmatprep.subr.mxu0 0.0
      %2811 = vmatpush1.xpose.msra.mxu0 %v2716
      %2812 = vmatprep.subr.mxu0 0.0
      %2813 = vmatpush1.xpose.msra.mxu0 %v2719
      %2814 = vmatprep.subr.mxu0 0.0
      %2815 = vmatpush1.xpose.msra.mxu0 %v2722
      %2816 = vmatprep.subr.mxu0 0.0
      %2817 = vmatpush1.xpose.msra.mxu0 %v2725
      %2818 = vmatprep.subr.mxu0 0.0
      %2819 = vmatpush1.xpose.msra.mxu0 %v2728
      %2820 = vmatprep.subr.mxu0 0.0
      %2821 = vmatpush1.xpose.msra.mxu0 %v2731
      %2822 = vmatprep.subr.mxu0 0.0
      %2823 = vmatpush1.xpose.msra.mxu0 %v2734
      %2824 = vmatprep.subr.mxu0 0.0
      %2825 = vmatpush1.xpose.msra.mxu0 %v2737
      %2826 = vmatprep.subr.mxu0 0.0
      %2827 = vmatpush1.xpose.msra.mxu0 %v2740
      %2828 = vmatprep.subr.mxu0 0.0
      %2829 = vmatpush1.xpose.msra.mxu0 %v2743
      %2830 = vmatprep.subr.mxu0 0.0
      %2831 = vmatpush1.xpose.msra.mxu0 %v2746
      %2832 = vmatprep.subr.mxu0 0.0
      %2833 = vmatpush1.xpose.msra.mxu0 %v2749
      %2834 = vmatprep.subr.mxu0 0.0
      %2835 = vmatpush1.xpose.msra.mxu0 %v2752
      %2836 = vmatprep.subr.mxu0 0.0
      %2837 = vmatpush1.xpose.msra.mxu0 %v2755
      %2838 = vmatprep.subr.mxu0 0.0
      %2839 = vmatpush1.xpose.msra.mxu0 %v2758
      %2840 = vmatprep.subr.mxu0 0.0
      %2841 = vmatpush1.xpose.msra.mxu0 %v2761
      %2842 = vmatprep.subr.mxu0 0.0
      %2843 = vmatpush1.xpose.msra.mxu0 %v2764
      %2844 = vmatprep.subr.mxu0 0.0
      %2845 = vmatpush1.xpose.msra.mxu0 %v2767
      %2846 = vmatprep.subr.mxu0 0.0
      %2847 = vmatpush1.xpose.msra.mxu0 %v2770
      %2848 = vmatprep.subr.mxu0 0.0
      %2849 = vmatpush1.xpose.msra.mxu0 %v2773
      %2850 = vmatprep.subr.mxu0 0.0
      %2851 = vmatpush1.xpose.msra.mxu0 %v2776
      %2852 = vmatprep.subr.mxu0 0.0
      %2853 = vmatpush1.xpose.msra.mxu0 %v2779
      %2854 = vmatprep.subr.mxu0 0.0
      %2855 = vmatpush1.xpose.msra.mxu0 %v2782
      %2856 = vmatprep.subr.mxu0 0.0
      %2857 = vmatpush1.xpose.msra.mxu0 %v2785
      %2858 = vmatprep.subr.mxu0 0.0
      %2859 = vmatpush1.xpose.msra.mxu0 %v2788
      %2860 = vmatprep.subr.mxu0 0.0
      %2861 = vmatpush1.xpose.msra.mxu0 %v2791
      %2862 = vmatprep.subr.mxu0 0.0
      %2863 = vmatpush1.xpose.msra.mxu0 %v2794
      %2864 = vmatprep.subr.mxu0 0.0
      %2865 = vmatpush1.xpose.msra.mxu0 %v2797
      %2866 = vmatprep.subr.mxu0 0.0
      %2867 = vmatpush1.xpose.msra.mxu0 %v2800
      %2868 = vmatprep.subr.mxu0 0.0
      %2869 = vmatpush1.xpose.msra.mxu0 %v2803
      %2870 = vmatprep.subr.mxu0 0.0
      %2871 = vmatpush1.xpose.msra.mxu0 %v2806
      %2872 = vmatprep.mubr.f32.mxu0 0.0
      %2873 = vmatmul.mubr.f32.gmra.mrb[0].mxu0 %v2710
      %v2874 = vpop.f32.mrb[0].mxu0
      %v2875 = vadd.f32 0.0, %v2874
      %v2876 = vpop.f32.mrb[0].mxu0
      %v2877 = vadd.f32 0.0, %v2876
      %2878 = vdwg.mxu0
      %v2879 = vadd.f32 %v2673, %v2875
      %v2880 = vadd.f32 %v2674, %v2877
      %v2881 = vld [vmem:[%s2] sm:$0xff]
      %2883 = vset.pattern.permute.xlu0 0
      %2884 = vperm.xlu0 %2883, %v2881
      %v2885 = vpop.permute.xlu0 %2884
      %v2887 = vmul.f32 %v2879, %v2885
      %v2888 = vmul.f32 %v2880, %v2885
      %v2889 = vld [vmem:[%s3] sm:$0xff]
      %2891 = vset.pattern.permute.xlu0 0
      %2892 = vperm.xlu0 %2891, %v2889
      %v2893 = vpop.permute.xlu0 %2892
      %v2895 = vadd.f32 %v2887, %v2893
      %v2896 = vadd.f32 %v2888, %v2893
      %v2897 = vmax.f32 %v2895, 0.0
      %v2898 = vmax.f32 %v2896, 0.0
      %2899 = vst [vmem:[%s360] sm:$0xff] %v2897
      %2900 = vst [vmem:[%s360 + $0x8] sm:$0xff] %v2898
      %v2901 = vld [vmem:[%s785 + $0x1] sm:$0xff]
      %v2902 = vld [vmem:[%s785 + $0x9] sm:$0xff]
      %v2903 = vld [vmem:[%s785 + $0x19] sm:$0xff]
      %v2904 = vld [vmem:[%s785 + $0x21] sm:$0xff]
      %v2905 = vld [vmem:[%s785 + $0x31] sm:$0xff]
      %v2906 = vld [vmem:[%s785 + $0x39] sm:$0xff]
      %v2907 = vld [vmem:[%s785 + $0x49] sm:$0xff]
      %v2908 = vld [vmem:[%s785 + $0x51] sm:$0xff]
      %v2909 = vld [vmem:[%s785 + $0x61] sm:$0xff]
      %v2910 = vld [vmem:[%s785 + $0x69] sm:$0xff]
      %v2911 = vld [vmem:[%s785 + $0x79] sm:$0xff]
      %v2912 = vld [vmem:[%s785 + $0x81] sm:$0xff]
      %v2913 = vld [vmem:[%s785 + $0x91] sm:$0xff]
      %v2914 = vld [vmem:[%s785 + $0x99] sm:$0xff]
      %v2915 = vld [vmem:[%s785 + $0xa9] sm:$0xff]
      %v2916 = vld [vmem:[%s785 + $0xb1] sm:$0xff]
      %v2917 = vld [vmem:[%s785 + $0xc1] sm:$0xff]
      %v2918 = vld [vmem:[%s785 + $0xc9] sm:$0xff]
      %v2919 = vld [vmem:[%s785 + $0xd9] sm:$0xff]
      %v2920 = vld [vmem:[%s785 + $0xe1] sm:$0xff]
      %v2921 = vld [vmem:[%s785 + $0xf1] sm:$0xff]
      %v2922 = vld [vmem:[%s785 + $0xf9] sm:$0xff]
      %v2923 = vld [vmem:[%s785 + $0x109] sm:$0xff]
      %v2924 = vld [vmem:[%s785 + $0x111] sm:$0xff]
      %v2925 = vld [vmem:[%s785 + $0x121] sm:$0xff]
      %v2926 = vld [vmem:[%s785 + $0x129] sm:$0xff]
      %v2927 = vld [vmem:[%s785 + $0x139] sm:$0xff]
      %v2928 = vld [vmem:[%s785 + $0x141] sm:$0xff]
      %v2929 = vld [vmem:[%s785 + $0x151] sm:$0xff]
      %v2930 = vld [vmem:[%s785 + $0x159] sm:$0xff]
      %v2931 = vld [vmem:[%s785 + $0x169] sm:$0xff]
      %v2932 = vld [vmem:[%s785 + $0x171] sm:$0xff]
      %s2933 = scalar_lea.vmem %s1, 96
      %v2934 = vld [vmem:[%s2933] sm:$0xff]
      %v2935 = vld [vmem:[%s785 + $0x2] sm:$0xff]
      %v2936 = vld [vmem:[%s785 + $0xa] sm:$0xff]
      %v2937 = vld [vmem:[%s785 + $0x1a] sm:$0xff]
      %v2938 = vld [vmem:[%s785 + $0x22] sm:$0xff]
      %v2939 = vld [vmem:[%s785 + $0x32] sm:$0xff]
      %v2940 = vld [vmem:[%s785 + $0x3a] sm:$0xff]
      %v2941 = vld [vmem:[%s785 + $0x4a] sm:$0xff]
      %v2942 = vld [vmem:[%s785 + $0x52] sm:$0xff]
      %v2943 = vld [vmem:[%s785 + $0x62] sm:$0xff]
      %v2944 = vld [vmem:[%s785 + $0x6a] sm:$0xff]
      %v2945 = vld [vmem:[%s785 + $0x7a] sm:$0xff]
      %v2946 = vld [vmem:[%s785 + $0x82] sm:$0xff]
      %v2947 = vld [vmem:[%s785 + $0x92] sm:$0xff]
      %v2948 = vld [vmem:[%s785 + $0x9a] sm:$0xff]
      %v2949 = vld [vmem:[%s785 + $0xaa] sm:$0xff]
      %v2950 = vld [vmem:[%s785 + $0xb2] sm:$0xff]
      %v2951 = vld [vmem:[%s785 + $0xc2] sm:$0xff]
      %v2952 = vld [vmem:[%s785 + $0xca] sm:$0xff]
      %v2953 = vld [vmem:[%s785 + $0xda] sm:$0xff]
      %v2954 = vld [vmem:[%s785 + $0xe2] sm:$0xff]
      %v2955 = vld [vmem:[%s785 + $0xf2] sm:$0xff]
      %v2956 = vld [vmem:[%s785 + $0xfa] sm:$0xff]
      %v2957 = vld [vmem:[%s785 + $0x10a] sm:$0xff]
      %v2958 = vld [vmem:[%s785 + $0x112] sm:$0xff]
      %v2959 = vld [vmem:[%s785 + $0x122] sm:$0xff]
      %v2960 = vld [vmem:[%s785 + $0x12a] sm:$0xff]
      %v2961 = vld [vmem:[%s785 + $0x13a] sm:$0xff]
      %v2962 = vld [vmem:[%s785 + $0x142] sm:$0xff]
      %v2963 = vld [vmem:[%s785 + $0x152] sm:$0xff]
      %v2964 = vld [vmem:[%s785 + $0x15a] sm:$0xff]
      %v2965 = vld [vmem:[%s785 + $0x16a] sm:$0xff]
      %v2966 = vld [vmem:[%s785 + $0x172] sm:$0xff]
      %s2967 = scalar_lea.vmem %s1, 104
      %v2968 = vld [vmem:[%s2967] sm:$0xff]
      %v2970 = vsel %vm442, %v2968, 0
      %v2973 = vsel %vm442, %v2935, 0
      %v2976 = vsel %vm442, %v2936, 0
      %v2979 = vsel %vm442, %v2937, 0
      %v2982 = vsel %vm442, %v2938, 0
      %v2985 = vsel %vm442, %v2939, 0
      %v2988 = vsel %vm442, %v2940, 0
      %v2991 = vsel %vm442, %v2941, 0
      %v2994 = vsel %vm442, %v2942, 0
      %v2997 = vsel %vm442, %v2943, 0
      %v3000 = vsel %vm442, %v2944, 0
      %v3003 = vsel %vm442, %v2945, 0
      %v3006 = vsel %vm442, %v2946, 0
      %v3009 = vsel %vm442, %v2947, 0
      %v3012 = vsel %vm442, %v2948, 0
      %v3015 = vsel %vm442, %v2949, 0
      %v3018 = vsel %vm442, %v2950, 0
      %v3021 = vsel %vm442, %v2951, 0
      %v3024 = vsel %vm442, %v2952, 0
      %v3027 = vsel %vm442, %v2953, 0
      %v3030 = vsel %vm442, %v2954, 0
      %v3033 = vsel %vm442, %v2955, 0
      %v3036 = vsel %vm442, %v2956, 0
      %v3039 = vsel %vm442, %v2957, 0
      %v3042 = vsel %vm442, %v2958, 0
      %v3045 = vsel %vm442, %v2959, 0
      %v3048 = vsel %vm442, %v2960, 0
      %v3051 = vsel %vm442, %v2961, 0
      %v3054 = vsel %vm442, %v2962, 0
      %v3057 = vsel %vm442, %v2963, 0
      %v3060 = vsel %vm442, %v2964, 0
      %v3063 = vsel %vm442, %v2965, 0
      %v3066 = vsel %vm442, %v2966, 0
      %3068 = vmatprep.subr.mxu0 0.0
      %3069 = vmatpush1.xpose.msra.mxu0 %v2973
      %3070 = vmatprep.subr.mxu0 0.0
      %3071 = vmatpush1.xpose.msra.mxu0 %v2976
      %3072 = vmatprep.subr.mxu0 0.0
      %3073 = vmatpush1.xpose.msra.mxu0 %v2979
      %3074 = vmatprep.subr.mxu0 0.0
      %3075 = vmatpush1.xpose.msra.mxu0 %v2982
      %3076 = vmatprep.subr.mxu0 0.0
      %3077 = vmatpush1.xpose.msra.mxu0 %v2985
      %3078 = vmatprep.subr.mxu0 0.0
      %3079 = vmatpush1.xpose.msra.mxu0 %v2988
      %3080 = vmatprep.subr.mxu0 0.0
      %3081 = vmatpush1.xpose.msra.mxu0 %v2991
      %3082 = vmatprep.subr.mxu0 0.0
      %3083 = vmatpush1.xpose.msra.mxu0 %v2994
      %3084 = vmatprep.subr.mxu0 0.0
      %3085 = vmatpush1.xpose.msra.mxu0 %v2997
      %3086 = vmatprep.subr.mxu0 0.0
      %3087 = vmatpush1.xpose.msra.mxu0 %v3000
      %3088 = vmatprep.subr.mxu0 0.0
      %3089 = vmatpush1.xpose.msra.mxu0 %v3003
      %3090 = vmatprep.subr.mxu0 0.0
      %3091 = vmatpush1.xpose.msra.mxu0 %v3006
      %3092 = vmatprep.subr.mxu0 0.0
      %3093 = vmatpush1.xpose.msra.mxu0 %v3009
      %3094 = vmatprep.subr.mxu0 0.0
      %3095 = vmatpush1.xpose.msra.mxu0 %v3012
      %3096 = vmatprep.subr.mxu0 0.0
      %3097 = vmatpush1.xpose.msra.mxu0 %v3015
      %3098 = vmatprep.subr.mxu0 0.0
      %3099 = vmatpush1.xpose.msra.mxu0 %v3018
      %3100 = vmatprep.subr.mxu0 0.0
      %3101 = vmatpush1.xpose.msra.mxu0 %v3021
      %3102 = vmatprep.subr.mxu0 0.0
      %3103 = vmatpush1.xpose.msra.mxu0 %v3024
      %3104 = vmatprep.subr.mxu0 0.0
      %3105 = vmatpush1.xpose.msra.mxu0 %v3027
      %3106 = vmatprep.subr.mxu0 0.0
      %3107 = vmatpush1.xpose.msra.mxu0 %v3030
      %3108 = vmatprep.subr.mxu0 0.0
      %3109 = vmatpush1.xpose.msra.mxu0 %v3033
      %3110 = vmatprep.subr.mxu0 0.0
      %3111 = vmatpush1.xpose.msra.mxu0 %v3036
      %3112 = vmatprep.subr.mxu0 0.0
      %3113 = vmatpush1.xpose.msra.mxu0 %v3039
      %3114 = vmatprep.subr.mxu0 0.0
      %3115 = vmatpush1.xpose.msra.mxu0 %v3042
      %3116 = vmatprep.subr.mxu0 0.0
      %3117 = vmatpush1.xpose.msra.mxu0 %v3045
      %3118 = vmatprep.subr.mxu0 0.0
      %3119 = vmatpush1.xpose.msra.mxu0 %v3048
      %3120 = vmatprep.subr.mxu0 0.0
      %3121 = vmatpush1.xpose.msra.mxu0 %v3051
      %3122 = vmatprep.subr.mxu0 0.0
      %3123 = vmatpush1.xpose.msra.mxu0 %v3054
      %3124 = vmatprep.subr.mxu0 0.0
      %3125 = vmatpush1.xpose.msra.mxu0 %v3057
      %3126 = vmatprep.subr.mxu0 0.0
      %3127 = vmatpush1.xpose.msra.mxu0 %v3060
      %3128 = vmatprep.subr.mxu0 0.0
      %3129 = vmatpush1.xpose.msra.mxu0 %v3063
      %3130 = vmatprep.subr.mxu0 0.0
      %3131 = vmatpush1.xpose.msra.mxu0 %v3066
      %3132 = vmatprep.mubr.f32.mxu0 0.0
      %3133 = vmatmul.mubr.f32.gmra.mrb[0].mxu0 %v2970
      %v3134 = vpop.f32.mrb[0].mxu0
      %v3135 = vadd.f32 0.0, %v3134
      %v3136 = vpop.f32.mrb[0].mxu0
      %v3137 = vadd.f32 0.0, %v3136
      %3138 = vdwg.mxu0
      %v3140 = vsel %vm442, %v2934, 0
      %v3143 = vsel %vm442, %v2901, 0
      %v3146 = vsel %vm442, %v2902, 0
      %v3149 = vsel %vm442, %v2903, 0
      %v3152 = vsel %vm442, %v2904, 0
      %v3155 = vsel %vm442, %v2905, 0
      %v3158 = vsel %vm442, %v2906, 0
      %v3161 = vsel %vm442, %v2907, 0
      %v3164 = vsel %vm442, %v2908, 0
      %v3167 = vsel %vm442, %v2909, 0
      %v3170 = vsel %vm442, %v2910, 0
      %v3173 = vsel %vm442, %v2911, 0
      %v3176 = vsel %vm442, %v2912, 0
      %v3179 = vsel %vm442, %v2913, 0
      %v3182 = vsel %vm442, %v2914, 0
      %v3185 = vsel %vm442, %v2915, 0
      %v3188 = vsel %vm442, %v2916, 0
      %v3191 = vsel %vm442, %v2917, 0
      %v3194 = vsel %vm442, %v2918, 0
      %v3197 = vsel %vm442, %v2919, 0
      %v3200 = vsel %vm442, %v2920, 0
      %v3203 = vsel %vm442, %v2921, 0
      %v3206 = vsel %vm442, %v2922, 0
      %v3209 = vsel %vm442, %v2923, 0
      %v3212 = vsel %vm442, %v2924, 0
      %v3215 = vsel %vm442, %v2925, 0
      %v3218 = vsel %vm442, %v2926, 0
      %v3221 = vsel %vm442, %v2927, 0
      %v3224 = vsel %vm442, %v2928, 0
      %v3227 = vsel %vm442, %v2929, 0
      %v3230 = vsel %vm442, %v2930, 0
      %v3233 = vsel %vm442, %v2931, 0
      %v3236 = vsel %vm442, %v2932, 0
      %3238 = vmatprep.subr.mxu0 0.0
      %3239 = vmatpush1.xpose.msra.mxu0 %v3143
      %3240 = vmatprep.subr.mxu0 0.0
      %3241 = vmatpush1.xpose.msra.mxu0 %v3146
      %3242 = vmatprep.subr.mxu0 0.0
      %3243 = vmatpush1.xpose.msra.mxu0 %v3149
      %3244 = vmatprep.subr.mxu0 0.0
      %3245 = vmatpush1.xpose.msra.mxu0 %v3152
      %3246 = vmatprep.subr.mxu0 0.0
      %3247 = vmatpush1.xpose.msra.mxu0 %v3155
      %3248 = vmatprep.subr.mxu0 0.0
      %3249 = vmatpush1.xpose.msra.mxu0 %v3158
      %3250 = vmatprep.subr.mxu0 0.0
      %3251 = vmatpush1.xpose.msra.mxu0 %v3161
      %3252 = vmatprep.subr.mxu0 0.0
      %3253 = vmatpush1.xpose.msra.mxu0 %v3164
      %3254 = vmatprep.subr.mxu0 0.0
      %3255 = vmatpush1.xpose.msra.mxu0 %v3167
      %3256 = vmatprep.subr.mxu0 0.0
      %3257 = vmatpush1.xpose.msra.mxu0 %v3170
      %3258 = vmatprep.subr.mxu0 0.0
      %3259 = vmatpush1.xpose.msra.mxu0 %v3173
      %3260 = vmatprep.subr.mxu0 0.0
      %3261 = vmatpush1.xpose.msra.mxu0 %v3176
      %3262 = vmatprep.subr.mxu0 0.0
      %3263 = vmatpush1.xpose.msra.mxu0 %v3179
      %3264 = vmatprep.subr.mxu0 0.0
      %3265 = vmatpush1.xpose.msra.mxu0 %v3182
      %3266 = vmatprep.subr.mxu0 0.0
      %3267 = vmatpush1.xpose.msra.mxu0 %v3185
      %3268 = vmatprep.subr.mxu0 0.0
      %3269 = vmatpush1.xpose.msra.mxu0 %v3188
      %3270 = vmatprep.subr.mxu0 0.0
      %3271 = vmatpush1.xpose.msra.mxu0 %v3191
      %3272 = vmatprep.subr.mxu0 0.0
      %3273 = vmatpush1.xpose.msra.mxu0 %v3194
      %3274 = vmatprep.subr.mxu0 0.0
      %3275 = vmatpush1.xpose.msra.mxu0 %v3197
      %3276 = vmatprep.subr.mxu0 0.0
      %3277 = vmatpush1.xpose.msra.mxu0 %v3200
      %3278 = vmatprep.subr.mxu0 0.0
      %3279 = vmatpush1.xpose.msra.mxu0 %v3203
      %3280 = vmatprep.subr.mxu0 0.0
      %3281 = vmatpush1.xpose.msra.mxu0 %v3206
      %3282 = vmatprep.subr.mxu0 0.0
      %3283 = vmatpush1.xpose.msra.mxu0 %v3209
      %3284 = vmatprep.subr.mxu0 0.0
      %3285 = vmatpush1.xpose.msra.mxu0 %v3212
      %3286 = vmatprep.subr.mxu0 0.0
      %3287 = vmatpush1.xpose.msra.mxu0 %v3215
      %3288 = vmatprep.subr.mxu0 0.0
      %3289 = vmatpush1.xpose.msra.mxu0 %v3218
      %3290 = vmatprep.subr.mxu0 0.0
      %3291 = vmatpush1.xpose.msra.mxu0 %v3221
      %3292 = vmatprep.subr.mxu0 0.0
      %3293 = vmatpush1.xpose.msra.mxu0 %v3224
      %3294 = vmatprep.subr.mxu0 0.0
      %3295 = vmatpush1.xpose.msra.mxu0 %v3227
      %3296 = vmatprep.subr.mxu0 0.0
      %3297 = vmatpush1.xpose.msra.mxu0 %v3230
      %3298 = vmatprep.subr.mxu0 0.0
      %3299 = vmatpush1.xpose.msra.mxu0 %v3233
      %3300 = vmatprep.subr.mxu0 0.0
      %3301 = vmatpush1.xpose.msra.mxu0 %v3236
      %3302 = vmatprep.mubr.f32.mxu0 0.0
      %3303 = vmatmul.mubr.f32.gmra.mrb[0].mxu0 %v3140
      %v3304 = vpop.f32.mrb[0].mxu0
      %v3305 = vadd.f32 %v3135, %v3304
      %v3306 = vpop.f32.mrb[0].mxu0
      %v3307 = vadd.f32 %v3137, %v3306
      %3308 = vdwg.mxu0
      %v3309 = vld [vmem:[%s2468 + $0x1] sm:$0xff]
      %v3310 = vld [vmem:[%s2468 + $0x9] sm:$0xff]
      %v3311 = vld [vmem:[%s2468 + $0x19] sm:$0xff]
      %v3312 = vld [vmem:[%s2468 + $0x21] sm:$0xff]
      %v3313 = vld [vmem:[%s2468 + $0x31] sm:$0xff]
      %v3314 = vld [vmem:[%s2468 + $0x39] sm:$0xff]
      %v3315 = vld [vmem:[%s2468 + $0x49] sm:$0xff]
      %v3316 = vld [vmem:[%s2468 + $0x51] sm:$0xff]
      %v3317 = vld [vmem:[%s2468 + $0x61] sm:$0xff]
      %v3318 = vld [vmem:[%s2468 + $0x69] sm:$0xff]
      %v3319 = vld [vmem:[%s2468 + $0x79] sm:$0xff]
      %v3320 = vld [vmem:[%s2468 + $0x81] sm:$0xff]
      %v3321 = vld [vmem:[%s2468 + $0x91] sm:$0xff]
      %v3322 = vld [vmem:[%s2468 + $0x99] sm:$0xff]
      %v3323 = vld [vmem:[%s2468 + $0xa9] sm:$0xff]
      %v3324 = vld [vmem:[%s2468 + $0xb1] sm:$0xff]
      %v3325 = vld [vmem:[%s2468 + $0xc1] sm:$0xff]
      %v3326 = vld [vmem:[%s2468 + $0xc9] sm:$0xff]
      %v3327 = vld [vmem:[%s2468 + $0xd9] sm:$0xff]
      %v3328 = vld [vmem:[%s2468 + $0xe1] sm:$0xff]
      %v3329 = vld [vmem:[%s2468 + $0xf1] sm:$0xff]
      %v3330 = vld [vmem:[%s2468 + $0xf9] sm:$0xff]
      %v3331 = vld [vmem:[%s2468 + $0x109] sm:$0xff]
      %v3332 = vld [vmem:[%s2468 + $0x111] sm:$0xff]
      %v3333 = vld [vmem:[%s2468 + $0x121] sm:$0xff]
      %v3334 = vld [vmem:[%s2468 + $0x129] sm:$0xff]
      %v3335 = vld [vmem:[%s2468 + $0x139] sm:$0xff]
      %v3336 = vld [vmem:[%s2468 + $0x141] sm:$0xff]
      %v3337 = vld [vmem:[%s2468 + $0x151] sm:$0xff]
      %v3338 = vld [vmem:[%s2468 + $0x159] sm:$0xff]
      %v3339 = vld [vmem:[%s2468 + $0x169] sm:$0xff]
      %v3340 = vld [vmem:[%s2468 + $0x171] sm:$0xff]
      %s3341 = scalar_lea.vmem %s1, 112
      %v3342 = vld [vmem:[%s3341] sm:$0xff]
      %v3344 = vsel %vm442, %v3342, 0
      %v3347 = vsel %vm442, %v3309, 0
      %v3350 = vsel %vm442, %v3310, 0
      %v3353 = vsel %vm442, %v3311, 0
      %v3356 = vsel %vm442, %v3312, 0
      %v3359 = vsel %vm442, %v3313, 0
      %v3362 = vsel %vm442, %v3314, 0
      %v3365 = vsel %vm442, %v3315, 0
      %v3368 = vsel %vm442, %v3316, 0
      %v3371 = vsel %vm442, %v3317, 0
      %v3374 = vsel %vm442, %v3318, 0
      %v3377 = vsel %vm442, %v3319, 0
      %v3380 = vsel %vm442, %v3320, 0
      %v3383 = vsel %vm442, %v3321, 0
      %v3386 = vsel %vm442, %v3322, 0
      %v3389 = vsel %vm442, %v3323, 0
      %v3392 = vsel %vm442, %v3324, 0
      %v3395 = vsel %vm442, %v3325, 0
      %v3398 = vsel %vm442, %v3326, 0
      %v3401 = vsel %vm442, %v3327, 0
      %v3404 = vsel %vm442, %v3328, 0
      %v3407 = vsel %vm442, %v3329, 0
      %v3410 = vsel %vm442, %v3330, 0
      %v3413 = vsel %vm442, %v3331, 0
      %v3416 = vsel %vm442, %v3332, 0
      %v3419 = vsel %vm442, %v3333, 0
      %v3422 = vsel %vm442, %v3334, 0
      %v3425 = vsel %vm442, %v3335, 0
      %v3428 = vsel %vm442, %v3336, 0
      %v3431 = vsel %vm442, %v3337, 0
      %v3434 = vsel %vm442, %v3338, 0
      %v3437 = vsel %vm442, %v3339, 0
      %v3440 = vsel %vm442, %v3340, 0
      %3442 = vmatprep.subr.mxu0 0.0
      %3443 = vmatpush1.xpose.msra.mxu0 %v3347
      %3444 = vmatprep.subr.mxu0 0.0
      %3445 = vmatpush1.xpose.msra.mxu0 %v3350
      %3446 = vmatprep.subr.mxu0 0.0
      %3447 = vmatpush1.xpose.msra.mxu0 %v3353
      %3448 = vmatprep.subr.mxu0 0.0
      %3449 = vmatpush1.xpose.msra.mxu0 %v3356
      %3450 = vmatprep.subr.mxu0 0.0
      %3451 = vmatpush1.xpose.msra.mxu0 %v3359
      %3452 = vmatprep.subr.mxu0 0.0
      %3453 = vmatpush1.xpose.msra.mxu0 %v3362
      %3454 = vmatprep.subr.mxu0 0.0
      %3455 = vmatpush1.xpose.msra.mxu0 %v3365
      %3456 = vmatprep.subr.mxu0 0.0
      %3457 = vmatpush1.xpose.msra.mxu0 %v3368
      %3458 = vmatprep.subr.mxu0 0.0
      %3459 = vmatpush1.xpose.msra.mxu0 %v3371
      %3460 = vmatprep.subr.mxu0 0.0
      %3461 = vmatpush1.xpose.msra.mxu0 %v3374
      %3462 = vmatprep.subr.mxu0 0.0
      %3463 = vmatpush1.xpose.msra.mxu0 %v3377
      %3464 = vmatprep.subr.mxu0 0.0
      %3465 = vmatpush1.xpose.msra.mxu0 %v3380
      %3466 = vmatprep.subr.mxu0 0.0
      %3467 = vmatpush1.xpose.msra.mxu0 %v3383
      %3468 = vmatprep.subr.mxu0 0.0
      %3469 = vmatpush1.xpose.msra.mxu0 %v3386
      %3470 = vmatprep.subr.mxu0 0.0
      %3471 = vmatpush1.xpose.msra.mxu0 %v3389
      %3472 = vmatprep.subr.mxu0 0.0
      %3473 = vmatpush1.xpose.msra.mxu0 %v3392
      %3474 = vmatprep.subr.mxu0 0.0
      %3475 = vmatpush1.xpose.msra.mxu0 %v3395
      %3476 = vmatprep.subr.mxu0 0.0
      %3477 = vmatpush1.xpose.msra.mxu0 %v3398
      %3478 = vmatprep.subr.mxu0 0.0
      %3479 = vmatpush1.xpose.msra.mxu0 %v3401
      %3480 = vmatprep.subr.mxu0 0.0
      %3481 = vmatpush1.xpose.msra.mxu0 %v3404
      %3482 = vmatprep.subr.mxu0 0.0
      %3483 = vmatpush1.xpose.msra.mxu0 %v3407
      %3484 = vmatprep.subr.mxu0 0.0
      %3485 = vmatpush1.xpose.msra.mxu0 %v3410
      %3486 = vmatprep.subr.mxu0 0.0
      %3487 = vmatpush1.xpose.msra.mxu0 %v3413
      %3488 = vmatprep.subr.mxu0 0.0
      %3489 = vmatpush1.xpose.msra.mxu0 %v3416
      %3490 = vmatprep.subr.mxu0 0.0
      %3491 = vmatpush1.xpose.msra.mxu0 %v3419
      %3492 = vmatprep.subr.mxu0 0.0
      %3493 = vmatpush1.xpose.msra.mxu0 %v3422
      %3494 = vmatprep.subr.mxu0 0.0
      %3495 = vmatpush1.xpose.msra.mxu0 %v3425
      %3496 = vmatprep.subr.mxu0 0.0
      %3497 = vmatpush1.xpose.msra.mxu0 %v3428
      %3498 = vmatprep.subr.mxu0 0.0
      %3499 = vmatpush1.xpose.msra.mxu0 %v3431
      %3500 = vmatprep.subr.mxu0 0.0
      %3501 = vmatpush1.xpose.msra.mxu0 %v3434
      %3502 = vmatprep.subr.mxu0 0.0
      %3503 = vmatpush1.xpose.msra.mxu0 %v3437
      %3504 = vmatprep.subr.mxu0 0.0
      %3505 = vmatpush1.xpose.msra.mxu0 %v3440
      %3506 = vmatprep.mubr.f32.mxu0 0.0
      %3507 = vmatmul.mubr.f32.gmra.mrb[0].mxu0 %v3344
      %v3508 = vpop.f32.mrb[0].mxu0
      %v3509 = vadd.f32 0.0, %v3508
      %v3510 = vpop.f32.mrb[0].mxu0
      %v3511 = vadd.f32 0.0, %v3510
      %3512 = vdwg.mxu0
      %v3513 = vadd.f32 %v3305, %v3509
      %v3514 = vadd.f32 %v3307, %v3511
      %v3515 = vld [vmem:[%s2468 + $0x2] sm:$0xff]
      %v3516 = vld [vmem:[%s2468 + $0xa] sm:$0xff]
      %v3517 = vld [vmem:[%s2468 + $0x1a] sm:$0xff]
      %v3518 = vld [vmem:[%s2468 + $0x22] sm:$0xff]
      %v3519 = vld [vmem:[%s2468 + $0x32] sm:$0xff]
      %v3520 = vld [vmem:[%s2468 + $0x3a] sm:$0xff]
      %v3521 = vld [vmem:[%s2468 + $0x4a] sm:$0xff]
      %v3522 = vld [vmem:[%s2468 + $0x52] sm:$0xff]
      %v3523 = vld [vmem:[%s2468 + $0x62] sm:$0xff]
      %v3524 = vld [vmem:[%s2468 + $0x6a] sm:$0xff]
      %v3525 = vld [vmem:[%s2468 + $0x7a] sm:$0xff]
      %v3526 = vld [vmem:[%s2468 + $0x82] sm:$0xff]
      %v3527 = vld [vmem:[%s2468 + $0x92] sm:$0xff]
      %v3528 = vld [vmem:[%s2468 + $0x9a] sm:$0xff]
      %v3529 = vld [vmem:[%s2468 + $0xaa] sm:$0xff]
      %v3530 = vld [vmem:[%s2468 + $0xb2] sm:$0xff]
      %v3531 = vld [vmem:[%s2468 + $0xc2] sm:$0xff]
      %v3532 = vld [vmem:[%s2468 + $0xca] sm:$0xff]
      %v3533 = vld [vmem:[%s2468 + $0xda] sm:$0xff]
      %v3534 = vld [vmem:[%s2468 + $0xe2] sm:$0xff]
      %v3535 = vld [vmem:[%s2468 + $0xf2] sm:$0xff]
      %v3536 = vld [vmem:[%s2468 + $0xfa] sm:$0xff]
      %v3537 = vld [vmem:[%s2468 + $0x10a] sm:$0xff]
      %v3538 = vld [vmem:[%s2468 + $0x112] sm:$0xff]
      %v3539 = vld [vmem:[%s2468 + $0x122] sm:$0xff]
      %v3540 = vld [vmem:[%s2468 + $0x12a] sm:$0xff]
      %v3541 = vld [vmem:[%s2468 + $0x13a] sm:$0xff]
      %v3542 = vld [vmem:[%s2468 + $0x142] sm:$0xff]
      %v3543 = vld [vmem:[%s2468 + $0x152] sm:$0xff]
      %v3544 = vld [vmem:[%s2468 + $0x15a] sm:$0xff]
      %v3545 = vld [vmem:[%s2468 + $0x16a] sm:$0xff]
      %v3546 = vld [vmem:[%s2468 + $0x172] sm:$0xff]
      %s3547 = scalar_lea.vmem %s1, 120
      %v3548 = vld [vmem:[%s3547] sm:$0xff]
      %v3550 = vsel %vm442, %v3548, 0
      %v3553 = vsel %vm442, %v3515, 0
      %v3556 = vsel %vm442, %v3516, 0
      %v3559 = vsel %vm442, %v3517, 0
      %v3562 = vsel %vm442, %v3518, 0
      %v3565 = vsel %vm442, %v3519, 0
      %v3568 = vsel %vm442, %v3520, 0
      %v3571 = vsel %vm442, %v3521, 0
      %v3574 = vsel %vm442, %v3522, 0
      %v3577 = vsel %vm442, %v3523, 0
      %v3580 = vsel %vm442, %v3524, 0
      %v3583 = vsel %vm442, %v3525, 0
      %v3586 = vsel %vm442, %v3526, 0
      %v3589 = vsel %vm442, %v3527, 0
      %v3592 = vsel %vm442, %v3528, 0
      %v3595 = vsel %vm442, %v3529, 0
      %v3598 = vsel %vm442, %v3530, 0
      %v3601 = vsel %vm442, %v3531, 0
      %v3604 = vsel %vm442, %v3532, 0
      %v3607 = vsel %vm442, %v3533, 0
      %v3610 = vsel %vm442, %v3534, 0
      %v3613 = vsel %vm442, %v3535, 0
      %v3616 = vsel %vm442, %v3536, 0
      %v3619 = vsel %vm442, %v3537, 0
      %v3622 = vsel %vm442, %v3538, 0
      %v3625 = vsel %vm442, %v3539, 0
      %v3628 = vsel %vm442, %v3540, 0
      %v3631 = vsel %vm442, %v3541, 0
      %v3634 = vsel %vm442, %v3542, 0
      %v3637 = vsel %vm442, %v3543, 0
      %v3640 = vsel %vm442, %v3544, 0
      %v3643 = vsel %vm442, %v3545, 0
      %v3646 = vsel %vm442, %v3546, 0
      %3648 = vmatprep.subr.mxu0 0.0
      %3649 = vmatpush1.xpose.msra.mxu0 %v3553
      %3650 = vmatprep.subr.mxu0 0.0
      %3651 = vmatpush1.xpose.msra.mxu0 %v3556
      %3652 = vmatprep.subr.mxu0 0.0
      %3653 = vmatpush1.xpose.msra.mxu0 %v3559
      %3654 = vmatprep.subr.mxu0 0.0
      %3655 = vmatpush1.xpose.msra.mxu0 %v3562
      %3656 = vmatprep.subr.mxu0 0.0
      %3657 = vmatpush1.xpose.msra.mxu0 %v3565
      %3658 = vmatprep.subr.mxu0 0.0
      %3659 = vmatpush1.xpose.msra.mxu0 %v3568
      %3660 = vmatprep.subr.mxu0 0.0
      %3661 = vmatpush1.xpose.msra.mxu0 %v3571
      %3662 = vmatprep.subr.mxu0 0.0
      %3663 = vmatpush1.xpose.msra.mxu0 %v3574
      %3664 = vmatprep.subr.mxu0 0.0
      %3665 = vmatpush1.xpose.msra.mxu0 %v3577
      %3666 = vmatprep.subr.mxu0 0.0
      %3667 = vmatpush1.xpose.msra.mxu0 %v3580
      %3668 = vmatprep.subr.mxu0 0.0
      %3669 = vmatpush1.xpose.msra.mxu0 %v3583
      %3670 = vmatprep.subr.mxu0 0.0
      %3671 = vmatpush1.xpose.msra.mxu0 %v3586
      %3672 = vmatprep.subr.mxu0 0.0
      %3673 = vmatpush1.xpose.msra.mxu0 %v3589
      %3674 = vmatprep.subr.mxu0 0.0
      %3675 = vmatpush1.xpose.msra.mxu0 %v3592
      %3676 = vmatprep.subr.mxu0 0.0
      %3677 = vmatpush1.xpose.msra.mxu0 %v3595
      %3678 = vmatprep.subr.mxu0 0.0
      %3679 = vmatpush1.xpose.msra.mxu0 %v3598
      %3680 = vmatprep.subr.mxu0 0.0
      %3681 = vmatpush1.xpose.msra.mxu0 %v3601
      %3682 = vmatprep.subr.mxu0 0.0
      %3683 = vmatpush1.xpose.msra.mxu0 %v3604
      %3684 = vmatprep.subr.mxu0 0.0
      %3685 = vmatpush1.xpose.msra.mxu0 %v3607
      %3686 = vmatprep.subr.mxu0 0.0
      %3687 = vmatpush1.xpose.msra.mxu0 %v3610
      %3688 = vmatprep.subr.mxu0 0.0
      %3689 = vmatpush1.xpose.msra.mxu0 %v3613
      %3690 = vmatprep.subr.mxu0 0.0
      %3691 = vmatpush1.xpose.msra.mxu0 %v3616
      %3692 = vmatprep.subr.mxu0 0.0
      %3693 = vmatpush1.xpose.msra.mxu0 %v3619
      %3694 = vmatprep.subr.mxu0 0.0
      %3695 = vmatpush1.xpose.msra.mxu0 %v3622
      %3696 = vmatprep.subr.mxu0 0.0
      %3697 = vmatpush1.xpose.msra.mxu0 %v3625
      %3698 = vmatprep.subr.mxu0 0.0
      %3699 = vmatpush1.xpose.msra.mxu0 %v3628
      %3700 = vmatprep.subr.mxu0 0.0
      %3701 = vmatpush1.xpose.msra.mxu0 %v3631
      %3702 = vmatprep.subr.mxu0 0.0
      %3703 = vmatpush1.xpose.msra.mxu0 %v3634
      %3704 = vmatprep.subr.mxu0 0.0
      %3705 = vmatpush1.xpose.msra.mxu0 %v3637
      %3706 = vmatprep.subr.mxu0 0.0
      %3707 = vmatpush1.xpose.msra.mxu0 %v3640
      %3708 = vmatprep.subr.mxu0 0.0
      %3709 = vmatpush1.xpose.msra.mxu0 %v3643
      %3710 = vmatprep.subr.mxu0 0.0
      %3711 = vmatpush1.xpose.msra.mxu0 %v3646
      %3712 = vmatprep.mubr.f32.mxu0 0.0
      %3713 = vmatmul.mubr.f32.gmra.mrb[0].mxu0 %v3550
      %v3714 = vpop.f32.mrb[0].mxu0
      %v3715 = vadd.f32 0.0, %v3714
      %v3716 = vpop.f32.mrb[0].mxu0
      %v3717 = vadd.f32 0.0, %v3716
      %3718 = vdwg.mxu0
      %v3719 = vadd.f32 %v3513, %v3715
      %v3720 = vadd.f32 %v3514, %v3717
      %v3721 = vld [vmem:[%s2] sm:$0xff]
      %3723 = vset.pattern.permute.xlu0 0
      %3724 = vperm.xlu0 %3723, %v3721
      %v3725 = vpop.permute.xlu0 %3724
      %v3727 = vmul.f32 %v3719, %v3725
      %v3728 = vmul.f32 %v3720, %v3725
      %v3729 = vld [vmem:[%s3] sm:$0xff]
      %3731 = vset.pattern.permute.xlu0 0
      %3732 = vperm.xlu0 %3731, %v3729
      %v3733 = vpop.permute.xlu0 %3732
      %v3735 = vadd.f32 %v3727, %v3733
      %v3736 = vadd.f32 %v3728, %v3733
      %v3737 = vmax.f32 %v3735, 0.0
      %v3738 = vmax.f32 %v3736, 0.0
      %3739 = vst [vmem:[%s370] sm:$0xff] %v3737
      %3740 = vst [vmem:[%s370 + $0x8] sm:$0xff] %v3738
      %s3741 = smul.u32 2, %s24
      %p3742 = scmp.lt.s32.totalorder %s23, 1
      %s3743 = scalar_select %p3742, %s23, 1
      %p3744 = scmp.lt.s32.totalorder %s3741, 1
      %s3745 = scalar_select %p3744, %s3741, 1
      %s3746 = smul.addr %s3743, 2
      %s3747 = sadd.s32 %s3745, %s3746
      %s3748 = smul.addr %s3747, 8
      %s3749 = scalar_lea.vmem %s4, %s3748
      %s3750 = smul.u32 2, %s24
      %p3751 = scmp.lt.s32.totalorder %s23, 1
      %s3752 = scalar_select %p3751, %s23, 1
      %p3753 = scmp.lt.s32.totalorder %s3750, 1
      %s3754 = scalar_select %p3753, %s3750, 1
      %s3755 = smul.addr %s3752, 2
      %s3756 = sadd.s32 %s3754, %s3755
      %s3757 = smul.addr %s3756, 8
      %s3758 = scalar_lea.vmem %s5, %s3757
      %s3759 = smul.u32 2, %s24
      %p3760 = scmp.lt.s32.totalorder %s23, 1
      %s3761 = scalar_select %p3760, %s23, 1
      %p3762 = scmp.lt.s32.totalorder %s3759, 1
      %s3763 = scalar_select %p3762, %s3759, 1
      %s3764 = smul.addr %s3761, 2
      %s3765 = sadd.s32 %s3763, %s3764
      %s3766 = smul.addr %s3765, 8
      %s3767 = scalar_lea.vmem %s6, %s3766
      %s3768 = smul.u32 2, %s24
      %p3769 = scmp.lt.s32.totalorder %s23, 1
      %s3770 = scalar_select %p3769, %s23, 1
      %p3771 = scmp.lt.s32.totalorder %s3768, 1
      %s3772 = scalar_select %p3771, %s3768, 1
      %s3773 = smul.addr %s3770, 2
      %s3774 = sadd.s32 %s3772, %s3773
      %s3775 = smul.addr %s3774, 8
      %s3776 = scalar_lea.vmem %s7, %s3775
      // Predicated region
      $region37: #{up_conv_forward.3} parent=35 // pred_check
        %p3777 = pneg %p140
      $region38: #{up_conv_forward.3} parent=35 // pred_check_branch
        %3779 = sbr.rel (%p3777) target = $region40
      $region39: #{up_conv_forward.3} parent=35 // pred_region
        %s3780 = smul.u32 2, %s24
      $region40: #{up_conv_forward.3} parent=35 // pred_fallthru
        _
      // Predicated region
      $region41: #{up_conv_forward.3} parent=35 // pred_check
        %p3781 = pneg %p168
      $region42: #{up_conv_forward.3} parent=35 // pred_check_branch
        %3783 = sbr.rel (%p3781) target = $region44
      $region43: #{up_conv_forward.3} parent=35 // pred_region
        %s3784 = smul.u32 2, %s24
      $region44: #{up_conv_forward.3} parent=35 // pred_fallthru
        _
      // Predicated region
      $region45: #{up_conv_forward.3} parent=35 // pred_check
        %p3785 = pneg %p196
      $region46: #{up_conv_forward.3} parent=35 // pred_check_branch
        %3787 = sbr.rel (%p3785) target = $region48
      $region47: #{up_conv_forward.3} parent=35 // pred_region
        %s3788 = smul.u32 2, %s24
      $region48: #{up_conv_forward.3} parent=35 // pred_fallthru
        _
      // Predicated region
      $region49: #{up_conv_forward.3} parent=35 // pred_check
        %p3789 = pneg %p224
      $region50: #{up_conv_forward.3} parent=35 // pred_check_branch
        %3791 = sbr.rel (%p3789) target = $region52
      $region51: #{up_conv_forward.3} parent=35 // pred_region
        %s3792 = smul.u32 2, %s24
      $region52: #{up_conv_forward.3} parent=35 // pred_fallthru
        _
    $region36: #{up_conv_forward.3} parent=5 // pred_fallthru
      _
    %p3793 = scmp.le.s32.totalorder 2, %s14
    // Predicated region
    $region53: #{up_conv_forward.3} parent=5 // pred_check
      %p3794 = pneg %p3793
    $region54: #{up_conv_forward.3} parent=5 // pred_check_branch
      %3796 = sbr.rel (%p3794) target = $region56
    $region55: #{up_conv_forward.3} parent=5 // pred_region
      %s3797 = ssub.s32 %s14, 2
      // Predicated region
      $region57: #{up_conv_forward.3} parent=55 // pred_check
        %p3798 = pneg %p146
      $region58: #{up_conv_forward.3} parent=55 // pred_check_branch
        %3800 = sbr.rel (%p3798) target = $region60
      $region59: #{up_conv_forward.3} parent=55 // pred_region
        %s3801 = smul.u32 2, %s26
        %p3802 = scmp.lt.s32.totalorder %s25, 1
        %s3803 = scalar_select %p3802, %s25, 1
        %p3804 = scmp.lt.s32.totalorder %s3801, 1
        %s3805 = scalar_select %p3804, %s3801, 1
        %s3806 = smul.addr %s3803, 2
        %s3807 = sadd.s32 %s3805, %s3806
        %s3808 = smul.addr %s3807, 8
        %s3809 = scalar_lea.vmem %s4, %s3808
      $region60: #{up_conv_forward.3} parent=55 // pred_fallthru
        _
      // Predicated region
      $region61: #{up_conv_forward.3} parent=55 // pred_check
        %p3810 = pneg %p174
      $region62: #{up_conv_forward.3} parent=55 // pred_check_branch
        %3812 = sbr.rel (%p3810) target = $region64
      $region63: #{up_conv_forward.3} parent=55 // pred_region
        %s3813 = smul.u32 2, %s26
        %p3814 = scmp.lt.s32.totalorder %s25, 1
        %s3815 = scalar_select %p3814, %s25, 1
        %p3816 = scmp.lt.s32.totalorder %s3813, 1
        %s3817 = scalar_select %p3816, %s3813, 1
        %s3818 = smul.addr %s3815, 2
        %s3819 = sadd.s32 %s3817, %s3818
        %s3820 = smul.addr %s3819, 8
        %s3821 = scalar_lea.vmem %s5, %s3820
      $region64: #{up_conv_forward.3} parent=55 // pred_fallthru
        _
      // Predicated region
      $region65: #{up_conv_forward.3} parent=55 // pred_check
        %p3822 = pneg %p202
      $region66: #{up_conv_forward.3} parent=55 // pred_check_branch
        %3824 = sbr.rel (%p3822) target = $region68
      $region67: #{up_conv_forward.3} parent=55 // pred_region
        %s3825 = smul.u32 2, %s26
        %p3826 = scmp.lt.s32.totalorder %s25, 1
        %s3827 = scalar_select %p3826, %s25, 1
        %p3828 = scmp.lt.s32.totalorder %s3825, 1
        %s3829 = scalar_select %p3828, %s3825, 1
        %s3830 = smul.addr %s3827, 2
        %s3831 = sadd.s32 %s3829, %s3830
        %s3832 = smul.addr %s3831, 8
        %s3833 = scalar_lea.vmem %s6, %s3832
      $region68: #{up_conv_forward.3} parent=55 // pred_fallthru
        _
      // Predicated region
      $region69: #{up_conv_forward.3} parent=55 // pred_check
        %p3834 = pneg %p230
      $region70: #{up_conv_forward.3} parent=55 // pred_check_branch
        %3836 = sbr.rel (%p3834) target = $region72
      $region71: #{up_conv_forward.3} parent=55 // pred_region
        %s3837 = smul.u32 2, %s26
        %p3838 = scmp.lt.s32.totalorder %s25, 1
        %s3839 = scalar_select %p3838, %s25, 1
        %p3840 = scmp.lt.s32.totalorder %s3837, 1
        %s3841 = scalar_select %p3840, %s3837, 1
        %s3842 = smul.addr %s3839, 2
        %s3843 = sadd.s32 %s3841, %s3842
        %s3844 = smul.addr %s3843, 8
        %s3845 = scalar_lea.vmem %s7, %s3844
      $region72: #{up_conv_forward.3} parent=55 // pred_fallthru
        _
    $region56: #{up_conv_forward.3} parent=5 // pred_fallthru
      _
  $region6: #{up_conv_forward.3} parent=0 // loop_footer
    %s18 = sadd.s32 1, %s14
  $region7: #{up_conv_forward.3} parent=0 // loop_footer_branch
    %13 = sbr.rel target = $region3
  $region8: #{up_conv_forward.3} parent=0 // loop_exit
    _

</llo_original>
